<compile_context>
chip_gen: v6e
topology: v6e:2x2x1
jax: 0.10.0
libtpu: 0.0.40
codegen_flags: <defaults>
</compile_context>

<pallas_src>
import math

import jax
import jax.numpy as jnp
from jax.experimental import pallas as pl
from jax.experimental.pallas import tpu as pltpu


# ----------------------------------------------------------------------------
# Single fused kernel: all GRU layers (both directions) + MLP head.
#
# Sequence layout: time-major 2-D rows, padded to Bp rows per timestep, i.e.
# seq[t*Bp:(t+1)*Bp, :] is the (Bp, F) feature block of timestep t; rows
# [0, B) are stream x1, rows [B, 2B) are stream x2, the rest are zero padding.
# ----------------------------------------------------------------------------
def _make_rnn_sim_kernel(*, T, Bp, H, ndirs, num_layers, B):
    G3 = 3 * H  # fused gate width per direction (r, z, n)

    def _sigmoid(x):
        # exp on the EUP slot + approx reciprocal (also EUP) -> short VALU chain.
        return pl.reciprocal(1.0 + jnp.exp(-x), approx=True)

    def kernel(*refs):
        seq_ref = refs[0]
        layer_refs = [refs[1 + 4 * l: 1 + 4 * (l + 1)] for l in range(num_layers)]
        head_off = 1 + 4 * num_layers
        (w1a_ref, w1b_ref, b1_ref, w2_ref, b2_ref,
         w3_ref, b3_ref) = refs[head_off:head_off + 7]
        pred_ref = refs[head_off + 7]

        seq = seq_ref[...]                        # (T*Bp, D) layer-0 input
        h_sum = jnp.zeros((Bp, H), jnp.float32)   # h_n.view(-1, B, H).sum(dim=0)

        for l in range(num_layers):
            w_ih_ref, b_gi_ref, w_hh_ref, b_hn_ref = layer_refs[l]

            # Hoisted input projection: one lane-dense MXU call covers all T
            # timesteps, both directions and all three gates.  r/z gates carry
            # b_ih + b_hh folded in; n gate carries b_ih only.
            gi = (jnp.dot(seq, w_ih_ref[...], preferred_element_type=jnp.float32)
                  + b_gi_ref[...])                # (T*Bp, ndirs*3H)

            w_hh = w_hh_ref[...]                  # (ndirs*H, ndirs*3H) block-diag
            b_hn = b_hn_ref[...]                  # (1, ndirs*3H); b_hh_n on n cols

            # Serial recurrence, fully unrolled (T is small & static).  Exactly
            # one MXU matmul per step (both directions, all gates fused).
            h = jnp.zeros((Bp, ndirs * H), jnp.float32)
            outs = [[None] * T for _ in range(ndirs)]
            for t in range(T):
                gh = jnp.dot(h, w_hh, preferred_element_type=jnp.float32) + b_hn
                h_parts = []
                for d in range(ndirs):
                    tt = t if d == 0 else (T - 1 - t)   # direction 1 runs reversed
                    row = tt * Bp                       # sublane-aligned (Bp = 8)
                    g0 = d * G3
                    gi_t = gi[row:row + Bp, g0:g0 + G3]
                    gh_d = gh[:, g0:g0 + G3]
                    r = _sigmoid(gi_t[:, 0:H] + gh_d[:, 0:H])
                    z = _sigmoid(gi_t[:, H:2 * H] + gh_d[:, H:2 * H])
                    n = jnp.tanh(gi_t[:, 2 * H:G3] + r * gh_d[:, 2 * H:G3])
                    hd = h[:, d * H:(d + 1) * H]
                    h_new = (1.0 - z) * n + z * hd
                    outs[d][tt] = h_new
                    h_parts.append(h_new)
                h = h_parts[0] if ndirs == 1 else jnp.concatenate(h_parts, axis=1)

            # Accumulate this layer's final hiddens (both directions).
            for d in range(ndirs):
                h_sum = h_sum + h[:, d * H:(d + 1) * H]

            if l + 1 < num_layers:
                # Next layer's input sequence, assembled once AFTER the serial
                # loop (no per-step masked stores on the critical path).
                seq = jnp.concatenate(
                    [outs[0][t] if ndirs == 1
                     else jnp.concatenate([outs[d][t] for d in range(ndirs)], axis=1)
                     for t in range(T)], axis=0)        # (T*Bp, ndirs*H)

        # Fused head: lin1(concat([h1, h2], 1)) -> tanh(lin2) -> sigmoid(out).
        h1 = h_sum[:B, :]        # stream x1
        h2 = h_sum[B:2 * B, :]   # stream x2
        l1 = (jnp.dot(h1, w1a_ref[...], preferred_element_type=jnp.float32)
              + jnp.dot(h2, w1b_ref[...], preferred_element_type=jnp.float32)
              + b1_ref[...])
        l2 = jnp.tanh(jnp.dot(l1, w2_ref[...], preferred_element_type=jnp.float32)
                      + b2_ref[...])
        l3 = (jnp.dot(l2, w3_ref[...], preferred_element_type=jnp.float32)
              + b3_ref[...])
        pred_ref[...] = _sigmoid(l3).astype(pred_ref.dtype)

    return kernel


# ----------------------------------------------------------------------------
# Full RNN_SIM forward (one pallas_call)
# ----------------------------------------------------------------------------
def rnn_sim_forward(x_input, gru_layers, head_params, *, rnn_units, ndirs):
    x1, x2 = x_input
    B, T, D = x1.shape
    H = rnn_units
    B2 = 2 * B
    Bp = max(8, ((B2 + 7) // 8) * 8)      # rows per timestep, sublane-aligned

    # Batch the two independent streams through the shared GRU in one pass,
    # time-major, with the per-timestep row block zero-padded to Bp rows.
    x_all = jnp.concatenate([x1, x2], axis=0)               # (2B, T, D)
    x_tm = jnp.transpose(x_all, (1, 0, 2))                  # (T, 2B, D)
    x_tm = jnp.pad(x_tm, ((0, 0), (0, Bp - B2), (0, 0)))    # (T, Bp, D)
    seq0 = x_tm.reshape(T * Bp, D).astype(jnp.float32)

    kernel = _make_rnn_sim_kernel(T=T, Bp=Bp, H=H, ndirs=ndirs,
                                  num_layers=len(gru_layers), B=B)

    vmem = pl.BlockSpec(memory_space=pltpu.MemorySpace.VMEM)
    inputs = [seq0]
    for lp in gru_layers:
        inputs += [lp["w_ih"], lp["b_gi"], lp["w_hh"], lp["b_hn"]]
    inputs += list(head_params)

    return pl.pallas_call(
        kernel,
        out_shape=jax.ShapeDtypeStruct((B, 1), jnp.float32),
        in_specs=[vmem] * len(inputs),
        out_specs=vmem,
    )(*inputs)


# ----------------------------------------------------------------------------
# Deterministic parameter construction (PyTorch-style U(-1/sqrt(H), 1/sqrt(H))),
# pre-fused into the layouts the kernel consumes.
# ----------------------------------------------------------------------------
def _uniform(key, shape, bound):
    return jax.random.uniform(key, shape, jnp.float32, -bound, bound)


def make_gru_params(key, embedding_dim, rnn_units, num_layers, bidirectional):
    ndirs = 2 if bidirectional else 1
    H = rnn_units
    bound = 1.0 / math.sqrt(H)
    layers = []
    for layer in range(num_layers):
        d_in = embedding_dim if layer == 0 else H * ndirs
        key, k1, k2, k3, k4 = jax.random.split(key, 5)
        # Per-direction, per-gate weights (gate order r, z, n), stored already
        # transposed for right-multiplication (x @ W).
        w_ih = _uniform(k1, (ndirs, 3, d_in, H), bound)
        w_hh = _uniform(k2, (ndirs, 3, H, H), bound)
        b_ih = _uniform(k3, (ndirs, 3, H), bound)
        b_hh = _uniform(k4, (ndirs, 3, H), bound)

        # Fused input-projection weight: (d_in, ndirs*3H), columns ordered
        # [dir0: r z n | dir1: r z n].
        w_ih_fused = jnp.concatenate(
            [jnp.concatenate([w_ih[d, g] for g in range(3)], axis=1)
             for d in range(ndirs)], axis=1)

        # Fused input bias: b_ih everywhere, + b_hh folded in for r/z only
        # (b_hh_n must stay inside the r * (.) term).
        b_gi = jnp.concatenate(
            [jnp.concatenate([b_ih[d, 0] + b_hh[d, 0],
                              b_ih[d, 1] + b_hh[d, 1],
                              b_ih[d, 2]], axis=0)
             for d in range(ndirs)], axis=0).reshape(1, ndirs * 3 * H)

        # Block-diagonal recurrent weight: rows [h_dir0 | h_dir1], columns
        # [dir0 gates | dir1 gates] -> one matmul per step covers everything.
        w_hh_blk = jnp.zeros((ndirs * H, ndirs * 3 * H), jnp.float32)
        for d in range(ndirs):
            blk = jnp.concatenate([w_hh[d, g] for g in range(3)], axis=1)  # (H,3H)
            w_hh_blk = w_hh_blk.at[d * H:(d + 1) * H,
                                   d * 3 * H:(d + 1) * 3 * H].set(blk)

        # Recurrent bias applied to the fused gh: zeros on r/z columns, b_hh_n
        # on the n columns.
        zeros_h = jnp.zeros((H,), jnp.float32)
        b_hn = jnp.concatenate(
            [jnp.concatenate([zeros_h, zeros_h, b_hh[d, 2]], axis=0)
             for d in range(ndirs)], axis=0).reshape(1, ndirs * 3 * H)

        layers.append({"w_ih": w_ih_fused, "b_gi": b_gi,
                       "w_hh": w_hh_blk, "b_hn": b_hn})
    return layers


def make_head_params(key, rnn_units):
    in1 = rnn_units * 2
    k = jax.random.split(key, 6)
    b1 = 1.0 / math.sqrt(in1)
    b2 = 1.0 / math.sqrt(96)
    b3 = 1.0 / math.sqrt(28)
    w1 = _uniform(k[0], (in1, 96), b1)
    return (
        w1[:rnn_units], w1[rnn_units:], _uniform(k[1], (1, 96), b1),   # lin1 split
        _uniform(k[2], (96, 28), b2),  _uniform(k[3], (1, 28), b2),    # lin2
        _uniform(k[4], (28, 1), b3),   _uniform(k[5], (1, 1), b3),     # out
    )


if __name__ == "__main__":
    EMBEDDING_DIM = 16
    RNN_UNITS = 32
    BI_RNN = True
    RNN_LAYERS = 2
    B, T = 2, 8

    root = jax.random.PRNGKey(0)
    kx1, kx2, kg, kh = jax.random.split(root, 4)

    x1 = jax.random.normal(kx1, (B, T, EMBEDDING_DIM), jnp.float32)
    x2 = jax.random.normal(kx2, (B, T, EMBEDDING_DIM), jnp.float32)

    ndirs = 2 if BI_RNN else 1
    gru_layers = make_gru_params(kg, EMBEDDING_DIM, RNN_UNITS, RNN_LAYERS, BI_RNN)
    head_params = make_head_params(kh, RNN_UNITS)

    @jax.jit
    def forward(a, b):
        return rnn_sim_forward((a, b), gru_layers, head_params,
                               rnn_units=RNN_UNITS, ndirs=ndirs)

    pred = jax.block_until_ready(forward(x1, x2))
    assert pred.shape == (B, 1)
    assert bool(jnp.all(jnp.isfinite(pred)))
    print("KERNEL_OK")
</pallas_src>

<mosaic_0001>
module attributes {stable_mosaic.version = 11 : i64} {
  func.func @kernel(%arg0: memref<64x16xf32, #tpu.memory_space<vmem>>, %arg1: memref<16x192xf32, #tpu.memory_space<vmem>>, %arg2: memref<1x192xf32, #tpu.memory_space<vmem>>, %arg3: memref<64x192xf32, #tpu.memory_space<vmem>>, %arg4: memref<1x192xf32, #tpu.memory_space<vmem>>, %arg5: memref<64x192xf32, #tpu.memory_space<vmem>>, %arg6: memref<1x192xf32, #tpu.memory_space<vmem>>, %arg7: memref<64x192xf32, #tpu.memory_space<vmem>>, %arg8: memref<1x192xf32, #tpu.memory_space<vmem>>, %arg9: memref<32x96xf32, #tpu.memory_space<vmem>>, %arg10: memref<32x96xf32, #tpu.memory_space<vmem>>, %arg11: memref<1x96xf32, #tpu.memory_space<vmem>>, %arg12: memref<96x28xf32, #tpu.memory_space<vmem>>, %arg13: memref<1x28xf32, #tpu.memory_space<vmem>>, %arg14: memref<28x1xf32, #tpu.memory_space<vmem>>, %arg15: memref<1x1xf32, #tpu.memory_space<vmem>>, %arg16: memref<2x1xf32, #tpu.memory_space<vmem>>) attributes {dimension_semantics = [], scalar_prefetch = 0 : i64, scratch_operands = 0 : i64, tpu.core_type = #tpu.core_type<tc>} {
    %c0 = arith.constant 0 : index
    %c0_0 = arith.constant 0 : index
    %0 = vector.load %arg0[%c0, %c0_0] : memref<64x16xf32, #tpu.memory_space<vmem>>, vector<64x16xf32>
    %cst = arith.constant 0.000000e+00 : f32
    %1 = vector.broadcast %cst : f32 to vector<8x32xf32>
    %c0_1 = arith.constant 0 : index
    %c0_2 = arith.constant 0 : index
    %2 = vector.load %arg1[%c0_1, %c0_2] : memref<16x192xf32, #tpu.memory_space<vmem>>, vector<16x192xf32>
    %cst_3 = arith.constant dense<0.000000e+00> : vector<64x192xf32>
    %3 = tpu.matmul %0, %2, %cst_3 {dimension_numbers = #tpu.dot_dimension_numbers<[1], [0], [0], [1], [0, 0, 1, 1], [], []>} : vector<64x16xf32>, vector<16x192xf32>, vector<64x192xf32> -> vector<64x192xf32>
    %c0_4 = arith.constant 0 : index
    %c0_5 = arith.constant 0 : index
    %4 = vector.load %arg2[%c0_4, %c0_5] : memref<1x192xf32, #tpu.memory_space<vmem>>, vector<1x192xf32>
    %5 = vector.broadcast %4 : vector<1x192xf32> to vector<64x192xf32>
    %6 = arith.addf %3, %5 : vector<64x192xf32>
    %c0_6 = arith.constant 0 : index
    %c0_7 = arith.constant 0 : index
    %7 = vector.load %arg3[%c0_6, %c0_7] : memref<64x192xf32, #tpu.memory_space<vmem>>, vector<64x192xf32>
    %c0_8 = arith.constant 0 : index
    %c0_9 = arith.constant 0 : index
    %8 = vector.load %arg4[%c0_8, %c0_9] : memref<1x192xf32, #tpu.memory_space<vmem>>, vector<1x192xf32>
    %cst_10 = arith.constant 0.000000e+00 : f32
    %9 = vector.broadcast %cst_10 : f32 to vector<8x64xf32>
    %cst_11 = arith.constant dense<0.000000e+00> : vector<8x192xf32>
    %10 = tpu.matmul %9, %7, %cst_11 {dimension_numbers = #tpu.dot_dimension_numbers<[1], [0], [0], [1], [0, 0, 1, 1], [], []>} : vector<8x64xf32>, vector<64x192xf32>, vector<8x192xf32> -> vector<8x192xf32>
    %11 = vector.broadcast %8 : vector<1x192xf32> to vector<8x192xf32>
    %12 = arith.addf %10, %11 : vector<8x192xf32>
    %13 = vector.extract_strided_slice %6 {offsets = [0, 0], sizes = [8, 96], strides = [1, 1]} : vector<64x192xf32> to vector<8x96xf32>
    %14 = vector.extract_strided_slice %12 {offsets = [0, 0], sizes = [8, 96], strides = [1, 1]} : vector<8x192xf32> to vector<8x96xf32>
    %15 = vector.extract_strided_slice %13 {offsets = [0, 0], sizes = [8, 32], strides = [1, 1]} : vector<8x96xf32> to vector<8x32xf32>
    %16 = vector.extract_strided_slice %14 {offsets = [0, 0], sizes = [8, 32], strides = [1, 1]} : vector<8x96xf32> to vector<8x32xf32>
    %17 = arith.addf %15, %16 : vector<8x32xf32>
    %cst_12 = arith.constant 0.000000e+00 : f32
    %18 = vector.broadcast %cst_12 : f32 to vector<8x32xf32>
    %19 = arith.subf %18, %17 : vector<8x32xf32>
    %20 = math.exp %19 : vector<8x32xf32>
    %cst_13 = arith.constant 1.000000e+00 : f32
    %21 = vector.broadcast %cst_13 : f32 to vector<8x32xf32>
    %22 = arith.addf %21, %20 : vector<8x32xf32>
    %23 = tpu.reciprocal %22 {approx = true} : vector<8x32xf32> -> vector<8x32xf32>
    %24 = vector.extract_strided_slice %13 {offsets = [0, 32], sizes = [8, 32], strides = [1, 1]} : vector<8x96xf32> to vector<8x32xf32>
    %25 = vector.extract_strided_slice %14 {offsets = [0, 32], sizes = [8, 32], strides = [1, 1]} : vector<8x96xf32> to vector<8x32xf32>
    %26 = arith.addf %24, %25 : vector<8x32xf32>
    %cst_14 = arith.constant 0.000000e+00 : f32
    %27 = vector.broadcast %cst_14 : f32 to vector<8x32xf32>
    %28 = arith.subf %27, %26 : vector<8x32xf32>
    %29 = math.exp %28 : vector<8x32xf32>
    %cst_15 = arith.constant 1.000000e+00 : f32
    %30 = vector.broadcast %cst_15 : f32 to vector<8x32xf32>
    %31 = arith.addf %30, %29 : vector<8x32xf32>
    %32 = tpu.reciprocal %31 {approx = true} : vector<8x32xf32> -> vector<8x32xf32>
    %33 = vector.extract_strided_slice %13 {offsets = [0, 64], sizes = [8, 32], strides = [1, 1]} : vector<8x96xf32> to vector<8x32xf32>
    %34 = vector.extract_strided_slice %14 {offsets = [0, 64], sizes = [8, 32], strides = [1, 1]} : vector<8x96xf32> to vector<8x32xf32>
    %35 = arith.mulf %23, %34 : vector<8x32xf32>
    %36 = arith.addf %33, %35 : vector<8x32xf32>
    %37 = math.tanh %36 : vector<8x32xf32>
    %38 = vector.extract_strided_slice %9 {offsets = [0, 0], sizes = [8, 32], strides = [1, 1]} : vector<8x64xf32> to vector<8x32xf32>
    %cst_16 = arith.constant 1.000000e+00 : f32
    %39 = vector.broadcast %cst_16 : f32 to vector<8x32xf32>
    %40 = arith.subf %39, %32 : vector<8x32xf32>
    %41 = arith.mulf %40, %37 : vector<8x32xf32>
    %42 = arith.mulf %32, %38 : vector<8x32xf32>
    %43 = arith.addf %41, %42 : vector<8x32xf32>
    %44 = vector.extract_strided_slice %6 {offsets = [56, 96], sizes = [8, 96], strides = [1, 1]} : vector<64x192xf32> to vector<8x96xf32>
    %45 = vector.extract_strided_slice %12 {offsets = [0, 96], sizes = [8, 96], strides = [1, 1]} : vector<8x192xf32> to vector<8x96xf32>
    %46 = vector.extract_strided_slice %44 {offsets = [0, 0], sizes = [8, 32], strides = [1, 1]} : vector<8x96xf32> to vector<8x32xf32>
    %47 = vector.extract_strided_slice %45 {offsets = [0, 0], sizes = [8, 32], strides = [1, 1]} : vector<8x96xf32> to vector<8x32xf32>
    %48 = arith.addf %46, %47 : vector<8x32xf32>
    %cst_17 = arith.constant 0.000000e+00 : f32
    %49 = vector.broadcast %cst_17 : f32 to vector<8x32xf32>
    %50 = arith.subf %49, %48 : vector<8x32xf32>
    %51 = math.exp %50 : vector<8x32xf32>
    %cst_18 = arith.constant 1.000000e+00 : f32
    %52 = vector.broadcast %cst_18 : f32 to vector<8x32xf32>
    %53 = arith.addf %52, %51 : vector<8x32xf32>
    %54 = tpu.reciprocal %53 {approx = true} : vector<8x32xf32> -> vector<8x32xf32>
    %55 = vector.extract_strided_slice %44 {offsets = [0, 32], sizes = [8, 32], strides = [1, 1]} : vector<8x96xf32> to vector<8x32xf32>
    %56 = vector.extract_strided_slice %45 {offsets = [0, 32], sizes = [8, 32], strides = [1, 1]} : vector<8x96xf32> to vector<8x32xf32>
    %57 = arith.addf %55, %56 : vector<8x32xf32>
    %cst_19 = arith.constant 0.000000e+00 : f32
    %58 = vector.broadcast %cst_19 : f32 to vector<8x32xf32>
    %59 = arith.subf %58, %57 : vector<8x32xf32>
    %60 = math.exp %59 : vector<8x32xf32>
    %cst_20 = arith.constant 1.000000e+00 : f32
    %61 = vector.broadcast %cst_20 : f32 to vector<8x32xf32>
    %62 = arith.addf %61, %60 : vector<8x32xf32>
    %63 = tpu.reciprocal %62 {approx = true} : vector<8x32xf32> -> vector<8x32xf32>
    %64 = vector.extract_strided_slice %44 {offsets = [0, 64], sizes = [8, 32], strides = [1, 1]} : vector<8x96xf32> to vector<8x32xf32>
    %65 = vector.extract_strided_slice %45 {offsets = [0, 64], sizes = [8, 32], strides = [1, 1]} : vector<8x96xf32> to vector<8x32xf32>
    %66 = arith.mulf %54, %65 : vector<8x32xf32>
    %67 = arith.addf %64, %66 : vector<8x32xf32>
    %68 = math.tanh %67 : vector<8x32xf32>
    %69 = vector.extract_strided_slice %9 {offsets = [0, 32], sizes = [8, 32], strides = [1, 1]} : vector<8x64xf32> to vector<8x32xf32>
    %cst_21 = arith.constant 1.000000e+00 : f32
    %70 = vector.broadcast %cst_21 : f32 to vector<8x32xf32>
    %71 = arith.subf %70, %63 : vector<8x32xf32>
    %72 = arith.mulf %71, %68 : vector<8x32xf32>
    %73 = arith.mulf %63, %69 : vector<8x32xf32>
    %74 = arith.addf %72, %73 : vector<8x32xf32>
    %75 = tpu.concatenate %43, %74 in 1 : vector<8x32xf32>, vector<8x32xf32> -> vector<8x64xf32>
    %cst_22 = arith.constant dense<0.000000e+00> : vector<8x192xf32>
    %76 = tpu.matmul %75, %7, %cst_22 {dimension_numbers = #tpu.dot_dimension_numbers<[1], [0], [0], [1], [0, 0, 1, 1], [], []>} : vector<8x64xf32>, vector<64x192xf32>, vector<8x192xf32> -> vector<8x192xf32>
    %77 = vector.broadcast %8 : vector<1x192xf32> to vector<8x192xf32>
    %78 = arith.addf %76, %77 : vector<8x192xf32>
    %79 = vector.extract_strided_slice %6 {offsets = [8, 0], sizes = [8, 96], strides = [1, 1]} : vector<64x192xf32> to vector<8x96xf32>
    %80 = vector.extract_strided_slice %78 {offsets = [0, 0], sizes = [8, 96], strides = [1, 1]} : vector<8x192xf32> to vector<8x96xf32>
    %81 = vector.extract_strided_slice %79 {offsets = [0, 0], sizes = [8, 32], strides = [1, 1]} : vector<8x96xf32> to vector<8x32xf32>
    %82 = vector.extract_strided_slice %80 {offsets = [0, 0], sizes = [8, 32], strides = [1, 1]} : vector<8x96xf32> to vector<8x32xf32>
    %83 = arith.addf %81, %82 : vector<8x32xf32>
    %cst_23 = arith.constant 0.000000e+00 : f32
    %84 = vector.broadcast %cst_23 : f32 to vector<8x32xf32>
    %85 = arith.subf %84, %83 : vector<8x32xf32>
    %86 = math.exp %85 : vector<8x32xf32>
    %cst_24 = arith.constant 1.000000e+00 : f32
    %87 = vector.broadcast %cst_24 : f32 to vector<8x32xf32>
    %88 = arith.addf %87, %86 : vector<8x32xf32>
    %89 = tpu.reciprocal %88 {approx = true} : vector<8x32xf32> -> vector<8x32xf32>
    %90 = vector.extract_strided_slice %79 {offsets = [0, 32], sizes = [8, 32], strides = [1, 1]} : vector<8x96xf32> to vector<8x32xf32>
    %91 = vector.extract_strided_slice %80 {offsets = [0, 32], sizes = [8, 32], strides = [1, 1]} : vector<8x96xf32> to vector<8x32xf32>
    %92 = arith.addf %90, %91 : vector<8x32xf32>
    %cst_25 = arith.constant 0.000000e+00 : f32
    %93 = vector.broadcast %cst_25 : f32 to vector<8x32xf32>
    %94 = arith.subf %93, %92 : vector<8x32xf32>
    %95 = math.exp %94 : vector<8x32xf32>
    %cst_26 = arith.constant 1.000000e+00 : f32
    %96 = vector.broadcast %cst_26 : f32 to vector<8x32xf32>
    %97 = arith.addf %96, %95 : vector<8x32xf32>
    %98 = tpu.reciprocal %97 {approx = true} : vector<8x32xf32> -> vector<8x32xf32>
    %99 = vector.extract_strided_slice %79 {offsets = [0, 64], sizes = [8, 32], strides = [1, 1]} : vector<8x96xf32> to vector<8x32xf32>
    %100 = vector.extract_strided_slice %80 {offsets = [0, 64], sizes = [8, 32], strides = [1, 1]} : vector<8x96xf32> to vector<8x32xf32>
    %101 = arith.mulf %89, %100 : vector<8x32xf32>
    %102 = arith.addf %99, %101 : vector<8x32xf32>
    %103 = math.tanh %102 : vector<8x32xf32>
    %104 = vector.extract_strided_slice %75 {offsets = [0, 0], sizes = [8, 32], strides = [1, 1]} : vector<8x64xf32> to vector<8x32xf32>
    %cst_27 = arith.constant 1.000000e+00 : f32
    %105 = vector.broadcast %cst_27 : f32 to vector<8x32xf32>
    %106 = arith.subf %105, %98 : vector<8x32xf32>
    %107 = arith.mulf %106, %103 : vector<8x32xf32>
    %108 = arith.mulf %98, %104 : vector<8x32xf32>
    %109 = arith.addf %107, %108 : vector<8x32xf32>
    %110 = vector.extract_strided_slice %6 {offsets = [48, 96], sizes = [8, 96], strides = [1, 1]} : vector<64x192xf32> to vector<8x96xf32>
    %111 = vector.extract_strided_slice %78 {offsets = [0, 96], sizes = [8, 96], strides = [1, 1]} : vector<8x192xf32> to vector<8x96xf32>
    %112 = vector.extract_strided_slice %110 {offsets = [0, 0], sizes = [8, 32], strides = [1, 1]} : vector<8x96xf32> to vector<8x32xf32>
    %113 = vector.extract_strided_slice %111 {offsets = [0, 0], sizes = [8, 32], strides = [1, 1]} : vector<8x96xf32> to vector<8x32xf32>
    %114 = arith.addf %112, %113 : vector<8x32xf32>
    %cst_28 = arith.constant 0.000000e+00 : f32
    %115 = vector.broadcast %cst_28 : f32 to vector<8x32xf32>
    %116 = arith.subf %115, %114 : vector<8x32xf32>
    %117 = math.exp %116 : vector<8x32xf32>
    %cst_29 = arith.constant 1.000000e+00 : f32
    %118 = vector.broadcast %cst_29 : f32 to vector<8x32xf32>
    %119 = arith.addf %118, %117 : vector<8x32xf32>
    %120 = tpu.reciprocal %119 {approx = true} : vector<8x32xf32> -> vector<8x32xf32>
    %121 = vector.extract_strided_slice %110 {offsets = [0, 32], sizes = [8, 32], strides = [1, 1]} : vector<8x96xf32> to vector<8x32xf32>
    %122 = vector.extract_strided_slice %111 {offsets = [0, 32], sizes = [8, 32], strides = [1, 1]} : vector<8x96xf32> to vector<8x32xf32>
    %123 = arith.addf %121, %122 : vector<8x32xf32>
    %cst_30 = arith.constant 0.000000e+00 : f32
    %124 = vector.broadcast %cst_30 : f32 to vector<8x32xf32>
    %125 = arith.subf %124, %123 : vector<8x32xf32>
    %126 = math.exp %125 : vector<8x32xf32>
    %cst_31 = arith.constant 1.000000e+00 : f32
    %127 = vector.broadcast %cst_31 : f32 to vector<8x32xf32>
    %128 = arith.addf %127, %126 : vector<8x32xf32>
    %129 = tpu.reciprocal %128 {approx = true} : vector<8x32xf32> -> vector<8x32xf32>
    %130 = vector.extract_strided_slice %110 {offsets = [0, 64], sizes = [8, 32], strides = [1, 1]} : vector<8x96xf32> to vector<8x32xf32>
    %131 = vector.extract_strided_slice %111 {offsets = [0, 64], sizes = [8, 32], strides = [1, 1]} : vector<8x96xf32> to vector<8x32xf32>
    %132 = arith.mulf %120, %131 : vector<8x32xf32>
    %133 = arith.addf %130, %132 : vector<8x32xf32>
    %134 = math.tanh %133 : vector<8x32xf32>
    %135 = vector.extract_strided_slice %75 {offsets = [0, 32], sizes = [8, 32], strides = [1, 1]} : vector<8x64xf32> to vector<8x32xf32>
    %cst_32 = arith.constant 1.000000e+00 : f32
    %136 = vector.broadcast %cst_32 : f32 to vector<8x32xf32>
    %137 = arith.subf %136, %129 : vector<8x32xf32>
    %138 = arith.mulf %137, %134 : vector<8x32xf32>
    %139 = arith.mulf %129, %135 : vector<8x32xf32>
    %140 = arith.addf %138, %139 : vector<8x32xf32>
    %141 = tpu.concatenate %109, %140 in 1 : vector<8x32xf32>, vector<8x32xf32> -> vector<8x64xf32>
    %cst_33 = arith.constant dense<0.000000e+00> : vector<8x192xf32>
    %142 = tpu.matmul %141, %7, %cst_33 {dimension_numbers = #tpu.dot_dimension_numbers<[1], [0], [0], [1], [0, 0, 1, 1], [], []>} : vector<8x64xf32>, vector<64x192xf32>, vector<8x192xf32> -> vector<8x192xf32>
    %143 = vector.broadcast %8 : vector<1x192xf32> to vector<8x192xf32>
    %144 = arith.addf %142, %143 : vector<8x192xf32>
    %145 = vector.extract_strided_slice %6 {offsets = [16, 0], sizes = [8, 96], strides = [1, 1]} : vector<64x192xf32> to vector<8x96xf32>
    %146 = vector.extract_strided_slice %144 {offsets = [0, 0], sizes = [8, 96], strides = [1, 1]} : vector<8x192xf32> to vector<8x96xf32>
    %147 = vector.extract_strided_slice %145 {offsets = [0, 0], sizes = [8, 32], strides = [1, 1]} : vector<8x96xf32> to vector<8x32xf32>
    %148 = vector.extract_strided_slice %146 {offsets = [0, 0], sizes = [8, 32], strides = [1, 1]} : vector<8x96xf32> to vector<8x32xf32>
    %149 = arith.addf %147, %148 : vector<8x32xf32>
    %cst_34 = arith.constant 0.000000e+00 : f32
    %150 = vector.broadcast %cst_34 : f32 to vector<8x32xf32>
    %151 = arith.subf %150, %149 : vector<8x32xf32>
    %152 = math.exp %151 : vector<8x32xf32>
    %cst_35 = arith.constant 1.000000e+00 : f32
    %153 = vector.broadcast %cst_35 : f32 to vector<8x32xf32>
    %154 = arith.addf %153, %152 : vector<8x32xf32>
    %155 = tpu.reciprocal %154 {approx = true} : vector<8x32xf32> -> vector<8x32xf32>
    %156 = vector.extract_strided_slice %145 {offsets = [0, 32], sizes = [8, 32], strides = [1, 1]} : vector<8x96xf32> to vector<8x32xf32>
    %157 = vector.extract_strided_slice %146 {offsets = [0, 32], sizes = [8, 32], strides = [1, 1]} : vector<8x96xf32> to vector<8x32xf32>
    %158 = arith.addf %156, %157 : vector<8x32xf32>
    %cst_36 = arith.constant 0.000000e+00 : f32
    %159 = vector.broadcast %cst_36 : f32 to vector<8x32xf32>
    %160 = arith.subf %159, %158 : vector<8x32xf32>
    %161 = math.exp %160 : vector<8x32xf32>
    %cst_37 = arith.constant 1.000000e+00 : f32
    %162 = vector.broadcast %cst_37 : f32 to vector<8x32xf32>
    %163 = arith.addf %162, %161 : vector<8x32xf32>
    %164 = tpu.reciprocal %163 {approx = true} : vector<8x32xf32> -> vector<8x32xf32>
    %165 = vector.extract_strided_slice %145 {offsets = [0, 64], sizes = [8, 32], strides = [1, 1]} : vector<8x96xf32> to vector<8x32xf32>
    %166 = vector.extract_strided_slice %146 {offsets = [0, 64], sizes = [8, 32], strides = [1, 1]} : vector<8x96xf32> to vector<8x32xf32>
    %167 = arith.mulf %155, %166 : vector<8x32xf32>
    %168 = arith.addf %165, %167 : vector<8x32xf32>
    %169 = math.tanh %168 : vector<8x32xf32>
    %170 = vector.extract_strided_slice %141 {offsets = [0, 0], sizes = [8, 32], strides = [1, 1]} : vector<8x64xf32> to vector<8x32xf32>
    %cst_38 = arith.constant 1.000000e+00 : f32
    %171 = vector.broadcast %cst_38 : f32 to vector<8x32xf32>
    %172 = arith.subf %171, %164 : vector<8x32xf32>
    %173 = arith.mulf %172, %169 : vector<8x32xf32>
    %174 = arith.mulf %164, %170 : vector<8x32xf32>
    %175 = arith.addf %173, %174 : vector<8x32xf32>
    %176 = vector.extract_strided_slice %6 {offsets = [40, 96], sizes = [8, 96], strides = [1, 1]} : vector<64x192xf32> to vector<8x96xf32>
    %177 = vector.extract_strided_slice %144 {offsets = [0, 96], sizes = [8, 96], strides = [1, 1]} : vector<8x192xf32> to vector<8x96xf32>
    %178 = vector.extract_strided_slice %176 {offsets = [0, 0], sizes = [8, 32], strides = [1, 1]} : vector<8x96xf32> to vector<8x32xf32>
    %179 = vector.extract_strided_slice %177 {offsets = [0, 0], sizes = [8, 32], strides = [1, 1]} : vector<8x96xf32> to vector<8x32xf32>
    %180 = arith.addf %178, %179 : vector<8x32xf32>
    %cst_39 = arith.constant 0.000000e+00 : f32
    %181 = vector.broadcast %cst_39 : f32 to vector<8x32xf32>
    %182 = arith.subf %181, %180 : vector<8x32xf32>
    %183 = math.exp %182 : vector<8x32xf32>
    %cst_40 = arith.constant 1.000000e+00 : f32
    %184 = vector.broadcast %cst_40 : f32 to vector<8x32xf32>
    %185 = arith.addf %184, %183 : vector<8x32xf32>
    %186 = tpu.reciprocal %185 {approx = true} : vector<8x32xf32> -> vector<8x32xf32>
    %187 = vector.extract_strided_slice %176 {offsets = [0, 32], sizes = [8, 32], strides = [1, 1]} : vector<8x96xf32> to vector<8x32xf32>
    %188 = vector.extract_strided_slice %177 {offsets = [0, 32], sizes = [8, 32], strides = [1, 1]} : vector<8x96xf32> to vector<8x32xf32>
    %189 = arith.addf %187, %188 : vector<8x32xf32>
    %cst_41 = arith.constant 0.000000e+00 : f32
    %190 = vector.broadcast %cst_41 : f32 to vector<8x32xf32>
    %191 = arith.subf %190, %189 : vector<8x32xf32>
    %192 = math.exp %191 : vector<8x32xf32>
    %cst_42 = arith.constant 1.000000e+00 : f32
    %193 = vector.broadcast %cst_42 : f32 to vector<8x32xf32>
    %194 = arith.addf %193, %192 : vector<8x32xf32>
    %195 = tpu.reciprocal %194 {approx = true} : vector<8x32xf32> -> vector<8x32xf32>
    %196 = vector.extract_strided_slice %176 {offsets = [0, 64], sizes = [8, 32], strides = [1, 1]} : vector<8x96xf32> to vector<8x32xf32>
    %197 = vector.extract_strided_slice %177 {offsets = [0, 64], sizes = [8, 32], strides = [1, 1]} : vector<8x96xf32> to vector<8x32xf32>
    %198 = arith.mulf %186, %197 : vector<8x32xf32>
    %199 = arith.addf %196, %198 : vector<8x32xf32>
    %200 = math.tanh %199 : vector<8x32xf32>
    %201 = vector.extract_strided_slice %141 {offsets = [0, 32], sizes = [8, 32], strides = [1, 1]} : vector<8x64xf32> to vector<8x32xf32>
    %cst_43 = arith.constant 1.000000e+00 : f32
    %202 = vector.broadcast %cst_43 : f32 to vector<8x32xf32>
    %203 = arith.subf %202, %195 : vector<8x32xf32>
    %204 = arith.mulf %203, %200 : vector<8x32xf32>
    %205 = arith.mulf %195, %201 : vector<8x32xf32>
    %206 = arith.addf %204, %205 : vector<8x32xf32>
    %207 = tpu.concatenate %175, %206 in 1 : vector<8x32xf32>, vector<8x32xf32> -> vector<8x64xf32>
    %cst_44 = arith.constant dense<0.000000e+00> : vector<8x192xf32>
    %208 = tpu.matmul %207, %7, %cst_44 {dimension_numbers = #tpu.dot_dimension_numbers<[1], [0], [0], [1], [0, 0, 1, 1], [], []>} : vector<8x64xf32>, vector<64x192xf32>, vector<8x192xf32> -> vector<8x192xf32>
    %209 = vector.broadcast %8 : vector<1x192xf32> to vector<8x192xf32>
    %210 = arith.addf %208, %209 : vector<8x192xf32>
    %211 = vector.extract_strided_slice %6 {offsets = [24, 0], sizes = [8, 96], strides = [1, 1]} : vector<64x192xf32> to vector<8x96xf32>
    %212 = vector.extract_strided_slice %210 {offsets = [0, 0], sizes = [8, 96], strides = [1, 1]} : vector<8x192xf32> to vector<8x96xf32>
    %213 = vector.extract_strided_slice %211 {offsets = [0, 0], sizes = [8, 32], strides = [1, 1]} : vector<8x96xf32> to vector<8x32xf32>
    %214 = vector.extract_strided_slice %212 {offsets = [0, 0], sizes = [8, 32], strides = [1, 1]} : vector<8x96xf32> to vector<8x32xf32>
    %215 = arith.addf %213, %214 : vector<8x32xf32>
    %cst_45 = arith.constant 0.000000e+00 : f32
    %216 = vector.broadcast %cst_45 : f32 to vector<8x32xf32>
    %217 = arith.subf %216, %215 : vector<8x32xf32>
    %218 = math.exp %217 : vector<8x32xf32>
    %cst_46 = arith.constant 1.000000e+00 : f32
    %219 = vector.broadcast %cst_46 : f32 to vector<8x32xf32>
    %220 = arith.addf %219, %218 : vector<8x32xf32>
    %221 = tpu.reciprocal %220 {approx = true} : vector<8x32xf32> -> vector<8x32xf32>
    %222 = vector.extract_strided_slice %211 {offsets = [0, 32], sizes = [8, 32], strides = [1, 1]} : vector<8x96xf32> to vector<8x32xf32>
    %223 = vector.extract_strided_slice %212 {offsets = [0, 32], sizes = [8, 32], strides = [1, 1]} : vector<8x96xf32> to vector<8x32xf32>
    %224 = arith.addf %222, %223 : vector<8x32xf32>
    %cst_47 = arith.constant 0.000000e+00 : f32
    %225 = vector.broadcast %cst_47 : f32 to vector<8x32xf32>
    %226 = arith.subf %225, %224 : vector<8x32xf32>
    %227 = math.exp %226 : vector<8x32xf32>
    %cst_48 = arith.constant 1.000000e+00 : f32
    %228 = vector.broadcast %cst_48 : f32 to vector<8x32xf32>
    %229 = arith.addf %228, %227 : vector<8x32xf32>
    %230 = tpu.reciprocal %229 {approx = true} : vector<8x32xf32> -> vector<8x32xf32>
    %231 = vector.extract_strided_slice %211 {offsets = [0, 64], sizes = [8, 32], strides = [1, 1]} : vector<8x96xf32> to vector<8x32xf32>
    %232 = vector.extract_strided_slice %212 {offsets = [0, 64], sizes = [8, 32], strides = [1, 1]} : vector<8x96xf32> to vector<8x32xf32>
    %233 = arith.mulf %221, %232 : vector<8x32xf32>
    %234 = arith.addf %231, %233 : vector<8x32xf32>
    %235 = math.tanh %234 : vector<8x32xf32>
    %236 = vector.extract_strided_slice %207 {offsets = [0, 0], sizes = [8, 32], strides = [1, 1]} : vector<8x64xf32> to vector<8x32xf32>
    %cst_49 = arith.constant 1.000000e+00 : f32
    %237 = vector.broadcast %cst_49 : f32 to vector<8x32xf32>
    %238 = arith.subf %237, %230 : vector<8x32xf32>
    %239 = arith.mulf %238, %235 : vector<8x32xf32>
    %240 = arith.mulf %230, %236 : vector<8x32xf32>
    %241 = arith.addf %239, %240 : vector<8x32xf32>
    %242 = vector.extract_strided_slice %6 {offsets = [32, 96], sizes = [8, 96], strides = [1, 1]} : vector<64x192xf32> to vector<8x96xf32>
    %243 = vector.extract_strided_slice %210 {offsets = [0, 96], sizes = [8, 96], strides = [1, 1]} : vector<8x192xf32> to vector<8x96xf32>
    %244 = vector.extract_strided_slice %242 {offsets = [0, 0], sizes = [8, 32], strides = [1, 1]} : vector<8x96xf32> to vector<8x32xf32>
    %245 = vector.extract_strided_slice %243 {offsets = [0, 0], sizes = [8, 32], strides = [1, 1]} : vector<8x96xf32> to vector<8x32xf32>
    %246 = arith.addf %244, %245 : vector<8x32xf32>
    %cst_50 = arith.constant 0.000000e+00 : f32
    %247 = vector.broadcast %cst_50 : f32 to vector<8x32xf32>
    %248 = arith.subf %247, %246 : vector<8x32xf32>
    %249 = math.exp %248 : vector<8x32xf32>
    %cst_51 = arith.constant 1.000000e+00 : f32
    %250 = vector.broadcast %cst_51 : f32 to vector<8x32xf32>
    %251 = arith.addf %250, %249 : vector<8x32xf32>
    %252 = tpu.reciprocal %251 {approx = true} : vector<8x32xf32> -> vector<8x32xf32>
    %253 = vector.extract_strided_slice %242 {offsets = [0, 32], sizes = [8, 32], strides = [1, 1]} : vector<8x96xf32> to vector<8x32xf32>
    %254 = vector.extract_strided_slice %243 {offsets = [0, 32], sizes = [8, 32], strides = [1, 1]} : vector<8x96xf32> to vector<8x32xf32>
    %255 = arith.addf %253, %254 : vector<8x32xf32>
    %cst_52 = arith.constant 0.000000e+00 : f32
    %256 = vector.broadcast %cst_52 : f32 to vector<8x32xf32>
    %257 = arith.subf %256, %255 : vector<8x32xf32>
    %258 = math.exp %257 : vector<8x32xf32>
    %cst_53 = arith.constant 1.000000e+00 : f32
    %259 = vector.broadcast %cst_53 : f32 to vector<8x32xf32>
    %260 = arith.addf %259, %258 : vector<8x32xf32>
    %261 = tpu.reciprocal %260 {approx = true} : vector<8x32xf32> -> vector<8x32xf32>
    %262 = vector.extract_strided_slice %242 {offsets = [0, 64], sizes = [8, 32], strides = [1, 1]} : vector<8x96xf32> to vector<8x32xf32>
    %263 = vector.extract_strided_slice %243 {offsets = [0, 64], sizes = [8, 32], strides = [1, 1]} : vector<8x96xf32> to vector<8x32xf32>
    %264 = arith.mulf %252, %263 : vector<8x32xf32>
    %265 = arith.addf %262, %264 : vector<8x32xf32>
    %266 = math.tanh %265 : vector<8x32xf32>
    %267 = vector.extract_strided_slice %207 {offsets = [0, 32], sizes = [8, 32], strides = [1, 1]} : vector<8x64xf32> to vector<8x32xf32>
    %cst_54 = arith.constant 1.000000e+00 : f32
    %268 = vector.broadcast %cst_54 : f32 to vector<8x32xf32>
    %269 = arith.subf %268, %261 : vector<8x32xf32>
    %270 = arith.mulf %269, %266 : vector<8x32xf32>
    %271 = arith.mulf %261, %267 : vector<8x32xf32>
    %272 = arith.addf %270, %271 : vector<8x32xf32>
    %273 = tpu.concatenate %241, %272 in 1 : vector<8x32xf32>, vector<8x32xf32> -> vector<8x64xf32>
    %cst_55 = arith.constant dense<0.000000e+00> : vector<8x192xf32>
    %274 = tpu.matmul %273, %7, %cst_55 {dimension_numbers = #tpu.dot_dimension_numbers<[1], [0], [0], [1], [0, 0, 1, 1], [], []>} : vector<8x64xf32>, vector<64x192xf32>, vector<8x192xf32> -> vector<8x192xf32>
    %275 = vector.broadcast %8 : vector<1x192xf32> to vector<8x192xf32>
    %276 = arith.addf %274, %275 : vector<8x192xf32>
    %277 = vector.extract_strided_slice %6 {offsets = [32, 0], sizes = [8, 96], strides = [1, 1]} : vector<64x192xf32> to vector<8x96xf32>
    %278 = vector.extract_strided_slice %276 {offsets = [0, 0], sizes = [8, 96], strides = [1, 1]} : vector<8x192xf32> to vector<8x96xf32>
    %279 = vector.extract_strided_slice %277 {offsets = [0, 0], sizes = [8, 32], strides = [1, 1]} : vector<8x96xf32> to vector<8x32xf32>
    %280 = vector.extract_strided_slice %278 {offsets = [0, 0], sizes = [8, 32], strides = [1, 1]} : vector<8x96xf32> to vector<8x32xf32>
    %281 = arith.addf %279, %280 : vector<8x32xf32>
    %cst_56 = arith.constant 0.000000e+00 : f32
    %282 = vector.broadcast %cst_56 : f32 to vector<8x32xf32>
    %283 = arith.subf %282, %281 : vector<8x32xf32>
    %284 = math.exp %283 : vector<8x32xf32>
    %cst_57 = arith.constant 1.000000e+00 : f32
    %285 = vector.broadcast %cst_57 : f32 to vector<8x32xf32>
    %286 = arith.addf %285, %284 : vector<8x32xf32>
    %287 = tpu.reciprocal %286 {approx = true} : vector<8x32xf32> -> vector<8x32xf32>
    %288 = vector.extract_strided_slice %277 {offsets = [0, 32], sizes = [8, 32], strides = [1, 1]} : vector<8x96xf32> to vector<8x32xf32>
    %289 = vector.extract_strided_slice %278 {offsets = [0, 32], sizes = [8, 32], strides = [1, 1]} : vector<8x96xf32> to vector<8x32xf32>
    %290 = arith.addf %288, %289 : vector<8x32xf32>
    %cst_58 = arith.constant 0.000000e+00 : f32
    %291 = vector.broadcast %cst_58 : f32 to vector<8x32xf32>
    %292 = arith.subf %291, %290 : vector<8x32xf32>
    %293 = math.exp %292 : vector<8x32xf32>
    %cst_59 = arith.constant 1.000000e+00 : f32
    %294 = vector.broadcast %cst_59 : f32 to vector<8x32xf32>
    %295 = arith.addf %294, %293 : vector<8x32xf32>
    %296 = tpu.reciprocal %295 {approx = true} : vector<8x32xf32> -> vector<8x32xf32>
    %297 = vector.extract_strided_slice %277 {offsets = [0, 64], sizes = [8, 32], strides = [1, 1]} : vector<8x96xf32> to vector<8x32xf32>
    %298 = vector.extract_strided_slice %278 {offsets = [0, 64], sizes = [8, 32], strides = [1, 1]} : vector<8x96xf32> to vector<8x32xf32>
    %299 = arith.mulf %287, %298 : vector<8x32xf32>
    %300 = arith.addf %297, %299 : vector<8x32xf32>
    %301 = math.tanh %300 : vector<8x32xf32>
    %302 = vector.extract_strided_slice %273 {offsets = [0, 0], sizes = [8, 32], strides = [1, 1]} : vector<8x64xf32> to vector<8x32xf32>
    %cst_60 = arith.constant 1.000000e+00 : f32
    %303 = vector.broadcast %cst_60 : f32 to vector<8x32xf32>
    %304 = arith.subf %303, %296 : vector<8x32xf32>
    %305 = arith.mulf %304, %301 : vector<8x32xf32>
    %306 = arith.mulf %296, %302 : vector<8x32xf32>
    %307 = arith.addf %305, %306 : vector<8x32xf32>
    %308 = vector.extract_strided_slice %6 {offsets = [24, 96], sizes = [8, 96], strides = [1, 1]} : vector<64x192xf32> to vector<8x96xf32>
    %309 = vector.extract_strided_slice %276 {offsets = [0, 96], sizes = [8, 96], strides = [1, 1]} : vector<8x192xf32> to vector<8x96xf32>
    %310 = vector.extract_strided_slice %308 {offsets = [0, 0], sizes = [8, 32], strides = [1, 1]} : vector<8x96xf32> to vector<8x32xf32>
    %311 = vector.extract_strided_slice %309 {offsets = [0, 0], sizes = [8, 32], strides = [1, 1]} : vector<8x96xf32> to vector<8x32xf32>
    %312 = arith.addf %310, %311 : vector<8x32xf32>
    %cst_61 = arith.constant 0.000000e+00 : f32
    %313 = vector.broadcast %cst_61 : f32 to vector<8x32xf32>
    %314 = arith.subf %313, %312 : vector<8x32xf32>
    %315 = math.exp %314 : vector<8x32xf32>
    %cst_62 = arith.constant 1.000000e+00 : f32
    %316 = vector.broadcast %cst_62 : f32 to vector<8x32xf32>
    %317 = arith.addf %316, %315 : vector<8x32xf32>
    %318 = tpu.reciprocal %317 {approx = true} : vector<8x32xf32> -> vector<8x32xf32>
    %319 = vector.extract_strided_slice %308 {offsets = [0, 32], sizes = [8, 32], strides = [1, 1]} : vector<8x96xf32> to vector<8x32xf32>
    %320 = vector.extract_strided_slice %309 {offsets = [0, 32], sizes = [8, 32], strides = [1, 1]} : vector<8x96xf32> to vector<8x32xf32>
    %321 = arith.addf %319, %320 : vector<8x32xf32>
    %cst_63 = arith.constant 0.000000e+00 : f32
    %322 = vector.broadcast %cst_63 : f32 to vector<8x32xf32>
    %323 = arith.subf %322, %321 : vector<8x32xf32>
    %324 = math.exp %323 : vector<8x32xf32>
    %cst_64 = arith.constant 1.000000e+00 : f32
    %325 = vector.broadcast %cst_64 : f32 to vector<8x32xf32>
    %326 = arith.addf %325, %324 : vector<8x32xf32>
    %327 = tpu.reciprocal %326 {approx = true} : vector<8x32xf32> -> vector<8x32xf32>
    %328 = vector.extract_strided_slice %308 {offsets = [0, 64], sizes = [8, 32], strides = [1, 1]} : vector<8x96xf32> to vector<8x32xf32>
    %329 = vector.extract_strided_slice %309 {offsets = [0, 64], sizes = [8, 32], strides = [1, 1]} : vector<8x96xf32> to vector<8x32xf32>
    %330 = arith.mulf %318, %329 : vector<8x32xf32>
    %331 = arith.addf %328, %330 : vector<8x32xf32>
    %332 = math.tanh %331 : vector<8x32xf32>
    %333 = vector.extract_strided_slice %273 {offsets = [0, 32], sizes = [8, 32], strides = [1, 1]} : vector<8x64xf32> to vector<8x32xf32>
    %cst_65 = arith.constant 1.000000e+00 : f32
    %334 = vector.broadcast %cst_65 : f32 to vector<8x32xf32>
    %335 = arith.subf %334, %327 : vector<8x32xf32>
    %336 = arith.mulf %335, %332 : vector<8x32xf32>
    %337 = arith.mulf %327, %333 : vector<8x32xf32>
    %338 = arith.addf %336, %337 : vector<8x32xf32>
    %339 = tpu.concatenate %307, %338 in 1 : vector<8x32xf32>, vector<8x32xf32> -> vector<8x64xf32>
    %cst_66 = arith.constant dense<0.000000e+00> : vector<8x192xf32>
    %340 = tpu.matmul %339, %7, %cst_66 {dimension_numbers = #tpu.dot_dimension_numbers<[1], [0], [0], [1], [0, 0, 1, 1], [], []>} : vector<8x64xf32>, vector<64x192xf32>, vector<8x192xf32> -> vector<8x192xf32>
    %341 = vector.broadcast %8 : vector<1x192xf32> to vector<8x192xf32>
    %342 = arith.addf %340, %341 : vector<8x192xf32>
    %343 = vector.extract_strided_slice %6 {offsets = [40, 0], sizes = [8, 96], strides = [1, 1]} : vector<64x192xf32> to vector<8x96xf32>
    %344 = vector.extract_strided_slice %342 {offsets = [0, 0], sizes = [8, 96], strides = [1, 1]} : vector<8x192xf32> to vector<8x96xf32>
    %345 = vector.extract_strided_slice %343 {offsets = [0, 0], sizes = [8, 32], strides = [1, 1]} : vector<8x96xf32> to vector<8x32xf32>
    %346 = vector.extract_strided_slice %344 {offsets = [0, 0], sizes = [8, 32], strides = [1, 1]} : vector<8x96xf32> to vector<8x32xf32>
    %347 = arith.addf %345, %346 : vector<8x32xf32>
    %cst_67 = arith.constant 0.000000e+00 : f32
    %348 = vector.broadcast %cst_67 : f32 to vector<8x32xf32>
    %349 = arith.subf %348, %347 : vector<8x32xf32>
    %350 = math.exp %349 : vector<8x32xf32>
    %cst_68 = arith.constant 1.000000e+00 : f32
    %351 = vector.broadcast %cst_68 : f32 to vector<8x32xf32>
    %352 = arith.addf %351, %350 : vector<8x32xf32>
    %353 = tpu.reciprocal %352 {approx = true} : vector<8x32xf32> -> vector<8x32xf32>
    %354 = vector.extract_strided_slice %343 {offsets = [0, 32], sizes = [8, 32], strides = [1, 1]} : vector<8x96xf32> to vector<8x32xf32>
    %355 = vector.extract_strided_slice %344 {offsets = [0, 32], sizes = [8, 32], strides = [1, 1]} : vector<8x96xf32> to vector<8x32xf32>
    %356 = arith.addf %354, %355 : vector<8x32xf32>
    %cst_69 = arith.constant 0.000000e+00 : f32
    %357 = vector.broadcast %cst_69 : f32 to vector<8x32xf32>
    %358 = arith.subf %357, %356 : vector<8x32xf32>
    %359 = math.exp %358 : vector<8x32xf32>
    %cst_70 = arith.constant 1.000000e+00 : f32
    %360 = vector.broadcast %cst_70 : f32 to vector<8x32xf32>
    %361 = arith.addf %360, %359 : vector<8x32xf32>
    %362 = tpu.reciprocal %361 {approx = true} : vector<8x32xf32> -> vector<8x32xf32>
    %363 = vector.extract_strided_slice %343 {offsets = [0, 64], sizes = [8, 32], strides = [1, 1]} : vector<8x96xf32> to vector<8x32xf32>
    %364 = vector.extract_strided_slice %344 {offsets = [0, 64], sizes = [8, 32], strides = [1, 1]} : vector<8x96xf32> to vector<8x32xf32>
    %365 = arith.mulf %353, %364 : vector<8x32xf32>
    %366 = arith.addf %363, %365 : vector<8x32xf32>
    %367 = math.tanh %366 : vector<8x32xf32>
    %368 = vector.extract_strided_slice %339 {offsets = [0, 0], sizes = [8, 32], strides = [1, 1]} : vector<8x64xf32> to vector<8x32xf32>
    %cst_71 = arith.constant 1.000000e+00 : f32
    %369 = vector.broadcast %cst_71 : f32 to vector<8x32xf32>
    %370 = arith.subf %369, %362 : vector<8x32xf32>
    %371 = arith.mulf %370, %367 : vector<8x32xf32>
    %372 = arith.mulf %362, %368 : vector<8x32xf32>
    %373 = arith.addf %371, %372 : vector<8x32xf32>
    %374 = vector.extract_strided_slice %6 {offsets = [16, 96], sizes = [8, 96], strides = [1, 1]} : vector<64x192xf32> to vector<8x96xf32>
    %375 = vector.extract_strided_slice %342 {offsets = [0, 96], sizes = [8, 96], strides = [1, 1]} : vector<8x192xf32> to vector<8x96xf32>
    %376 = vector.extract_strided_slice %374 {offsets = [0, 0], sizes = [8, 32], strides = [1, 1]} : vector<8x96xf32> to vector<8x32xf32>
    %377 = vector.extract_strided_slice %375 {offsets = [0, 0], sizes = [8, 32], strides = [1, 1]} : vector<8x96xf32> to vector<8x32xf32>
    %378 = arith.addf %376, %377 : vector<8x32xf32>
    %cst_72 = arith.constant 0.000000e+00 : f32
    %379 = vector.broadcast %cst_72 : f32 to vector<8x32xf32>
    %380 = arith.subf %379, %378 : vector<8x32xf32>
    %381 = math.exp %380 : vector<8x32xf32>
    %cst_73 = arith.constant 1.000000e+00 : f32
    %382 = vector.broadcast %cst_73 : f32 to vector<8x32xf32>
    %383 = arith.addf %382, %381 : vector<8x32xf32>
    %384 = tpu.reciprocal %383 {approx = true} : vector<8x32xf32> -> vector<8x32xf32>
    %385 = vector.extract_strided_slice %374 {offsets = [0, 32], sizes = [8, 32], strides = [1, 1]} : vector<8x96xf32> to vector<8x32xf32>
    %386 = vector.extract_strided_slice %375 {offsets = [0, 32], sizes = [8, 32], strides = [1, 1]} : vector<8x96xf32> to vector<8x32xf32>
    %387 = arith.addf %385, %386 : vector<8x32xf32>
    %cst_74 = arith.constant 0.000000e+00 : f32
    %388 = vector.broadcast %cst_74 : f32 to vector<8x32xf32>
    %389 = arith.subf %388, %387 : vector<8x32xf32>
    %390 = math.exp %389 : vector<8x32xf32>
    %cst_75 = arith.constant 1.000000e+00 : f32
    %391 = vector.broadcast %cst_75 : f32 to vector<8x32xf32>
    %392 = arith.addf %391, %390 : vector<8x32xf32>
    %393 = tpu.reciprocal %392 {approx = true} : vector<8x32xf32> -> vector<8x32xf32>
    %394 = vector.extract_strided_slice %374 {offsets = [0, 64], sizes = [8, 32], strides = [1, 1]} : vector<8x96xf32> to vector<8x32xf32>
    %395 = vector.extract_strided_slice %375 {offsets = [0, 64], sizes = [8, 32], strides = [1, 1]} : vector<8x96xf32> to vector<8x32xf32>
    %396 = arith.mulf %384, %395 : vector<8x32xf32>
    %397 = arith.addf %394, %396 : vector<8x32xf32>
    %398 = math.tanh %397 : vector<8x32xf32>
    %399 = vector.extract_strided_slice %339 {offsets = [0, 32], sizes = [8, 32], strides = [1, 1]} : vector<8x64xf32> to vector<8x32xf32>
    %cst_76 = arith.constant 1.000000e+00 : f32
    %400 = vector.broadcast %cst_76 : f32 to vector<8x32xf32>
    %401 = arith.subf %400, %393 : vector<8x32xf32>
    %402 = arith.mulf %401, %398 : vector<8x32xf32>
    %403 = arith.mulf %393, %399 : vector<8x32xf32>
    %404 = arith.addf %402, %403 : vector<8x32xf32>
    %405 = tpu.concatenate %373, %404 in 1 : vector<8x32xf32>, vector<8x32xf32> -> vector<8x64xf32>
    %cst_77 = arith.constant dense<0.000000e+00> : vector<8x192xf32>
    %406 = tpu.matmul %405, %7, %cst_77 {dimension_numbers = #tpu.dot_dimension_numbers<[1], [0], [0], [1], [0, 0, 1, 1], [], []>} : vector<8x64xf32>, vector<64x192xf32>, vector<8x192xf32> -> vector<8x192xf32>
    %407 = vector.broadcast %8 : vector<1x192xf32> to vector<8x192xf32>
    %408 = arith.addf %406, %407 : vector<8x192xf32>
    %409 = vector.extract_strided_slice %6 {offsets = [48, 0], sizes = [8, 96], strides = [1, 1]} : vector<64x192xf32> to vector<8x96xf32>
    %410 = vector.extract_strided_slice %408 {offsets = [0, 0], sizes = [8, 96], strides = [1, 1]} : vector<8x192xf32> to vector<8x96xf32>
    %411 = vector.extract_strided_slice %409 {offsets = [0, 0], sizes = [8, 32], strides = [1, 1]} : vector<8x96xf32> to vector<8x32xf32>
    %412 = vector.extract_strided_slice %410 {offsets = [0, 0], sizes = [8, 32], strides = [1, 1]} : vector<8x96xf32> to vector<8x32xf32>
    %413 = arith.addf %411, %412 : vector<8x32xf32>
    %cst_78 = arith.constant 0.000000e+00 : f32
    %414 = vector.broadcast %cst_78 : f32 to vector<8x32xf32>
    %415 = arith.subf %414, %413 : vector<8x32xf32>
    %416 = math.exp %415 : vector<8x32xf32>
    %cst_79 = arith.constant 1.000000e+00 : f32
    %417 = vector.broadcast %cst_79 : f32 to vector<8x32xf32>
    %418 = arith.addf %417, %416 : vector<8x32xf32>
    %419 = tpu.reciprocal %418 {approx = true} : vector<8x32xf32> -> vector<8x32xf32>
    %420 = vector.extract_strided_slice %409 {offsets = [0, 32], sizes = [8, 32], strides = [1, 1]} : vector<8x96xf32> to vector<8x32xf32>
    %421 = vector.extract_strided_slice %410 {offsets = [0, 32], sizes = [8, 32], strides = [1, 1]} : vector<8x96xf32> to vector<8x32xf32>
    %422 = arith.addf %420, %421 : vector<8x32xf32>
    %cst_80 = arith.constant 0.000000e+00 : f32
    %423 = vector.broadcast %cst_80 : f32 to vector<8x32xf32>
    %424 = arith.subf %423, %422 : vector<8x32xf32>
    %425 = math.exp %424 : vector<8x32xf32>
    %cst_81 = arith.constant 1.000000e+00 : f32
    %426 = vector.broadcast %cst_81 : f32 to vector<8x32xf32>
    %427 = arith.addf %426, %425 : vector<8x32xf32>
    %428 = tpu.reciprocal %427 {approx = true} : vector<8x32xf32> -> vector<8x32xf32>
    %429 = vector.extract_strided_slice %409 {offsets = [0, 64], sizes = [8, 32], strides = [1, 1]} : vector<8x96xf32> to vector<8x32xf32>
    %430 = vector.extract_strided_slice %410 {offsets = [0, 64], sizes = [8, 32], strides = [1, 1]} : vector<8x96xf32> to vector<8x32xf32>
    %431 = arith.mulf %419, %430 : vector<8x32xf32>
    %432 = arith.addf %429, %431 : vector<8x32xf32>
    %433 = math.tanh %432 : vector<8x32xf32>
    %434 = vector.extract_strided_slice %405 {offsets = [0, 0], sizes = [8, 32], strides = [1, 1]} : vector<8x64xf32> to vector<8x32xf32>
    %cst_82 = arith.constant 1.000000e+00 : f32
    %435 = vector.broadcast %cst_82 : f32 to vector<8x32xf32>
    %436 = arith.subf %435, %428 : vector<8x32xf32>
    %437 = arith.mulf %436, %433 : vector<8x32xf32>
    %438 = arith.mulf %428, %434 : vector<8x32xf32>
    %439 = arith.addf %437, %438 : vector<8x32xf32>
    %440 = vector.extract_strided_slice %6 {offsets = [8, 96], sizes = [8, 96], strides = [1, 1]} : vector<64x192xf32> to vector<8x96xf32>
    %441 = vector.extract_strided_slice %408 {offsets = [0, 96], sizes = [8, 96], strides = [1, 1]} : vector<8x192xf32> to vector<8x96xf32>
    %442 = vector.extract_strided_slice %440 {offsets = [0, 0], sizes = [8, 32], strides = [1, 1]} : vector<8x96xf32> to vector<8x32xf32>
    %443 = vector.extract_strided_slice %441 {offsets = [0, 0], sizes = [8, 32], strides = [1, 1]} : vector<8x96xf32> to vector<8x32xf32>
    %444 = arith.addf %442, %443 : vector<8x32xf32>
    %cst_83 = arith.constant 0.000000e+00 : f32
    %445 = vector.broadcast %cst_83 : f32 to vector<8x32xf32>
    %446 = arith.subf %445, %444 : vector<8x32xf32>
    %447 = math.exp %446 : vector<8x32xf32>
    %cst_84 = arith.constant 1.000000e+00 : f32
    %448 = vector.broadcast %cst_84 : f32 to vector<8x32xf32>
    %449 = arith.addf %448, %447 : vector<8x32xf32>
    %450 = tpu.reciprocal %449 {approx = true} : vector<8x32xf32> -> vector<8x32xf32>
    %451 = vector.extract_strided_slice %440 {offsets = [0, 32], sizes = [8, 32], strides = [1, 1]} : vector<8x96xf32> to vector<8x32xf32>
    %452 = vector.extract_strided_slice %441 {offsets = [0, 32], sizes = [8, 32], strides = [1, 1]} : vector<8x96xf32> to vector<8x32xf32>
    %453 = arith.addf %451, %452 : vector<8x32xf32>
    %cst_85 = arith.constant 0.000000e+00 : f32
    %454 = vector.broadcast %cst_85 : f32 to vector<8x32xf32>
    %455 = arith.subf %454, %453 : vector<8x32xf32>
    %456 = math.exp %455 : vector<8x32xf32>
    %cst_86 = arith.constant 1.000000e+00 : f32
    %457 = vector.broadcast %cst_86 : f32 to vector<8x32xf32>
    %458 = arith.addf %457, %456 : vector<8x32xf32>
    %459 = tpu.reciprocal %458 {approx = true} : vector<8x32xf32> -> vector<8x32xf32>
    %460 = vector.extract_strided_slice %440 {offsets = [0, 64], sizes = [8, 32], strides = [1, 1]} : vector<8x96xf32> to vector<8x32xf32>
    %461 = vector.extract_strided_slice %441 {offsets = [0, 64], sizes = [8, 32], strides = [1, 1]} : vector<8x96xf32> to vector<8x32xf32>
    %462 = arith.mulf %450, %461 : vector<8x32xf32>
    %463 = arith.addf %460, %462 : vector<8x32xf32>
    %464 = math.tanh %463 : vector<8x32xf32>
    %465 = vector.extract_strided_slice %405 {offsets = [0, 32], sizes = [8, 32], strides = [1, 1]} : vector<8x64xf32> to vector<8x32xf32>
    %cst_87 = arith.constant 1.000000e+00 : f32
    %466 = vector.broadcast %cst_87 : f32 to vector<8x32xf32>
    %467 = arith.subf %466, %459 : vector<8x32xf32>
    %468 = arith.mulf %467, %464 : vector<8x32xf32>
    %469 = arith.mulf %459, %465 : vector<8x32xf32>
    %470 = arith.addf %468, %469 : vector<8x32xf32>
    %471 = tpu.concatenate %439, %470 in 1 : vector<8x32xf32>, vector<8x32xf32> -> vector<8x64xf32>
    %cst_88 = arith.constant dense<0.000000e+00> : vector<8x192xf32>
    %472 = tpu.matmul %471, %7, %cst_88 {dimension_numbers = #tpu.dot_dimension_numbers<[1], [0], [0], [1], [0, 0, 1, 1], [], []>} : vector<8x64xf32>, vector<64x192xf32>, vector<8x192xf32> -> vector<8x192xf32>
    %473 = vector.broadcast %8 : vector<1x192xf32> to vector<8x192xf32>
    %474 = arith.addf %472, %473 : vector<8x192xf32>
    %475 = vector.extract_strided_slice %6 {offsets = [56, 0], sizes = [8, 96], strides = [1, 1]} : vector<64x192xf32> to vector<8x96xf32>
    %476 = vector.extract_strided_slice %474 {offsets = [0, 0], sizes = [8, 96], strides = [1, 1]} : vector<8x192xf32> to vector<8x96xf32>
    %477 = vector.extract_strided_slice %475 {offsets = [0, 0], sizes = [8, 32], strides = [1, 1]} : vector<8x96xf32> to vector<8x32xf32>
    %478 = vector.extract_strided_slice %476 {offsets = [0, 0], sizes = [8, 32], strides = [1, 1]} : vector<8x96xf32> to vector<8x32xf32>
    %479 = arith.addf %477, %478 : vector<8x32xf32>
    %cst_89 = arith.constant 0.000000e+00 : f32
    %480 = vector.broadcast %cst_89 : f32 to vector<8x32xf32>
    %481 = arith.subf %480, %479 : vector<8x32xf32>
    %482 = math.exp %481 : vector<8x32xf32>
    %cst_90 = arith.constant 1.000000e+00 : f32
    %483 = vector.broadcast %cst_90 : f32 to vector<8x32xf32>
    %484 = arith.addf %483, %482 : vector<8x32xf32>
    %485 = tpu.reciprocal %484 {approx = true} : vector<8x32xf32> -> vector<8x32xf32>
    %486 = vector.extract_strided_slice %475 {offsets = [0, 32], sizes = [8, 32], strides = [1, 1]} : vector<8x96xf32> to vector<8x32xf32>
    %487 = vector.extract_strided_slice %476 {offsets = [0, 32], sizes = [8, 32], strides = [1, 1]} : vector<8x96xf32> to vector<8x32xf32>
    %488 = arith.addf %486, %487 : vector<8x32xf32>
    %cst_91 = arith.constant 0.000000e+00 : f32
    %489 = vector.broadcast %cst_91 : f32 to vector<8x32xf32>
    %490 = arith.subf %489, %488 : vector<8x32xf32>
    %491 = math.exp %490 : vector<8x32xf32>
    %cst_92 = arith.constant 1.000000e+00 : f32
    %492 = vector.broadcast %cst_92 : f32 to vector<8x32xf32>
    %493 = arith.addf %492, %491 : vector<8x32xf32>
    %494 = tpu.reciprocal %493 {approx = true} : vector<8x32xf32> -> vector<8x32xf32>
    %495 = vector.extract_strided_slice %475 {offsets = [0, 64], sizes = [8, 32], strides = [1, 1]} : vector<8x96xf32> to vector<8x32xf32>
    %496 = vector.extract_strided_slice %476 {offsets = [0, 64], sizes = [8, 32], strides = [1, 1]} : vector<8x96xf32> to vector<8x32xf32>
    %497 = arith.mulf %485, %496 : vector<8x32xf32>
    %498 = arith.addf %495, %497 : vector<8x32xf32>
    %499 = math.tanh %498 : vector<8x32xf32>
    %500 = vector.extract_strided_slice %471 {offsets = [0, 0], sizes = [8, 32], strides = [1, 1]} : vector<8x64xf32> to vector<8x32xf32>
    %cst_93 = arith.constant 1.000000e+00 : f32
    %501 = vector.broadcast %cst_93 : f32 to vector<8x32xf32>
    %502 = arith.subf %501, %494 : vector<8x32xf32>
    %503 = arith.mulf %502, %499 : vector<8x32xf32>
    %504 = arith.mulf %494, %500 : vector<8x32xf32>
    %505 = arith.addf %503, %504 : vector<8x32xf32>
    %506 = vector.extract_strided_slice %6 {offsets = [0, 96], sizes = [8, 96], strides = [1, 1]} : vector<64x192xf32> to vector<8x96xf32>
    %507 = vector.extract_strided_slice %474 {offsets = [0, 96], sizes = [8, 96], strides = [1, 1]} : vector<8x192xf32> to vector<8x96xf32>
    %508 = vector.extract_strided_slice %506 {offsets = [0, 0], sizes = [8, 32], strides = [1, 1]} : vector<8x96xf32> to vector<8x32xf32>
    %509 = vector.extract_strided_slice %507 {offsets = [0, 0], sizes = [8, 32], strides = [1, 1]} : vector<8x96xf32> to vector<8x32xf32>
    %510 = arith.addf %508, %509 : vector<8x32xf32>
    %cst_94 = arith.constant 0.000000e+00 : f32
    %511 = vector.broadcast %cst_94 : f32 to vector<8x32xf32>
    %512 = arith.subf %511, %510 : vector<8x32xf32>
    %513 = math.exp %512 : vector<8x32xf32>
    %cst_95 = arith.constant 1.000000e+00 : f32
    %514 = vector.broadcast %cst_95 : f32 to vector<8x32xf32>
    %515 = arith.addf %514, %513 : vector<8x32xf32>
    %516 = tpu.reciprocal %515 {approx = true} : vector<8x32xf32> -> vector<8x32xf32>
    %517 = vector.extract_strided_slice %506 {offsets = [0, 32], sizes = [8, 32], strides = [1, 1]} : vector<8x96xf32> to vector<8x32xf32>
    %518 = vector.extract_strided_slice %507 {offsets = [0, 32], sizes = [8, 32], strides = [1, 1]} : vector<8x96xf32> to vector<8x32xf32>
    %519 = arith.addf %517, %518 : vector<8x32xf32>
    %cst_96 = arith.constant 0.000000e+00 : f32
    %520 = vector.broadcast %cst_96 : f32 to vector<8x32xf32>
    %521 = arith.subf %520, %519 : vector<8x32xf32>
    %522 = math.exp %521 : vector<8x32xf32>
    %cst_97 = arith.constant 1.000000e+00 : f32
    %523 = vector.broadcast %cst_97 : f32 to vector<8x32xf32>
    %524 = arith.addf %523, %522 : vector<8x32xf32>
    %525 = tpu.reciprocal %524 {approx = true} : vector<8x32xf32> -> vector<8x32xf32>
    %526 = vector.extract_strided_slice %506 {offsets = [0, 64], sizes = [8, 32], strides = [1, 1]} : vector<8x96xf32> to vector<8x32xf32>
    %527 = vector.extract_strided_slice %507 {offsets = [0, 64], sizes = [8, 32], strides = [1, 1]} : vector<8x96xf32> to vector<8x32xf32>
    %528 = arith.mulf %516, %527 : vector<8x32xf32>
    %529 = arith.addf %526, %528 : vector<8x32xf32>
    %530 = math.tanh %529 : vector<8x32xf32>
    %531 = vector.extract_strided_slice %471 {offsets = [0, 32], sizes = [8, 32], strides = [1, 1]} : vector<8x64xf32> to vector<8x32xf32>
    %cst_98 = arith.constant 1.000000e+00 : f32
    %532 = vector.broadcast %cst_98 : f32 to vector<8x32xf32>
    %533 = arith.subf %532, %525 : vector<8x32xf32>
    %534 = arith.mulf %533, %530 : vector<8x32xf32>
    %535 = arith.mulf %525, %531 : vector<8x32xf32>
    %536 = arith.addf %534, %535 : vector<8x32xf32>
    %537 = tpu.concatenate %505, %536 in 1 : vector<8x32xf32>, vector<8x32xf32> -> vector<8x64xf32>
    %538 = vector.extract_strided_slice %537 {offsets = [0, 0], sizes = [8, 32], strides = [1, 1]} : vector<8x64xf32> to vector<8x32xf32>
    %539 = arith.addf %1, %538 : vector<8x32xf32>
    %540 = vector.extract_strided_slice %537 {offsets = [0, 32], sizes = [8, 32], strides = [1, 1]} : vector<8x64xf32> to vector<8x32xf32>
    %541 = arith.addf %539, %540 : vector<8x32xf32>
    %542 = tpu.concatenate %43, %536 in 1 : vector<8x32xf32>, vector<8x32xf32> -> vector<8x64xf32>
    %543 = tpu.concatenate %109, %470 in 1 : vector<8x32xf32>, vector<8x32xf32> -> vector<8x64xf32>
    %544 = tpu.concatenate %175, %404 in 1 : vector<8x32xf32>, vector<8x32xf32> -> vector<8x64xf32>
    %545 = tpu.concatenate %241, %338 in 1 : vector<8x32xf32>, vector<8x32xf32> -> vector<8x64xf32>
    %546 = tpu.concatenate %307, %272 in 1 : vector<8x32xf32>, vector<8x32xf32> -> vector<8x64xf32>
    %547 = tpu.concatenate %373, %206 in 1 : vector<8x32xf32>, vector<8x32xf32> -> vector<8x64xf32>
    %548 = tpu.concatenate %439, %140 in 1 : vector<8x32xf32>, vector<8x32xf32> -> vector<8x64xf32>
    %549 = tpu.concatenate %505, %74 in 1 : vector<8x32xf32>, vector<8x32xf32> -> vector<8x64xf32>
    %550 = tpu.concatenate %542, %543, %544, %545, %546, %547, %548, %549 in 0 : vector<8x64xf32>, vector<8x64xf32>, vector<8x64xf32>, vector<8x64xf32>, vector<8x64xf32>, vector<8x64xf32>, vector<8x64xf32>, vector<8x64xf32> -> vector<64x64xf32>
    %c0_99 = arith.constant 0 : index
    %c0_100 = arith.constant 0 : index
    %551 = vector.load %arg5[%c0_99, %c0_100] : memref<64x192xf32, #tpu.memory_space<vmem>>, vector<64x192xf32>
    %cst_101 = arith.constant dense<0.000000e+00> : vector<64x192xf32>
    %552 = tpu.matmul %550, %551, %cst_101 {dimension_numbers = #tpu.dot_dimension_numbers<[1], [0], [0], [1], [0, 0, 1, 1], [], []>} : vector<64x64xf32>, vector<64x192xf32>, vector<64x192xf32> -> vector<64x192xf32>
    %c0_102 = arith.constant 0 : index
    %c0_103 = arith.constant 0 : index
    %553 = vector.load %arg6[%c0_102, %c0_103] : memref<1x192xf32, #tpu.memory_space<vmem>>, vector<1x192xf32>
    %554 = vector.broadcast %553 : vector<1x192xf32> to vector<64x192xf32>
    %555 = arith.addf %552, %554 : vector<64x192xf32>
    %c0_104 = arith.constant 0 : index
    %c0_105 = arith.constant 0 : index
    %556 = vector.load %arg7[%c0_104, %c0_105] : memref<64x192xf32, #tpu.memory_space<vmem>>, vector<64x192xf32>
    %c0_106 = arith.constant 0 : index
    %c0_107 = arith.constant 0 : index
    %557 = vector.load %arg8[%c0_106, %c0_107] : memref<1x192xf32, #tpu.memory_space<vmem>>, vector<1x192xf32>
    %cst_108 = arith.constant 0.000000e+00 : f32
    %558 = vector.broadcast %cst_108 : f32 to vector<8x64xf32>
    %cst_109 = arith.constant dense<0.000000e+00> : vector<8x192xf32>
    %559 = tpu.matmul %558, %556, %cst_109 {dimension_numbers = #tpu.dot_dimension_numbers<[1], [0], [0], [1], [0, 0, 1, 1], [], []>} : vector<8x64xf32>, vector<64x192xf32>, vector<8x192xf32> -> vector<8x192xf32>
    %560 = vector.broadcast %557 : vector<1x192xf32> to vector<8x192xf32>
    %561 = arith.addf %559, %560 : vector<8x192xf32>
    %562 = vector.extract_strided_slice %555 {offsets = [0, 0], sizes = [8, 96], strides = [1, 1]} : vector<64x192xf32> to vector<8x96xf32>
    %563 = vector.extract_strided_slice %561 {offsets = [0, 0], sizes = [8, 96], strides = [1, 1]} : vector<8x192xf32> to vector<8x96xf32>
    %564 = vector.extract_strided_slice %562 {offsets = [0, 0], sizes = [8, 32], strides = [1, 1]} : vector<8x96xf32> to vector<8x32xf32>
    %565 = vector.extract_strided_slice %563 {offsets = [0, 0], sizes = [8, 32], strides = [1, 1]} : vector<8x96xf32> to vector<8x32xf32>
    %566 = arith.addf %564, %565 : vector<8x32xf32>
    %cst_110 = arith.constant 0.000000e+00 : f32
    %567 = vector.broadcast %cst_110 : f32 to vector<8x32xf32>
    %568 = arith.subf %567, %566 : vector<8x32xf32>
    %569 = math.exp %568 : vector<8x32xf32>
    %cst_111 = arith.constant 1.000000e+00 : f32
    %570 = vector.broadcast %cst_111 : f32 to vector<8x32xf32>
    %571 = arith.addf %570, %569 : vector<8x32xf32>
    %572 = tpu.reciprocal %571 {approx = true} : vector<8x32xf32> -> vector<8x32xf32>
    %573 = vector.extract_strided_slice %562 {offsets = [0, 32], sizes = [8, 32], strides = [1, 1]} : vector<8x96xf32> to vector<8x32xf32>
    %574 = vector.extract_strided_slice %563 {offsets = [0, 32], sizes = [8, 32], strides = [1, 1]} : vector<8x96xf32> to vector<8x32xf32>
    %575 = arith.addf %573, %574 : vector<8x32xf32>
    %cst_112 = arith.constant 0.000000e+00 : f32
    %576 = vector.broadcast %cst_112 : f32 to vector<8x32xf32>
    %577 = arith.subf %576, %575 : vector<8x32xf32>
    %578 = math.exp %577 : vector<8x32xf32>
    %cst_113 = arith.constant 1.000000e+00 : f32
    %579 = vector.broadcast %cst_113 : f32 to vector<8x32xf32>
    %580 = arith.addf %579, %578 : vector<8x32xf32>
    %581 = tpu.reciprocal %580 {approx = true} : vector<8x32xf32> -> vector<8x32xf32>
    %582 = vector.extract_strided_slice %562 {offsets = [0, 64], sizes = [8, 32], strides = [1, 1]} : vector<8x96xf32> to vector<8x32xf32>
    %583 = vector.extract_strided_slice %563 {offsets = [0, 64], sizes = [8, 32], strides = [1, 1]} : vector<8x96xf32> to vector<8x32xf32>
    %584 = arith.mulf %572, %583 : vector<8x32xf32>
    %585 = arith.addf %582, %584 : vector<8x32xf32>
    %586 = math.tanh %585 : vector<8x32xf32>
    %587 = vector.extract_strided_slice %558 {offsets = [0, 0], sizes = [8, 32], strides = [1, 1]} : vector<8x64xf32> to vector<8x32xf32>
    %cst_114 = arith.constant 1.000000e+00 : f32
    %588 = vector.broadcast %cst_114 : f32 to vector<8x32xf32>
    %589 = arith.subf %588, %581 : vector<8x32xf32>
    %590 = arith.mulf %589, %586 : vector<8x32xf32>
    %591 = arith.mulf %581, %587 : vector<8x32xf32>
    %592 = arith.addf %590, %591 : vector<8x32xf32>
    %593 = vector.extract_strided_slice %555 {offsets = [56, 96], sizes = [8, 96], strides = [1, 1]} : vector<64x192xf32> to vector<8x96xf32>
    %594 = vector.extract_strided_slice %561 {offsets = [0, 96], sizes = [8, 96], strides = [1, 1]} : vector<8x192xf32> to vector<8x96xf32>
    %595 = vector.extract_strided_slice %593 {offsets = [0, 0], sizes = [8, 32], strides = [1, 1]} : vector<8x96xf32> to vector<8x32xf32>
    %596 = vector.extract_strided_slice %594 {offsets = [0, 0], sizes = [8, 32], strides = [1, 1]} : vector<8x96xf32> to vector<8x32xf32>
    %597 = arith.addf %595, %596 : vector<8x32xf32>
    %cst_115 = arith.constant 0.000000e+00 : f32
    %598 = vector.broadcast %cst_115 : f32 to vector<8x32xf32>
    %599 = arith.subf %598, %597 : vector<8x32xf32>
    %600 = math.exp %599 : vector<8x32xf32>
    %cst_116 = arith.constant 1.000000e+00 : f32
    %601 = vector.broadcast %cst_116 : f32 to vector<8x32xf32>
    %602 = arith.addf %601, %600 : vector<8x32xf32>
    %603 = tpu.reciprocal %602 {approx = true} : vector<8x32xf32> -> vector<8x32xf32>
    %604 = vector.extract_strided_slice %593 {offsets = [0, 32], sizes = [8, 32], strides = [1, 1]} : vector<8x96xf32> to vector<8x32xf32>
    %605 = vector.extract_strided_slice %594 {offsets = [0, 32], sizes = [8, 32], strides = [1, 1]} : vector<8x96xf32> to vector<8x32xf32>
    %606 = arith.addf %604, %605 : vector<8x32xf32>
    %cst_117 = arith.constant 0.000000e+00 : f32
    %607 = vector.broadcast %cst_117 : f32 to vector<8x32xf32>
    %608 = arith.subf %607, %606 : vector<8x32xf32>
    %609 = math.exp %608 : vector<8x32xf32>
    %cst_118 = arith.constant 1.000000e+00 : f32
    %610 = vector.broadcast %cst_118 : f32 to vector<8x32xf32>
    %611 = arith.addf %610, %609 : vector<8x32xf32>
    %612 = tpu.reciprocal %611 {approx = true} : vector<8x32xf32> -> vector<8x32xf32>
    %613 = vector.extract_strided_slice %593 {offsets = [0, 64], sizes = [8, 32], strides = [1, 1]} : vector<8x96xf32> to vector<8x32xf32>
    %614 = vector.extract_strided_slice %594 {offsets = [0, 64], sizes = [8, 32], strides = [1, 1]} : vector<8x96xf32> to vector<8x32xf32>
    %615 = arith.mulf %603, %614 : vector<8x32xf32>
    %616 = arith.addf %613, %615 : vector<8x32xf32>
    %617 = math.tanh %616 : vector<8x32xf32>
    %618 = vector.extract_strided_slice %558 {offsets = [0, 32], sizes = [8, 32], strides = [1, 1]} : vector<8x64xf32> to vector<8x32xf32>
    %cst_119 = arith.constant 1.000000e+00 : f32
    %619 = vector.broadcast %cst_119 : f32 to vector<8x32xf32>
    %620 = arith.subf %619, %612 : vector<8x32xf32>
    %621 = arith.mulf %620, %617 : vector<8x32xf32>
    %622 = arith.mulf %612, %618 : vector<8x32xf32>
    %623 = arith.addf %621, %622 : vector<8x32xf32>
    %624 = tpu.concatenate %592, %623 in 1 : vector<8x32xf32>, vector<8x32xf32> -> vector<8x64xf32>
    %cst_120 = arith.constant dense<0.000000e+00> : vector<8x192xf32>
    %625 = tpu.matmul %624, %556, %cst_120 {dimension_numbers = #tpu.dot_dimension_numbers<[1], [0], [0], [1], [0, 0, 1, 1], [], []>} : vector<8x64xf32>, vector<64x192xf32>, vector<8x192xf32> -> vector<8x192xf32>
    %626 = vector.broadcast %557 : vector<1x192xf32> to vector<8x192xf32>
    %627 = arith.addf %625, %626 : vector<8x192xf32>
    %628 = vector.extract_strided_slice %555 {offsets = [8, 0], sizes = [8, 96], strides = [1, 1]} : vector<64x192xf32> to vector<8x96xf32>
    %629 = vector.extract_strided_slice %627 {offsets = [0, 0], sizes = [8, 96], strides = [1, 1]} : vector<8x192xf32> to vector<8x96xf32>
    %630 = vector.extract_strided_slice %628 {offsets = [0, 0], sizes = [8, 32], strides = [1, 1]} : vector<8x96xf32> to vector<8x32xf32>
    %631 = vector.extract_strided_slice %629 {offsets = [0, 0], sizes = [8, 32], strides = [1, 1]} : vector<8x96xf32> to vector<8x32xf32>
    %632 = arith.addf %630, %631 : vector<8x32xf32>
    %cst_121 = arith.constant 0.000000e+00 : f32
    %633 = vector.broadcast %cst_121 : f32 to vector<8x32xf32>
    %634 = arith.subf %633, %632 : vector<8x32xf32>
    %635 = math.exp %634 : vector<8x32xf32>
    %cst_122 = arith.constant 1.000000e+00 : f32
    %636 = vector.broadcast %cst_122 : f32 to vector<8x32xf32>
    %637 = arith.addf %636, %635 : vector<8x32xf32>
    %638 = tpu.reciprocal %637 {approx = true} : vector<8x32xf32> -> vector<8x32xf32>
    %639 = vector.extract_strided_slice %628 {offsets = [0, 32], sizes = [8, 32], strides = [1, 1]} : vector<8x96xf32> to vector<8x32xf32>
    %640 = vector.extract_strided_slice %629 {offsets = [0, 32], sizes = [8, 32], strides = [1, 1]} : vector<8x96xf32> to vector<8x32xf32>
    %641 = arith.addf %639, %640 : vector<8x32xf32>
    %cst_123 = arith.constant 0.000000e+00 : f32
    %642 = vector.broadcast %cst_123 : f32 to vector<8x32xf32>
    %643 = arith.subf %642, %641 : vector<8x32xf32>
    %644 = math.exp %643 : vector<8x32xf32>
    %cst_124 = arith.constant 1.000000e+00 : f32
    %645 = vector.broadcast %cst_124 : f32 to vector<8x32xf32>
    %646 = arith.addf %645, %644 : vector<8x32xf32>
    %647 = tpu.reciprocal %646 {approx = true} : vector<8x32xf32> -> vector<8x32xf32>
    %648 = vector.extract_strided_slice %628 {offsets = [0, 64], sizes = [8, 32], strides = [1, 1]} : vector<8x96xf32> to vector<8x32xf32>
    %649 = vector.extract_strided_slice %629 {offsets = [0, 64], sizes = [8, 32], strides = [1, 1]} : vector<8x96xf32> to vector<8x32xf32>
    %650 = arith.mulf %638, %649 : vector<8x32xf32>
    %651 = arith.addf %648, %650 : vector<8x32xf32>
    %652 = math.tanh %651 : vector<8x32xf32>
    %653 = vector.extract_strided_slice %624 {offsets = [0, 0], sizes = [8, 32], strides = [1, 1]} : vector<8x64xf32> to vector<8x32xf32>
    %cst_125 = arith.constant 1.000000e+00 : f32
    %654 = vector.broadcast %cst_125 : f32 to vector<8x32xf32>
    %655 = arith.subf %654, %647 : vector<8x32xf32>
    %656 = arith.mulf %655, %652 : vector<8x32xf32>
    %657 = arith.mulf %647, %653 : vector<8x32xf32>
    %658 = arith.addf %656, %657 : vector<8x32xf32>
    %659 = vector.extract_strided_slice %555 {offsets = [48, 96], sizes = [8, 96], strides = [1, 1]} : vector<64x192xf32> to vector<8x96xf32>
    %660 = vector.extract_strided_slice %627 {offsets = [0, 96], sizes = [8, 96], strides = [1, 1]} : vector<8x192xf32> to vector<8x96xf32>
    %661 = vector.extract_strided_slice %659 {offsets = [0, 0], sizes = [8, 32], strides = [1, 1]} : vector<8x96xf32> to vector<8x32xf32>
    %662 = vector.extract_strided_slice %660 {offsets = [0, 0], sizes = [8, 32], strides = [1, 1]} : vector<8x96xf32> to vector<8x32xf32>
    %663 = arith.addf %661, %662 : vector<8x32xf32>
    %cst_126 = arith.constant 0.000000e+00 : f32
    %664 = vector.broadcast %cst_126 : f32 to vector<8x32xf32>
    %665 = arith.subf %664, %663 : vector<8x32xf32>
    %666 = math.exp %665 : vector<8x32xf32>
    %cst_127 = arith.constant 1.000000e+00 : f32
    %667 = vector.broadcast %cst_127 : f32 to vector<8x32xf32>
    %668 = arith.addf %667, %666 : vector<8x32xf32>
    %669 = tpu.reciprocal %668 {approx = true} : vector<8x32xf32> -> vector<8x32xf32>
    %670 = vector.extract_strided_slice %659 {offsets = [0, 32], sizes = [8, 32], strides = [1, 1]} : vector<8x96xf32> to vector<8x32xf32>
    %671 = vector.extract_strided_slice %660 {offsets = [0, 32], sizes = [8, 32], strides = [1, 1]} : vector<8x96xf32> to vector<8x32xf32>
    %672 = arith.addf %670, %671 : vector<8x32xf32>
    %cst_128 = arith.constant 0.000000e+00 : f32
    %673 = vector.broadcast %cst_128 : f32 to vector<8x32xf32>
    %674 = arith.subf %673, %672 : vector<8x32xf32>
    %675 = math.exp %674 : vector<8x32xf32>
    %cst_129 = arith.constant 1.000000e+00 : f32
    %676 = vector.broadcast %cst_129 : f32 to vector<8x32xf32>
    %677 = arith.addf %676, %675 : vector<8x32xf32>
    %678 = tpu.reciprocal %677 {approx = true} : vector<8x32xf32> -> vector<8x32xf32>
    %679 = vector.extract_strided_slice %659 {offsets = [0, 64], sizes = [8, 32], strides = [1, 1]} : vector<8x96xf32> to vector<8x32xf32>
    %680 = vector.extract_strided_slice %660 {offsets = [0, 64], sizes = [8, 32], strides = [1, 1]} : vector<8x96xf32> to vector<8x32xf32>
    %681 = arith.mulf %669, %680 : vector<8x32xf32>
    %682 = arith.addf %679, %681 : vector<8x32xf32>
    %683 = math.tanh %682 : vector<8x32xf32>
    %684 = vector.extract_strided_slice %624 {offsets = [0, 32], sizes = [8, 32], strides = [1, 1]} : vector<8x64xf32> to vector<8x32xf32>
    %cst_130 = arith.constant 1.000000e+00 : f32
    %685 = vector.broadcast %cst_130 : f32 to vector<8x32xf32>
    %686 = arith.subf %685, %678 : vector<8x32xf32>
    %687 = arith.mulf %686, %683 : vector<8x32xf32>
    %688 = arith.mulf %678, %684 : vector<8x32xf32>
    %689 = arith.addf %687, %688 : vector<8x32xf32>
    %690 = tpu.concatenate %658, %689 in 1 : vector<8x32xf32>, vector<8x32xf32> -> vector<8x64xf32>
    %cst_131 = arith.constant dense<0.000000e+00> : vector<8x192xf32>
    %691 = tpu.matmul %690, %556, %cst_131 {dimension_numbers = #tpu.dot_dimension_numbers<[1], [0], [0], [1], [0, 0, 1, 1], [], []>} : vector<8x64xf32>, vector<64x192xf32>, vector<8x192xf32> -> vector<8x192xf32>
    %692 = vector.broadcast %557 : vector<1x192xf32> to vector<8x192xf32>
    %693 = arith.addf %691, %692 : vector<8x192xf32>
    %694 = vector.extract_strided_slice %555 {offsets = [16, 0], sizes = [8, 96], strides = [1, 1]} : vector<64x192xf32> to vector<8x96xf32>
    %695 = vector.extract_strided_slice %693 {offsets = [0, 0], sizes = [8, 96], strides = [1, 1]} : vector<8x192xf32> to vector<8x96xf32>
    %696 = vector.extract_strided_slice %694 {offsets = [0, 0], sizes = [8, 32], strides = [1, 1]} : vector<8x96xf32> to vector<8x32xf32>
    %697 = vector.extract_strided_slice %695 {offsets = [0, 0], sizes = [8, 32], strides = [1, 1]} : vector<8x96xf32> to vector<8x32xf32>
    %698 = arith.addf %696, %697 : vector<8x32xf32>
    %cst_132 = arith.constant 0.000000e+00 : f32
    %699 = vector.broadcast %cst_132 : f32 to vector<8x32xf32>
    %700 = arith.subf %699, %698 : vector<8x32xf32>
    %701 = math.exp %700 : vector<8x32xf32>
    %cst_133 = arith.constant 1.000000e+00 : f32
    %702 = vector.broadcast %cst_133 : f32 to vector<8x32xf32>
    %703 = arith.addf %702, %701 : vector<8x32xf32>
    %704 = tpu.reciprocal %703 {approx = true} : vector<8x32xf32> -> vector<8x32xf32>
    %705 = vector.extract_strided_slice %694 {offsets = [0, 32], sizes = [8, 32], strides = [1, 1]} : vector<8x96xf32> to vector<8x32xf32>
    %706 = vector.extract_strided_slice %695 {offsets = [0, 32], sizes = [8, 32], strides = [1, 1]} : vector<8x96xf32> to vector<8x32xf32>
    %707 = arith.addf %705, %706 : vector<8x32xf32>
    %cst_134 = arith.constant 0.000000e+00 : f32
    %708 = vector.broadcast %cst_134 : f32 to vector<8x32xf32>
    %709 = arith.subf %708, %707 : vector<8x32xf32>
    %710 = math.exp %709 : vector<8x32xf32>
    %cst_135 = arith.constant 1.000000e+00 : f32
    %711 = vector.broadcast %cst_135 : f32 to vector<8x32xf32>
    %712 = arith.addf %711, %710 : vector<8x32xf32>
    %713 = tpu.reciprocal %712 {approx = true} : vector<8x32xf32> -> vector<8x32xf32>
    %714 = vector.extract_strided_slice %694 {offsets = [0, 64], sizes = [8, 32], strides = [1, 1]} : vector<8x96xf32> to vector<8x32xf32>
    %715 = vector.extract_strided_slice %695 {offsets = [0, 64], sizes = [8, 32], strides = [1, 1]} : vector<8x96xf32> to vector<8x32xf32>
    %716 = arith.mulf %704, %715 : vector<8x32xf32>
    %717 = arith.addf %714, %716 : vector<8x32xf32>
    %718 = math.tanh %717 : vector<8x32xf32>
    %719 = vector.extract_strided_slice %690 {offsets = [0, 0], sizes = [8, 32], strides = [1, 1]} : vector<8x64xf32> to vector<8x32xf32>
    %cst_136 = arith.constant 1.000000e+00 : f32
    %720 = vector.broadcast %cst_136 : f32 to vector<8x32xf32>
    %721 = arith.subf %720, %713 : vector<8x32xf32>
    %722 = arith.mulf %721, %718 : vector<8x32xf32>
    %723 = arith.mulf %713, %719 : vector<8x32xf32>
    %724 = arith.addf %722, %723 : vector<8x32xf32>
    %725 = vector.extract_strided_slice %555 {offsets = [40, 96], sizes = [8, 96], strides = [1, 1]} : vector<64x192xf32> to vector<8x96xf32>
    %726 = vector.extract_strided_slice %693 {offsets = [0, 96], sizes = [8, 96], strides = [1, 1]} : vector<8x192xf32> to vector<8x96xf32>
    %727 = vector.extract_strided_slice %725 {offsets = [0, 0], sizes = [8, 32], strides = [1, 1]} : vector<8x96xf32> to vector<8x32xf32>
    %728 = vector.extract_strided_slice %726 {offsets = [0, 0], sizes = [8, 32], strides = [1, 1]} : vector<8x96xf32> to vector<8x32xf32>
    %729 = arith.addf %727, %728 : vector<8x32xf32>
    %cst_137 = arith.constant 0.000000e+00 : f32
    %730 = vector.broadcast %cst_137 : f32 to vector<8x32xf32>
    %731 = arith.subf %730, %729 : vector<8x32xf32>
    %732 = math.exp %731 : vector<8x32xf32>
    %cst_138 = arith.constant 1.000000e+00 : f32
    %733 = vector.broadcast %cst_138 : f32 to vector<8x32xf32>
    %734 = arith.addf %733, %732 : vector<8x32xf32>
    %735 = tpu.reciprocal %734 {approx = true} : vector<8x32xf32> -> vector<8x32xf32>
    %736 = vector.extract_strided_slice %725 {offsets = [0, 32], sizes = [8, 32], strides = [1, 1]} : vector<8x96xf32> to vector<8x32xf32>
    %737 = vector.extract_strided_slice %726 {offsets = [0, 32], sizes = [8, 32], strides = [1, 1]} : vector<8x96xf32> to vector<8x32xf32>
    %738 = arith.addf %736, %737 : vector<8x32xf32>
    %cst_139 = arith.constant 0.000000e+00 : f32
    %739 = vector.broadcast %cst_139 : f32 to vector<8x32xf32>
    %740 = arith.subf %739, %738 : vector<8x32xf32>
    %741 = math.exp %740 : vector<8x32xf32>
    %cst_140 = arith.constant 1.000000e+00 : f32
    %742 = vector.broadcast %cst_140 : f32 to vector<8x32xf32>
    %743 = arith.addf %742, %741 : vector<8x32xf32>
    %744 = tpu.reciprocal %743 {approx = true} : vector<8x32xf32> -> vector<8x32xf32>
    %745 = vector.extract_strided_slice %725 {offsets = [0, 64], sizes = [8, 32], strides = [1, 1]} : vector<8x96xf32> to vector<8x32xf32>
    %746 = vector.extract_strided_slice %726 {offsets = [0, 64], sizes = [8, 32], strides = [1, 1]} : vector<8x96xf32> to vector<8x32xf32>
    %747 = arith.mulf %735, %746 : vector<8x32xf32>
    %748 = arith.addf %745, %747 : vector<8x32xf32>
    %749 = math.tanh %748 : vector<8x32xf32>
    %750 = vector.extract_strided_slice %690 {offsets = [0, 32], sizes = [8, 32], strides = [1, 1]} : vector<8x64xf32> to vector<8x32xf32>
    %cst_141 = arith.constant 1.000000e+00 : f32
    %751 = vector.broadcast %cst_141 : f32 to vector<8x32xf32>
    %752 = arith.subf %751, %744 : vector<8x32xf32>
    %753 = arith.mulf %752, %749 : vector<8x32xf32>
    %754 = arith.mulf %744, %750 : vector<8x32xf32>
    %755 = arith.addf %753, %754 : vector<8x32xf32>
    %756 = tpu.concatenate %724, %755 in 1 : vector<8x32xf32>, vector<8x32xf32> -> vector<8x64xf32>
    %cst_142 = arith.constant dense<0.000000e+00> : vector<8x192xf32>
    %757 = tpu.matmul %756, %556, %cst_142 {dimension_numbers = #tpu.dot_dimension_numbers<[1], [0], [0], [1], [0, 0, 1, 1], [], []>} : vector<8x64xf32>, vector<64x192xf32>, vector<8x192xf32> -> vector<8x192xf32>
    %758 = vector.broadcast %557 : vector<1x192xf32> to vector<8x192xf32>
    %759 = arith.addf %757, %758 : vector<8x192xf32>
    %760 = vector.extract_strided_slice %555 {offsets = [24, 0], sizes = [8, 96], strides = [1, 1]} : vector<64x192xf32> to vector<8x96xf32>
    %761 = vector.extract_strided_slice %759 {offsets = [0, 0], sizes = [8, 96], strides = [1, 1]} : vector<8x192xf32> to vector<8x96xf32>
    %762 = vector.extract_strided_slice %760 {offsets = [0, 0], sizes = [8, 32], strides = [1, 1]} : vector<8x96xf32> to vector<8x32xf32>
    %763 = vector.extract_strided_slice %761 {offsets = [0, 0], sizes = [8, 32], strides = [1, 1]} : vector<8x96xf32> to vector<8x32xf32>
    %764 = arith.addf %762, %763 : vector<8x32xf32>
    %cst_143 = arith.constant 0.000000e+00 : f32
    %765 = vector.broadcast %cst_143 : f32 to vector<8x32xf32>
    %766 = arith.subf %765, %764 : vector<8x32xf32>
    %767 = math.exp %766 : vector<8x32xf32>
    %cst_144 = arith.constant 1.000000e+00 : f32
    %768 = vector.broadcast %cst_144 : f32 to vector<8x32xf32>
    %769 = arith.addf %768, %767 : vector<8x32xf32>
    %770 = tpu.reciprocal %769 {approx = true} : vector<8x32xf32> -> vector<8x32xf32>
    %771 = vector.extract_strided_slice %760 {offsets = [0, 32], sizes = [8, 32], strides = [1, 1]} : vector<8x96xf32> to vector<8x32xf32>
    %772 = vector.extract_strided_slice %761 {offsets = [0, 32], sizes = [8, 32], strides = [1, 1]} : vector<8x96xf32> to vector<8x32xf32>
    %773 = arith.addf %771, %772 : vector<8x32xf32>
    %cst_145 = arith.constant 0.000000e+00 : f32
    %774 = vector.broadcast %cst_145 : f32 to vector<8x32xf32>
    %775 = arith.subf %774, %773 : vector<8x32xf32>
    %776 = math.exp %775 : vector<8x32xf32>
    %cst_146 = arith.constant 1.000000e+00 : f32
    %777 = vector.broadcast %cst_146 : f32 to vector<8x32xf32>
    %778 = arith.addf %777, %776 : vector<8x32xf32>
    %779 = tpu.reciprocal %778 {approx = true} : vector<8x32xf32> -> vector<8x32xf32>
    %780 = vector.extract_strided_slice %760 {offsets = [0, 64], sizes = [8, 32], strides = [1, 1]} : vector<8x96xf32> to vector<8x32xf32>
    %781 = vector.extract_strided_slice %761 {offsets = [0, 64], sizes = [8, 32], strides = [1, 1]} : vector<8x96xf32> to vector<8x32xf32>
    %782 = arith.mulf %770, %781 : vector<8x32xf32>
    %783 = arith.addf %780, %782 : vector<8x32xf32>
    %784 = math.tanh %783 : vector<8x32xf32>
    %785 = vector.extract_strided_slice %756 {offsets = [0, 0], sizes = [8, 32], strides = [1, 1]} : vector<8x64xf32> to vector<8x32xf32>
    %cst_147 = arith.constant 1.000000e+00 : f32
    %786 = vector.broadcast %cst_147 : f32 to vector<8x32xf32>
    %787 = arith.subf %786, %779 : vector<8x32xf32>
    %788 = arith.mulf %787, %784 : vector<8x32xf32>
    %789 = arith.mulf %779, %785 : vector<8x32xf32>
    %790 = arith.addf %788, %789 : vector<8x32xf32>
    %791 = vector.extract_strided_slice %555 {offsets = [32, 96], sizes = [8, 96], strides = [1, 1]} : vector<64x192xf32> to vector<8x96xf32>
    %792 = vector.extract_strided_slice %759 {offsets = [0, 96], sizes = [8, 96], strides = [1, 1]} : vector<8x192xf32> to vector<8x96xf32>
    %793 = vector.extract_strided_slice %791 {offsets = [0, 0], sizes = [8, 32], strides = [1, 1]} : vector<8x96xf32> to vector<8x32xf32>
    %794 = vector.extract_strided_slice %792 {offsets = [0, 0], sizes = [8, 32], strides = [1, 1]} : vector<8x96xf32> to vector<8x32xf32>
    %795 = arith.addf %793, %794 : vector<8x32xf32>
    %cst_148 = arith.constant 0.000000e+00 : f32
    %796 = vector.broadcast %cst_148 : f32 to vector<8x32xf32>
    %797 = arith.subf %796, %795 : vector<8x32xf32>
    %798 = math.exp %797 : vector<8x32xf32>
    %cst_149 = arith.constant 1.000000e+00 : f32
    %799 = vector.broadcast %cst_149 : f32 to vector<8x32xf32>
    %800 = arith.addf %799, %798 : vector<8x32xf32>
    %801 = tpu.reciprocal %800 {approx = true} : vector<8x32xf32> -> vector<8x32xf32>
    %802 = vector.extract_strided_slice %791 {offsets = [0, 32], sizes = [8, 32], strides = [1, 1]} : vector<8x96xf32> to vector<8x32xf32>
    %803 = vector.extract_strided_slice %792 {offsets = [0, 32], sizes = [8, 32], strides = [1, 1]} : vector<8x96xf32> to vector<8x32xf32>
    %804 = arith.addf %802, %803 : vector<8x32xf32>
    %cst_150 = arith.constant 0.000000e+00 : f32
    %805 = vector.broadcast %cst_150 : f32 to vector<8x32xf32>
    %806 = arith.subf %805, %804 : vector<8x32xf32>
    %807 = math.exp %806 : vector<8x32xf32>
    %cst_151 = arith.constant 1.000000e+00 : f32
    %808 = vector.broadcast %cst_151 : f32 to vector<8x32xf32>
    %809 = arith.addf %808, %807 : vector<8x32xf32>
    %810 = tpu.reciprocal %809 {approx = true} : vector<8x32xf32> -> vector<8x32xf32>
    %811 = vector.extract_strided_slice %791 {offsets = [0, 64], sizes = [8, 32], strides = [1, 1]} : vector<8x96xf32> to vector<8x32xf32>
    %812 = vector.extract_strided_slice %792 {offsets = [0, 64], sizes = [8, 32], strides = [1, 1]} : vector<8x96xf32> to vector<8x32xf32>
    %813 = arith.mulf %801, %812 : vector<8x32xf32>
    %814 = arith.addf %811, %813 : vector<8x32xf32>
    %815 = math.tanh %814 : vector<8x32xf32>
    %816 = vector.extract_strided_slice %756 {offsets = [0, 32], sizes = [8, 32], strides = [1, 1]} : vector<8x64xf32> to vector<8x32xf32>
    %cst_152 = arith.constant 1.000000e+00 : f32
    %817 = vector.broadcast %cst_152 : f32 to vector<8x32xf32>
    %818 = arith.subf %817, %810 : vector<8x32xf32>
    %819 = arith.mulf %818, %815 : vector<8x32xf32>
    %820 = arith.mulf %810, %816 : vector<8x32xf32>
    %821 = arith.addf %819, %820 : vector<8x32xf32>
    %822 = tpu.concatenate %790, %821 in 1 : vector<8x32xf32>, vector<8x32xf32> -> vector<8x64xf32>
    %cst_153 = arith.constant dense<0.000000e+00> : vector<8x192xf32>
    %823 = tpu.matmul %822, %556, %cst_153 {dimension_numbers = #tpu.dot_dimension_numbers<[1], [0], [0], [1], [0, 0, 1, 1], [], []>} : vector<8x64xf32>, vector<64x192xf32>, vector<8x192xf32> -> vector<8x192xf32>
    %824 = vector.broadcast %557 : vector<1x192xf32> to vector<8x192xf32>
    %825 = arith.addf %823, %824 : vector<8x192xf32>
    %826 = vector.extract_strided_slice %555 {offsets = [32, 0], sizes = [8, 96], strides = [1, 1]} : vector<64x192xf32> to vector<8x96xf32>
    %827 = vector.extract_strided_slice %825 {offsets = [0, 0], sizes = [8, 96], strides = [1, 1]} : vector<8x192xf32> to vector<8x96xf32>
    %828 = vector.extract_strided_slice %826 {offsets = [0, 0], sizes = [8, 32], strides = [1, 1]} : vector<8x96xf32> to vector<8x32xf32>
    %829 = vector.extract_strided_slice %827 {offsets = [0, 0], sizes = [8, 32], strides = [1, 1]} : vector<8x96xf32> to vector<8x32xf32>
    %830 = arith.addf %828, %829 : vector<8x32xf32>
    %cst_154 = arith.constant 0.000000e+00 : f32
    %831 = vector.broadcast %cst_154 : f32 to vector<8x32xf32>
    %832 = arith.subf %831, %830 : vector<8x32xf32>
    %833 = math.exp %832 : vector<8x32xf32>
    %cst_155 = arith.constant 1.000000e+00 : f32
    %834 = vector.broadcast %cst_155 : f32 to vector<8x32xf32>
    %835 = arith.addf %834, %833 : vector<8x32xf32>
    %836 = tpu.reciprocal %835 {approx = true} : vector<8x32xf32> -> vector<8x32xf32>
    %837 = vector.extract_strided_slice %826 {offsets = [0, 32], sizes = [8, 32], strides = [1, 1]} : vector<8x96xf32> to vector<8x32xf32>
    %838 = vector.extract_strided_slice %827 {offsets = [0, 32], sizes = [8, 32], strides = [1, 1]} : vector<8x96xf32> to vector<8x32xf32>
    %839 = arith.addf %837, %838 : vector<8x32xf32>
    %cst_156 = arith.constant 0.000000e+00 : f32
    %840 = vector.broadcast %cst_156 : f32 to vector<8x32xf32>
    %841 = arith.subf %840, %839 : vector<8x32xf32>
    %842 = math.exp %841 : vector<8x32xf32>
    %cst_157 = arith.constant 1.000000e+00 : f32
    %843 = vector.broadcast %cst_157 : f32 to vector<8x32xf32>
    %844 = arith.addf %843, %842 : vector<8x32xf32>
    %845 = tpu.reciprocal %844 {approx = true} : vector<8x32xf32> -> vector<8x32xf32>
    %846 = vector.extract_strided_slice %826 {offsets = [0, 64], sizes = [8, 32], strides = [1, 1]} : vector<8x96xf32> to vector<8x32xf32>
    %847 = vector.extract_strided_slice %827 {offsets = [0, 64], sizes = [8, 32], strides = [1, 1]} : vector<8x96xf32> to vector<8x32xf32>
    %848 = arith.mulf %836, %847 : vector<8x32xf32>
    %849 = arith.addf %846, %848 : vector<8x32xf32>
    %850 = math.tanh %849 : vector<8x32xf32>
    %851 = vector.extract_strided_slice %822 {offsets = [0, 0], sizes = [8, 32], strides = [1, 1]} : vector<8x64xf32> to vector<8x32xf32>
    %cst_158 = arith.constant 1.000000e+00 : f32
    %852 = vector.broadcast %cst_158 : f32 to vector<8x32xf32>
    %853 = arith.subf %852, %845 : vector<8x32xf32>
    %854 = arith.mulf %853, %850 : vector<8x32xf32>
    %855 = arith.mulf %845, %851 : vector<8x32xf32>
    %856 = arith.addf %854, %855 : vector<8x32xf32>
    %857 = vector.extract_strided_slice %555 {offsets = [24, 96], sizes = [8, 96], strides = [1, 1]} : vector<64x192xf32> to vector<8x96xf32>
    %858 = vector.extract_strided_slice %825 {offsets = [0, 96], sizes = [8, 96], strides = [1, 1]} : vector<8x192xf32> to vector<8x96xf32>
    %859 = vector.extract_strided_slice %857 {offsets = [0, 0], sizes = [8, 32], strides = [1, 1]} : vector<8x96xf32> to vector<8x32xf32>
    %860 = vector.extract_strided_slice %858 {offsets = [0, 0], sizes = [8, 32], strides = [1, 1]} : vector<8x96xf32> to vector<8x32xf32>
    %861 = arith.addf %859, %860 : vector<8x32xf32>
    %cst_159 = arith.constant 0.000000e+00 : f32
    %862 = vector.broadcast %cst_159 : f32 to vector<8x32xf32>
    %863 = arith.subf %862, %861 : vector<8x32xf32>
    %864 = math.exp %863 : vector<8x32xf32>
    %cst_160 = arith.constant 1.000000e+00 : f32
    %865 = vector.broadcast %cst_160 : f32 to vector<8x32xf32>
    %866 = arith.addf %865, %864 : vector<8x32xf32>
    %867 = tpu.reciprocal %866 {approx = true} : vector<8x32xf32> -> vector<8x32xf32>
    %868 = vector.extract_strided_slice %857 {offsets = [0, 32], sizes = [8, 32], strides = [1, 1]} : vector<8x96xf32> to vector<8x32xf32>
    %869 = vector.extract_strided_slice %858 {offsets = [0, 32], sizes = [8, 32], strides = [1, 1]} : vector<8x96xf32> to vector<8x32xf32>
    %870 = arith.addf %868, %869 : vector<8x32xf32>
    %cst_161 = arith.constant 0.000000e+00 : f32
    %871 = vector.broadcast %cst_161 : f32 to vector<8x32xf32>
    %872 = arith.subf %871, %870 : vector<8x32xf32>
    %873 = math.exp %872 : vector<8x32xf32>
    %cst_162 = arith.constant 1.000000e+00 : f32
    %874 = vector.broadcast %cst_162 : f32 to vector<8x32xf32>
    %875 = arith.addf %874, %873 : vector<8x32xf32>
    %876 = tpu.reciprocal %875 {approx = true} : vector<8x32xf32> -> vector<8x32xf32>
    %877 = vector.extract_strided_slice %857 {offsets = [0, 64], sizes = [8, 32], strides = [1, 1]} : vector<8x96xf32> to vector<8x32xf32>
    %878 = vector.extract_strided_slice %858 {offsets = [0, 64], sizes = [8, 32], strides = [1, 1]} : vector<8x96xf32> to vector<8x32xf32>
    %879 = arith.mulf %867, %878 : vector<8x32xf32>
    %880 = arith.addf %877, %879 : vector<8x32xf32>
    %881 = math.tanh %880 : vector<8x32xf32>
    %882 = vector.extract_strided_slice %822 {offsets = [0, 32], sizes = [8, 32], strides = [1, 1]} : vector<8x64xf32> to vector<8x32xf32>
    %cst_163 = arith.constant 1.000000e+00 : f32
    %883 = vector.broadcast %cst_163 : f32 to vector<8x32xf32>
    %884 = arith.subf %883, %876 : vector<8x32xf32>
    %885 = arith.mulf %884, %881 : vector<8x32xf32>
    %886 = arith.mulf %876, %882 : vector<8x32xf32>
    %887 = arith.addf %885, %886 : vector<8x32xf32>
    %888 = tpu.concatenate %856, %887 in 1 : vector<8x32xf32>, vector<8x32xf32> -> vector<8x64xf32>
    %cst_164 = arith.constant dense<0.000000e+00> : vector<8x192xf32>
    %889 = tpu.matmul %888, %556, %cst_164 {dimension_numbers = #tpu.dot_dimension_numbers<[1], [0], [0], [1], [0, 0, 1, 1], [], []>} : vector<8x64xf32>, vector<64x192xf32>, vector<8x192xf32> -> vector<8x192xf32>
    %890 = vector.broadcast %557 : vector<1x192xf32> to vector<8x192xf32>
    %891 = arith.addf %889, %890 : vector<8x192xf32>
    %892 = vector.extract_strided_slice %555 {offsets = [40, 0], sizes = [8, 96], strides = [1, 1]} : vector<64x192xf32> to vector<8x96xf32>
    %893 = vector.extract_strided_slice %891 {offsets = [0, 0], sizes = [8, 96], strides = [1, 1]} : vector<8x192xf32> to vector<8x96xf32>
    %894 = vector.extract_strided_slice %892 {offsets = [0, 0], sizes = [8, 32], strides = [1, 1]} : vector<8x96xf32> to vector<8x32xf32>
    %895 = vector.extract_strided_slice %893 {offsets = [0, 0], sizes = [8, 32], strides = [1, 1]} : vector<8x96xf32> to vector<8x32xf32>
    %896 = arith.addf %894, %895 : vector<8x32xf32>
    %cst_165 = arith.constant 0.000000e+00 : f32
    %897 = vector.broadcast %cst_165 : f32 to vector<8x32xf32>
    %898 = arith.subf %897, %896 : vector<8x32xf32>
    %899 = math.exp %898 : vector<8x32xf32>
    %cst_166 = arith.constant 1.000000e+00 : f32
    %900 = vector.broadcast %cst_166 : f32 to vector<8x32xf32>
    %901 = arith.addf %900, %899 : vector<8x32xf32>
    %902 = tpu.reciprocal %901 {approx = true} : vector<8x32xf32> -> vector<8x32xf32>
    %903 = vector.extract_strided_slice %892 {offsets = [0, 32], sizes = [8, 32], strides = [1, 1]} : vector<8x96xf32> to vector<8x32xf32>
    %904 = vector.extract_strided_slice %893 {offsets = [0, 32], sizes = [8, 32], strides = [1, 1]} : vector<8x96xf32> to vector<8x32xf32>
    %905 = arith.addf %903, %904 : vector<8x32xf32>
    %cst_167 = arith.constant 0.000000e+00 : f32
    %906 = vector.broadcast %cst_167 : f32 to vector<8x32xf32>
    %907 = arith.subf %906, %905 : vector<8x32xf32>
    %908 = math.exp %907 : vector<8x32xf32>
    %cst_168 = arith.constant 1.000000e+00 : f32
    %909 = vector.broadcast %cst_168 : f32 to vector<8x32xf32>
    %910 = arith.addf %909, %908 : vector<8x32xf32>
    %911 = tpu.reciprocal %910 {approx = true} : vector<8x32xf32> -> vector<8x32xf32>
    %912 = vector.extract_strided_slice %892 {offsets = [0, 64], sizes = [8, 32], strides = [1, 1]} : vector<8x96xf32> to vector<8x32xf32>
    %913 = vector.extract_strided_slice %893 {offsets = [0, 64], sizes = [8, 32], strides = [1, 1]} : vector<8x96xf32> to vector<8x32xf32>
    %914 = arith.mulf %902, %913 : vector<8x32xf32>
    %915 = arith.addf %912, %914 : vector<8x32xf32>
    %916 = math.tanh %915 : vector<8x32xf32>
    %917 = vector.extract_strided_slice %888 {offsets = [0, 0], sizes = [8, 32], strides = [1, 1]} : vector<8x64xf32> to vector<8x32xf32>
    %cst_169 = arith.constant 1.000000e+00 : f32
    %918 = vector.broadcast %cst_169 : f32 to vector<8x32xf32>
    %919 = arith.subf %918, %911 : vector<8x32xf32>
    %920 = arith.mulf %919, %916 : vector<8x32xf32>
    %921 = arith.mulf %911, %917 : vector<8x32xf32>
    %922 = arith.addf %920, %921 : vector<8x32xf32>
    %923 = vector.extract_strided_slice %555 {offsets = [16, 96], sizes = [8, 96], strides = [1, 1]} : vector<64x192xf32> to vector<8x96xf32>
    %924 = vector.extract_strided_slice %891 {offsets = [0, 96], sizes = [8, 96], strides = [1, 1]} : vector<8x192xf32> to vector<8x96xf32>
    %925 = vector.extract_strided_slice %923 {offsets = [0, 0], sizes = [8, 32], strides = [1, 1]} : vector<8x96xf32> to vector<8x32xf32>
    %926 = vector.extract_strided_slice %924 {offsets = [0, 0], sizes = [8, 32], strides = [1, 1]} : vector<8x96xf32> to vector<8x32xf32>
    %927 = arith.addf %925, %926 : vector<8x32xf32>
    %cst_170 = arith.constant 0.000000e+00 : f32
    %928 = vector.broadcast %cst_170 : f32 to vector<8x32xf32>
    %929 = arith.subf %928, %927 : vector<8x32xf32>
    %930 = math.exp %929 : vector<8x32xf32>
    %cst_171 = arith.constant 1.000000e+00 : f32
    %931 = vector.broadcast %cst_171 : f32 to vector<8x32xf32>
    %932 = arith.addf %931, %930 : vector<8x32xf32>
    %933 = tpu.reciprocal %932 {approx = true} : vector<8x32xf32> -> vector<8x32xf32>
    %934 = vector.extract_strided_slice %923 {offsets = [0, 32], sizes = [8, 32], strides = [1, 1]} : vector<8x96xf32> to vector<8x32xf32>
    %935 = vector.extract_strided_slice %924 {offsets = [0, 32], sizes = [8, 32], strides = [1, 1]} : vector<8x96xf32> to vector<8x32xf32>
    %936 = arith.addf %934, %935 : vector<8x32xf32>
    %cst_172 = arith.constant 0.000000e+00 : f32
    %937 = vector.broadcast %cst_172 : f32 to vector<8x32xf32>
    %938 = arith.subf %937, %936 : vector<8x32xf32>
    %939 = math.exp %938 : vector<8x32xf32>
    %cst_173 = arith.constant 1.000000e+00 : f32
    %940 = vector.broadcast %cst_173 : f32 to vector<8x32xf32>
    %941 = arith.addf %940, %939 : vector<8x32xf32>
    %942 = tpu.reciprocal %941 {approx = true} : vector<8x32xf32> -> vector<8x32xf32>
    %943 = vector.extract_strided_slice %923 {offsets = [0, 64], sizes = [8, 32], strides = [1, 1]} : vector<8x96xf32> to vector<8x32xf32>
    %944 = vector.extract_strided_slice %924 {offsets = [0, 64], sizes = [8, 32], strides = [1, 1]} : vector<8x96xf32> to vector<8x32xf32>
    %945 = arith.mulf %933, %944 : vector<8x32xf32>
    %946 = arith.addf %943, %945 : vector<8x32xf32>
    %947 = math.tanh %946 : vector<8x32xf32>
    %948 = vector.extract_strided_slice %888 {offsets = [0, 32], sizes = [8, 32], strides = [1, 1]} : vector<8x64xf32> to vector<8x32xf32>
    %cst_174 = arith.constant 1.000000e+00 : f32
    %949 = vector.broadcast %cst_174 : f32 to vector<8x32xf32>
    %950 = arith.subf %949, %942 : vector<8x32xf32>
    %951 = arith.mulf %950, %947 : vector<8x32xf32>
    %952 = arith.mulf %942, %948 : vector<8x32xf32>
    %953 = arith.addf %951, %952 : vector<8x32xf32>
    %954 = tpu.concatenate %922, %953 in 1 : vector<8x32xf32>, vector<8x32xf32> -> vector<8x64xf32>
    %cst_175 = arith.constant dense<0.000000e+00> : vector<8x192xf32>
    %955 = tpu.matmul %954, %556, %cst_175 {dimension_numbers = #tpu.dot_dimension_numbers<[1], [0], [0], [1], [0, 0, 1, 1], [], []>} : vector<8x64xf32>, vector<64x192xf32>, vector<8x192xf32> -> vector<8x192xf32>
    %956 = vector.broadcast %557 : vector<1x192xf32> to vector<8x192xf32>
    %957 = arith.addf %955, %956 : vector<8x192xf32>
    %958 = vector.extract_strided_slice %555 {offsets = [48, 0], sizes = [8, 96], strides = [1, 1]} : vector<64x192xf32> to vector<8x96xf32>
    %959 = vector.extract_strided_slice %957 {offsets = [0, 0], sizes = [8, 96], strides = [1, 1]} : vector<8x192xf32> to vector<8x96xf32>
    %960 = vector.extract_strided_slice %958 {offsets = [0, 0], sizes = [8, 32], strides = [1, 1]} : vector<8x96xf32> to vector<8x32xf32>
    %961 = vector.extract_strided_slice %959 {offsets = [0, 0], sizes = [8, 32], strides = [1, 1]} : vector<8x96xf32> to vector<8x32xf32>
    %962 = arith.addf %960, %961 : vector<8x32xf32>
    %cst_176 = arith.constant 0.000000e+00 : f32
    %963 = vector.broadcast %cst_176 : f32 to vector<8x32xf32>
    %964 = arith.subf %963, %962 : vector<8x32xf32>
    %965 = math.exp %964 : vector<8x32xf32>
    %cst_177 = arith.constant 1.000000e+00 : f32
    %966 = vector.broadcast %cst_177 : f32 to vector<8x32xf32>
    %967 = arith.addf %966, %965 : vector<8x32xf32>
    %968 = tpu.reciprocal %967 {approx = true} : vector<8x32xf32> -> vector<8x32xf32>
    %969 = vector.extract_strided_slice %958 {offsets = [0, 32], sizes = [8, 32], strides = [1, 1]} : vector<8x96xf32> to vector<8x32xf32>
    %970 = vector.extract_strided_slice %959 {offsets = [0, 32], sizes = [8, 32], strides = [1, 1]} : vector<8x96xf32> to vector<8x32xf32>
    %971 = arith.addf %969, %970 : vector<8x32xf32>
    %cst_178 = arith.constant 0.000000e+00 : f32
    %972 = vector.broadcast %cst_178 : f32 to vector<8x32xf32>
    %973 = arith.subf %972, %971 : vector<8x32xf32>
    %974 = math.exp %973 : vector<8x32xf32>
    %cst_179 = arith.constant 1.000000e+00 : f32
    %975 = vector.broadcast %cst_179 : f32 to vector<8x32xf32>
    %976 = arith.addf %975, %974 : vector<8x32xf32>
    %977 = tpu.reciprocal %976 {approx = true} : vector<8x32xf32> -> vector<8x32xf32>
    %978 = vector.extract_strided_slice %958 {offsets = [0, 64], sizes = [8, 32], strides = [1, 1]} : vector<8x96xf32> to vector<8x32xf32>
    %979 = vector.extract_strided_slice %959 {offsets = [0, 64], sizes = [8, 32], strides = [1, 1]} : vector<8x96xf32> to vector<8x32xf32>
    %980 = arith.mulf %968, %979 : vector<8x32xf32>
    %981 = arith.addf %978, %980 : vector<8x32xf32>
    %982 = math.tanh %981 : vector<8x32xf32>
    %983 = vector.extract_strided_slice %954 {offsets = [0, 0], sizes = [8, 32], strides = [1, 1]} : vector<8x64xf32> to vector<8x32xf32>
    %cst_180 = arith.constant 1.000000e+00 : f32
    %984 = vector.broadcast %cst_180 : f32 to vector<8x32xf32>
    %985 = arith.subf %984, %977 : vector<8x32xf32>
    %986 = arith.mulf %985, %982 : vector<8x32xf32>
    %987 = arith.mulf %977, %983 : vector<8x32xf32>
    %988 = arith.addf %986, %987 : vector<8x32xf32>
    %989 = vector.extract_strided_slice %555 {offsets = [8, 96], sizes = [8, 96], strides = [1, 1]} : vector<64x192xf32> to vector<8x96xf32>
    %990 = vector.extract_strided_slice %957 {offsets = [0, 96], sizes = [8, 96], strides = [1, 1]} : vector<8x192xf32> to vector<8x96xf32>
    %991 = vector.extract_strided_slice %989 {offsets = [0, 0], sizes = [8, 32], strides = [1, 1]} : vector<8x96xf32> to vector<8x32xf32>
    %992 = vector.extract_strided_slice %990 {offsets = [0, 0], sizes = [8, 32], strides = [1, 1]} : vector<8x96xf32> to vector<8x32xf32>
    %993 = arith.addf %991, %992 : vector<8x32xf32>
    %cst_181 = arith.constant 0.000000e+00 : f32
    %994 = vector.broadcast %cst_181 : f32 to vector<8x32xf32>
    %995 = arith.subf %994, %993 : vector<8x32xf32>
    %996 = math.exp %995 : vector<8x32xf32>
    %cst_182 = arith.constant 1.000000e+00 : f32
    %997 = vector.broadcast %cst_182 : f32 to vector<8x32xf32>
    %998 = arith.addf %997, %996 : vector<8x32xf32>
    %999 = tpu.reciprocal %998 {approx = true} : vector<8x32xf32> -> vector<8x32xf32>
    %1000 = vector.extract_strided_slice %989 {offsets = [0, 32], sizes = [8, 32], strides = [1, 1]} : vector<8x96xf32> to vector<8x32xf32>
    %1001 = vector.extract_strided_slice %990 {offsets = [0, 32], sizes = [8, 32], strides = [1, 1]} : vector<8x96xf32> to vector<8x32xf32>
    %1002 = arith.addf %1000, %1001 : vector<8x32xf32>
    %cst_183 = arith.constant 0.000000e+00 : f32
    %1003 = vector.broadcast %cst_183 : f32 to vector<8x32xf32>
    %1004 = arith.subf %1003, %1002 : vector<8x32xf32>
    %1005 = math.exp %1004 : vector<8x32xf32>
    %cst_184 = arith.constant 1.000000e+00 : f32
    %1006 = vector.broadcast %cst_184 : f32 to vector<8x32xf32>
    %1007 = arith.addf %1006, %1005 : vector<8x32xf32>
    %1008 = tpu.reciprocal %1007 {approx = true} : vector<8x32xf32> -> vector<8x32xf32>
    %1009 = vector.extract_strided_slice %989 {offsets = [0, 64], sizes = [8, 32], strides = [1, 1]} : vector<8x96xf32> to vector<8x32xf32>
    %1010 = vector.extract_strided_slice %990 {offsets = [0, 64], sizes = [8, 32], strides = [1, 1]} : vector<8x96xf32> to vector<8x32xf32>
    %1011 = arith.mulf %999, %1010 : vector<8x32xf32>
    %1012 = arith.addf %1009, %1011 : vector<8x32xf32>
    %1013 = math.tanh %1012 : vector<8x32xf32>
    %1014 = vector.extract_strided_slice %954 {offsets = [0, 32], sizes = [8, 32], strides = [1, 1]} : vector<8x64xf32> to vector<8x32xf32>
    %cst_185 = arith.constant 1.000000e+00 : f32
    %1015 = vector.broadcast %cst_185 : f32 to vector<8x32xf32>
    %1016 = arith.subf %1015, %1008 : vector<8x32xf32>
    %1017 = arith.mulf %1016, %1013 : vector<8x32xf32>
    %1018 = arith.mulf %1008, %1014 : vector<8x32xf32>
    %1019 = arith.addf %1017, %1018 : vector<8x32xf32>
    %1020 = tpu.concatenate %988, %1019 in 1 : vector<8x32xf32>, vector<8x32xf32> -> vector<8x64xf32>
    %cst_186 = arith.constant dense<0.000000e+00> : vector<8x192xf32>
    %1021 = tpu.matmul %1020, %556, %cst_186 {dimension_numbers = #tpu.dot_dimension_numbers<[1], [0], [0], [1], [0, 0, 1, 1], [], []>} : vector<8x64xf32>, vector<64x192xf32>, vector<8x192xf32> -> vector<8x192xf32>
    %1022 = vector.broadcast %557 : vector<1x192xf32> to vector<8x192xf32>
    %1023 = arith.addf %1021, %1022 : vector<8x192xf32>
    %1024 = vector.extract_strided_slice %555 {offsets = [56, 0], sizes = [8, 96], strides = [1, 1]} : vector<64x192xf32> to vector<8x96xf32>
    %1025 = vector.extract_strided_slice %1023 {offsets = [0, 0], sizes = [8, 96], strides = [1, 1]} : vector<8x192xf32> to vector<8x96xf32>
    %1026 = vector.extract_strided_slice %1024 {offsets = [0, 0], sizes = [8, 32], strides = [1, 1]} : vector<8x96xf32> to vector<8x32xf32>
    %1027 = vector.extract_strided_slice %1025 {offsets = [0, 0], sizes = [8, 32], strides = [1, 1]} : vector<8x96xf32> to vector<8x32xf32>
    %1028 = arith.addf %1026, %1027 : vector<8x32xf32>
    %cst_187 = arith.constant 0.000000e+00 : f32
    %1029 = vector.broadcast %cst_187 : f32 to vector<8x32xf32>
    %1030 = arith.subf %1029, %1028 : vector<8x32xf32>
    %1031 = math.exp %1030 : vector<8x32xf32>
    %cst_188 = arith.constant 1.000000e+00 : f32
    %1032 = vector.broadcast %cst_188 : f32 to vector<8x32xf32>
    %1033 = arith.addf %1032, %1031 : vector<8x32xf32>
    %1034 = tpu.reciprocal %1033 {approx = true} : vector<8x32xf32> -> vector<8x32xf32>
    %1035 = vector.extract_strided_slice %1024 {offsets = [0, 32], sizes = [8, 32], strides = [1, 1]} : vector<8x96xf32> to vector<8x32xf32>
    %1036 = vector.extract_strided_slice %1025 {offsets = [0, 32], sizes = [8, 32], strides = [1, 1]} : vector<8x96xf32> to vector<8x32xf32>
    %1037 = arith.addf %1035, %1036 : vector<8x32xf32>
    %cst_189 = arith.constant 0.000000e+00 : f32
    %1038 = vector.broadcast %cst_189 : f32 to vector<8x32xf32>
    %1039 = arith.subf %1038, %1037 : vector<8x32xf32>
    %1040 = math.exp %1039 : vector<8x32xf32>
    %cst_190 = arith.constant 1.000000e+00 : f32
    %1041 = vector.broadcast %cst_190 : f32 to vector<8x32xf32>
    %1042 = arith.addf %1041, %1040 : vector<8x32xf32>
    %1043 = tpu.reciprocal %1042 {approx = true} : vector<8x32xf32> -> vector<8x32xf32>
    %1044 = vector.extract_strided_slice %1024 {offsets = [0, 64], sizes = [8, 32], strides = [1, 1]} : vector<8x96xf32> to vector<8x32xf32>
    %1045 = vector.extract_strided_slice %1025 {offsets = [0, 64], sizes = [8, 32], strides = [1, 1]} : vector<8x96xf32> to vector<8x32xf32>
    %1046 = arith.mulf %1034, %1045 : vector<8x32xf32>
    %1047 = arith.addf %1044, %1046 : vector<8x32xf32>
    %1048 = math.tanh %1047 : vector<8x32xf32>
    %1049 = vector.extract_strided_slice %1020 {offsets = [0, 0], sizes = [8, 32], strides = [1, 1]} : vector<8x64xf32> to vector<8x32xf32>
    %cst_191 = arith.constant 1.000000e+00 : f32
    %1050 = vector.broadcast %cst_191 : f32 to vector<8x32xf32>
    %1051 = arith.subf %1050, %1043 : vector<8x32xf32>
    %1052 = arith.mulf %1051, %1048 : vector<8x32xf32>
    %1053 = arith.mulf %1043, %1049 : vector<8x32xf32>
    %1054 = arith.addf %1052, %1053 : vector<8x32xf32>
    %1055 = vector.extract_strided_slice %555 {offsets = [0, 96], sizes = [8, 96], strides = [1, 1]} : vector<64x192xf32> to vector<8x96xf32>
    %1056 = vector.extract_strided_slice %1023 {offsets = [0, 96], sizes = [8, 96], strides = [1, 1]} : vector<8x192xf32> to vector<8x96xf32>
    %1057 = vector.extract_strided_slice %1055 {offsets = [0, 0], sizes = [8, 32], strides = [1, 1]} : vector<8x96xf32> to vector<8x32xf32>
    %1058 = vector.extract_strided_slice %1056 {offsets = [0, 0], sizes = [8, 32], strides = [1, 1]} : vector<8x96xf32> to vector<8x32xf32>
    %1059 = arith.addf %1057, %1058 : vector<8x32xf32>
    %cst_192 = arith.constant 0.000000e+00 : f32
    %1060 = vector.broadcast %cst_192 : f32 to vector<8x32xf32>
    %1061 = arith.subf %1060, %1059 : vector<8x32xf32>
    %1062 = math.exp %1061 : vector<8x32xf32>
    %cst_193 = arith.constant 1.000000e+00 : f32
    %1063 = vector.broadcast %cst_193 : f32 to vector<8x32xf32>
    %1064 = arith.addf %1063, %1062 : vector<8x32xf32>
    %1065 = tpu.reciprocal %1064 {approx = true} : vector<8x32xf32> -> vector<8x32xf32>
    %1066 = vector.extract_strided_slice %1055 {offsets = [0, 32], sizes = [8, 32], strides = [1, 1]} : vector<8x96xf32> to vector<8x32xf32>
    %1067 = vector.extract_strided_slice %1056 {offsets = [0, 32], sizes = [8, 32], strides = [1, 1]} : vector<8x96xf32> to vector<8x32xf32>
    %1068 = arith.addf %1066, %1067 : vector<8x32xf32>
    %cst_194 = arith.constant 0.000000e+00 : f32
    %1069 = vector.broadcast %cst_194 : f32 to vector<8x32xf32>
    %1070 = arith.subf %1069, %1068 : vector<8x32xf32>
    %1071 = math.exp %1070 : vector<8x32xf32>
    %cst_195 = arith.constant 1.000000e+00 : f32
    %1072 = vector.broadcast %cst_195 : f32 to vector<8x32xf32>
    %1073 = arith.addf %1072, %1071 : vector<8x32xf32>
    %1074 = tpu.reciprocal %1073 {approx = true} : vector<8x32xf32> -> vector<8x32xf32>
    %1075 = vector.extract_strided_slice %1055 {offsets = [0, 64], sizes = [8, 32], strides = [1, 1]} : vector<8x96xf32> to vector<8x32xf32>
    %1076 = vector.extract_strided_slice %1056 {offsets = [0, 64], sizes = [8, 32], strides = [1, 1]} : vector<8x96xf32> to vector<8x32xf32>
    %1077 = arith.mulf %1065, %1076 : vector<8x32xf32>
    %1078 = arith.addf %1075, %1077 : vector<8x32xf32>
    %1079 = math.tanh %1078 : vector<8x32xf32>
    %1080 = vector.extract_strided_slice %1020 {offsets = [0, 32], sizes = [8, 32], strides = [1, 1]} : vector<8x64xf32> to vector<8x32xf32>
    %cst_196 = arith.constant 1.000000e+00 : f32
    %1081 = vector.broadcast %cst_196 : f32 to vector<8x32xf32>
    %1082 = arith.subf %1081, %1074 : vector<8x32xf32>
    %1083 = arith.mulf %1082, %1079 : vector<8x32xf32>
    %1084 = arith.mulf %1074, %1080 : vector<8x32xf32>
    %1085 = arith.addf %1083, %1084 : vector<8x32xf32>
    %1086 = tpu.concatenate %1054, %1085 in 1 : vector<8x32xf32>, vector<8x32xf32> -> vector<8x64xf32>
    %1087 = vector.extract_strided_slice %1086 {offsets = [0, 0], sizes = [8, 32], strides = [1, 1]} : vector<8x64xf32> to vector<8x32xf32>
    %1088 = arith.addf %541, %1087 : vector<8x32xf32>
    %1089 = vector.extract_strided_slice %1086 {offsets = [0, 32], sizes = [8, 32], strides = [1, 1]} : vector<8x64xf32> to vector<8x32xf32>
    %1090 = arith.addf %1088, %1089 : vector<8x32xf32>
    %1091 = vector.extract_strided_slice %1090 {offsets = [0, 0], sizes = [2, 32], strides = [1, 1]} : vector<8x32xf32> to vector<2x32xf32>
    %1092 = vector.extract_strided_slice %1090 {offsets = [2, 0], sizes = [2, 32], strides = [1, 1]} : vector<8x32xf32> to vector<2x32xf32>
    %c0_197 = arith.constant 0 : index
    %c0_198 = arith.constant 0 : index
    %1093 = vector.load %arg9[%c0_197, %c0_198] : memref<32x96xf32, #tpu.memory_space<vmem>>, vector<32x96xf32>
    %cst_199 = arith.constant dense<0.000000e+00> : vector<2x96xf32>
    %1094 = tpu.matmul %1091, %1093, %cst_199 {dimension_numbers = #tpu.dot_dimension_numbers<[1], [0], [0], [1], [0, 0, 1, 1], [], []>} : vector<2x32xf32>, vector<32x96xf32>, vector<2x96xf32> -> vector<2x96xf32>
    %c0_200 = arith.constant 0 : index
    %c0_201 = arith.constant 0 : index
    %1095 = vector.load %arg10[%c0_200, %c0_201] : memref<32x96xf32, #tpu.memory_space<vmem>>, vector<32x96xf32>
    %cst_202 = arith.constant dense<0.000000e+00> : vector<2x96xf32>
    %1096 = tpu.matmul %1092, %1095, %cst_202 {dimension_numbers = #tpu.dot_dimension_numbers<[1], [0], [0], [1], [0, 0, 1, 1], [], []>} : vector<2x32xf32>, vector<32x96xf32>, vector<2x96xf32> -> vector<2x96xf32>
    %1097 = arith.addf %1094, %1096 : vector<2x96xf32>
    %c0_203 = arith.constant 0 : index
    %c0_204 = arith.constant 0 : index
    %1098 = vector.load %arg11[%c0_203, %c0_204] : memref<1x96xf32, #tpu.memory_space<vmem>>, vector<1x96xf32>
    %1099 = vector.broadcast %1098 : vector<1x96xf32> to vector<2x96xf32>
    %1100 = arith.addf %1097, %1099 : vector<2x96xf32>
    %c0_205 = arith.constant 0 : index
    %c0_206 = arith.constant 0 : index
    %1101 = vector.load %arg12[%c0_205, %c0_206] : memref<96x28xf32, #tpu.memory_space<vmem>>, vector<96x28xf32>
    %cst_207 = arith.constant dense<0.000000e+00> : vector<2x28xf32>
    %1102 = tpu.matmul %1100, %1101, %cst_207 {dimension_numbers = #tpu.dot_dimension_numbers<[1], [0], [0], [1], [0, 0, 1, 1], [], []>} : vector<2x96xf32>, vector<96x28xf32>, vector<2x28xf32> -> vector<2x28xf32>
    %c0_208 = arith.constant 0 : index
    %c0_209 = arith.constant 0 : index
    %1103 = vector.load %arg13[%c0_208, %c0_209] : memref<1x28xf32, #tpu.memory_space<vmem>>, vector<1x28xf32>
    %1104 = vector.broadcast %1103 : vector<1x28xf32> to vector<2x28xf32>
    %1105 = arith.addf %1102, %1104 : vector<2x28xf32>
    %1106 = math.tanh %1105 : vector<2x28xf32>
    %c0_210 = arith.constant 0 : index
    %c0_211 = arith.constant 0 : index
    %1107 = vector.load %arg14[%c0_210, %c0_211] : memref<28x1xf32, #tpu.memory_space<vmem>>, vector<28x1xf32>
    %cst_212 = arith.constant dense<0.000000e+00> : vector<2x1xf32>
    %1108 = tpu.matmul %1106, %1107, %cst_212 {dimension_numbers = #tpu.dot_dimension_numbers<[1], [0], [0], [1], [0, 0, 1, 1], [], []>} : vector<2x28xf32>, vector<28x1xf32>, vector<2x1xf32> -> vector<2x1xf32>
    %c0_213 = arith.constant 0 : index
    %c0_214 = arith.constant 0 : index
    %1109 = vector.load %arg15[%c0_213, %c0_214] : memref<1x1xf32, #tpu.memory_space<vmem>>, vector<1x1xf32>
    %1110 = vector.broadcast %1109 : vector<1x1xf32> to vector<2x1xf32>
    %1111 = arith.addf %1108, %1110 : vector<2x1xf32>
    %cst_215 = arith.constant 0.000000e+00 : f32
    %1112 = vector.broadcast %cst_215 : f32 to vector<2x1xf32>
    %1113 = arith.subf %1112, %1111 : vector<2x1xf32>
    %1114 = math.exp %1113 : vector<2x1xf32>
    %cst_216 = arith.constant 1.000000e+00 : f32
    %1115 = vector.broadcast %cst_216 : f32 to vector<2x1xf32>
    %1116 = arith.addf %1115, %1114 : vector<2x1xf32>
    %1117 = tpu.reciprocal %1116 {approx = true} : vector<2x1xf32> -> vector<2x1xf32>
    %c0_217 = arith.constant 0 : index
    %c0_218 = arith.constant 0 : index
    %1118 = vector.load %arg16[%c0_217, %c0_218] : memref<2x1xf32, #tpu.memory_space<vmem>>, vector<2x1xf32>
    tpu.vector_store %arg16[%c0_217, %c0_218], %1117 {strides = array<i32>} : memref<2x1xf32, #tpu.memory_space<vmem>>, vector<2x1xf32>,
    return
  }
}

</mosaic_0001>

<llo_original>
// kernel: forward.1
$region0: #{forward.1}
  #allocation0 [shape = 'u32[]', space=smem, size = 0x4, offset = 0x4, fixed_abs, tag = 'smem constant byte address 0x4 - core index']
  #allocation1 [shape = 'u32[144,128]{1,0:T(1,128)}', space=vmem, size = 0x12000, scoped, tag = 'internal scratch']
  #allocation2 [shape = 'f32[1,1]{1,0:T(1,128)S(1)}', space=vmem, size = 0x200, scoped, tag = 'scoped memory for forward.1']
  %s0 = inlined_call_operand.vmem [shape: f32[64,16], index: 0, kind: input, shape index: {}]
  %s1 = inlined_call_operand.hbm [shape: f32[16,192], index: 1, kind: input, shape index: {}]
  %s2 = inlined_call_operand.vmem [shape: f32[1,192], index: 2, kind: input, shape index: {}]
  %s3 = inlined_call_operand.hbm [shape: f32[64,192], index: 3, kind: input, shape index: {}]
  %s4 = inlined_call_operand.vmem [shape: f32[1,192], index: 4, kind: input, shape index: {}]
  %s5 = inlined_call_operand.hbm [shape: f32[64,192], index: 5, kind: input, shape index: {}]
  %s6 = inlined_call_operand.vmem [shape: f32[1,192], index: 6, kind: input, shape index: {}]
  %s7 = inlined_call_operand.vmem [shape: f32[64,192], index: 7, kind: input, shape index: {}]
  %s8 = inlined_call_operand.vmem [shape: f32[1,192], index: 8, kind: input, shape index: {}]
  %s9 = inlined_call_operand.hbm [shape: f32[32,96], index: 9, kind: input, shape index: {}]
  %s10 = inlined_call_operand.hbm [shape: f32[32,96], index: 10, kind: input, shape index: {}]
  %s11 = inlined_call_operand.vmem [shape: f32[1,96], index: 11, kind: input, shape index: {}]
  %s12 = inlined_call_operand.vmem [shape: f32[96,28], index: 12, kind: input, shape index: {}]
  %s13 = inlined_call_operand.vmem [shape: f32[1,28], index: 13, kind: input, shape index: {}]
  %s14 = inlined_call_operand.hbm [shape: f32[28,1], index: 14, kind: input, shape index: {}]
  %s15 = inlined_call_operand.<no memory space> [shape: f32[1,1], index: 15, kind: input, shape index: {}]
  %s16 = inlined_call_operand.vmem [shape: f32[2,1], index: 16, kind: output, shape index: {}]
  %s17 = sld [smem:[#allocation0]]
  $region98: #{forward.1} parent=0
    _
  %s19 = ssub.s32 1, %s17
  %s20 = scalar_select 0, %s19, %s17
  %v21 = vstv %s15
  %22 = vst [vmem:[#allocation2] sm:$0x1] %v21
  $region1: #{forward.1} parent=0
    #allocation3 [shape = 'u8[16384]{0}', space=vmem, size = 0x4000, scoped, tag = 'input window, operand 1, single buffered']
    #allocation4 [shape = 's32[1]{0}', space=sflag, size = 0x4, scoped, tag = 'scoped memory for forward.1']
    #allocation5 [shape = 'u8[65536]{0}', space=vmem, size = 0x10000, scoped, tag = 'input window, operand 3, single buffered']
    #allocation6 [shape = 's32[1]{0}', space=sflag, size = 0x4, scoped, tag = 'scoped memory for forward.1']
    #allocation7 [shape = 'u8[65536]{0}', space=vmem, size = 0x10000, scoped, tag = 'input window, operand 5, single buffered']
    #allocation8 [shape = 'u8[16384]{0}', space=vmem, size = 0x4000, scoped, tag = 'input window, operand 9, single buffered']
    #allocation9 [shape = 's32[1]{0}', space=sflag, size = 0x4, scoped, tag = 'scoped memory for forward.1']
    #allocation10 [shape = 'u8[16384]{0}', space=vmem, size = 0x4000, scoped, tag = 'input window, operand 10, single buffered']
    #allocation11 [shape = 'u8[16384]{0}', space=vmem, size = 0x4000, scoped, tag = 'input window, operand 14, single buffered']
    #allocation12 [shape = 's32[1]{0}', space=sflag, size = 0x4, scoped, tag = 'scoped memory for forward.1']
    %23 = vsyncpa [#allocation4], 0
    %24 = vsyncpa [#allocation6], 0
    %25 = vsyncpa [#allocation9], 0
    %26 = vsyncpa [#allocation12], 0
    // Predicated region
    $region2: #{forward.1} parent=1 // pred_check
      _
    $region3: #{forward.1} parent=1 // pred_check_branch
      %28 = sbr.rel (0) target = $region5
    $region4: #{forward.1} parent=1 // pred_region
      _
    $region5: #{forward.1} parent=1 // pred_fallthru
      _
    // Predicated region
    $region6: #{forward.1} parent=1 // pred_check
      _
    $region7: #{forward.1} parent=1 // pred_check_branch
      %30 = sbr.rel (0) target = $region9
    $region8: #{forward.1} parent=1 // pred_region
      %s32 = ssub.s32 512, 512
      %33 = vsyncadd [#allocation4], %s32
      %s34 = sshll.u32 [#allocation3], 4
      %s35 = int_to_ptr.vmem [resolvable:$true] %s34
      %40 = dma.hbm_to_vmem [thread:$0]  %s1, 512, %s35, [#allocation4], 256, 256, 16
    $region9: #{forward.1} parent=1 // pred_fallthru
      _
    // Predicated region
    $region10: #{forward.1} parent=1 // pred_check
      _
    $region11: #{forward.1} parent=1 // pred_check_branch
      %42 = sbr.rel (0) target = $region13
    $region12: #{forward.1} parent=1 // pred_region
      _
    $region13: #{forward.1} parent=1 // pred_fallthru
      _
    // Predicated region
    $region14: #{forward.1} parent=1 // pred_check
      _
    $region15: #{forward.1} parent=1 // pred_check_branch
      %44 = sbr.rel (0) target = $region17
    $region16: #{forward.1} parent=1 // pred_region
      %s46 = ssub.s32 2048, 2048
      %47 = vsyncadd [#allocation6], %s46
      %s48 = sshll.u32 [#allocation5], 4
      %s49 = int_to_ptr.vmem [resolvable:$true] %s48
      %54 = dma.hbm_to_vmem [thread:$0]  %s3, 2048, %s49, [#allocation6], 256, 256, 16
    $region17: #{forward.1} parent=1 // pred_fallthru
      _
    // Predicated region
    $region18: #{forward.1} parent=1 // pred_check
      _
    $region19: #{forward.1} parent=1 // pred_check_branch
      %56 = sbr.rel (0) target = $region21
    $region20: #{forward.1} parent=1 // pred_region
      _
    $region21: #{forward.1} parent=1 // pred_fallthru
      _
    // Predicated region
    $region22: #{forward.1} parent=1 // pred_check
      _
    $region23: #{forward.1} parent=1 // pred_check_branch
      %58 = sbr.rel (0) target = $region25
    $region24: #{forward.1} parent=1 // pred_region
      %s60 = ssub.s32 2048, 2048
      %61 = vsyncadd [#allocation6], %s60
      %s62 = sshll.u32 [#allocation7], 4
      %s63 = int_to_ptr.vmem [resolvable:$true] %s62
      %68 = dma.hbm_to_vmem [thread:$0]  %s5, 2048, %s63, [#allocation6], 256, 256, 16
    $region25: #{forward.1} parent=1 // pred_fallthru
      _
    // Predicated region
    $region26: #{forward.1} parent=1 // pred_check
      _
    $region27: #{forward.1} parent=1 // pred_check_branch
      %70 = sbr.rel (0) target = $region29
    $region28: #{forward.1} parent=1 // pred_region
      _
    $region29: #{forward.1} parent=1 // pred_fallthru
      _
    // Predicated region
    $region30: #{forward.1} parent=1 // pred_check
      _
    $region31: #{forward.1} parent=1 // pred_check_branch
      %72 = sbr.rel (0) target = $region33
    $region32: #{forward.1} parent=1 // pred_region
      _
    $region33: #{forward.1} parent=1 // pred_fallthru
      _
    // Predicated region
    $region34: #{forward.1} parent=1 // pred_check
      _
    $region35: #{forward.1} parent=1 // pred_check_branch
      %74 = sbr.rel (0) target = $region37
    $region36: #{forward.1} parent=1 // pred_region
      _
    $region37: #{forward.1} parent=1 // pred_fallthru
      _
    // Predicated region
    $region38: #{forward.1} parent=1 // pred_check
      _
    $region39: #{forward.1} parent=1 // pred_check_branch
      %76 = sbr.rel (0) target = $region41
    $region40: #{forward.1} parent=1 // pred_region
      %s78 = ssub.s32 512, 512
      %79 = vsyncadd [#allocation9], %s78
      %s80 = sshll.u32 [#allocation8], 4
      %s81 = int_to_ptr.vmem [resolvable:$true] %s80
      %86 = dma.hbm_to_vmem [thread:$0]  %s9, 512, %s81, [#allocation9], 128, 128, 8
    $region41: #{forward.1} parent=1 // pred_fallthru
      _
    // Predicated region
    $region42: #{forward.1} parent=1 // pred_check
      _
    $region43: #{forward.1} parent=1 // pred_check_branch
      %88 = sbr.rel (0) target = $region45
    $region44: #{forward.1} parent=1 // pred_region
      %s90 = ssub.s32 512, 512
      %91 = vsyncadd [#allocation9], %s90
      %s92 = sshll.u32 [#allocation10], 4
      %s93 = int_to_ptr.vmem [resolvable:$true] %s92
      %98 = dma.hbm_to_vmem [thread:$0]  %s10, 512, %s93, [#allocation9], 128, 128, 8
    $region45: #{forward.1} parent=1 // pred_fallthru
      _
    // Predicated region
    $region46: #{forward.1} parent=1 // pred_check
      _
    $region47: #{forward.1} parent=1 // pred_check_branch
      %100 = sbr.rel (0) target = $region49
    $region48: #{forward.1} parent=1 // pred_region
      _
    $region49: #{forward.1} parent=1 // pred_fallthru
      _
    // Predicated region
    $region50: #{forward.1} parent=1 // pred_check
      _
    $region51: #{forward.1} parent=1 // pred_check_branch
      %102 = sbr.rel (0) target = $region53
    $region52: #{forward.1} parent=1 // pred_region
      _
    $region53: #{forward.1} parent=1 // pred_fallthru
      _
    // Predicated region
    $region54: #{forward.1} parent=1 // pred_check
      _
    $region55: #{forward.1} parent=1 // pred_check_branch
      %104 = sbr.rel (0) target = $region57
    $region56: #{forward.1} parent=1 // pred_region
      _
    $region57: #{forward.1} parent=1 // pred_fallthru
      _
    // Predicated region
    $region58: #{forward.1} parent=1 // pred_check
      _
    $region59: #{forward.1} parent=1 // pred_check_branch
      %106 = sbr.rel (0) target = $region61
    $region60: #{forward.1} parent=1 // pred_region
      %s108 = ssub.s32 512, 512
      %109 = vsyncadd [#allocation12], %s108
      %s110 = sshll.u32 [#allocation11], 4
      %s111 = int_to_ptr.vmem [resolvable:$true] %s110
      %116 = dma.hbm_to_vmem [thread:$0]  %s14, 512, %s111, [#allocation12], 128, 128, 8
    $region61: #{forward.1} parent=1 // pred_fallthru
      _
    // Predicated region
    $region62: #{forward.1} parent=1 // pred_check
      _
    $region63: #{forward.1} parent=1 // pred_check_branch
      %118 = sbr.rel (0) target = $region65
    $region64: #{forward.1} parent=1 // pred_region
      _
    $region65: #{forward.1} parent=1 // pred_fallthru
      _
    // Predicated region
    $region66: #{forward.1} parent=1 // pred_check
      _
    $region67: #{forward.1} parent=1 // pred_check_branch
      %120 = sbr.rel (0) target = $region69
    $region68: #{forward.1} parent=1 // pred_region
      %121 = dma.done [#allocation4], 512
    $region69: #{forward.1} parent=1 // pred_fallthru
      _
    // Predicated region
    $region70: #{forward.1} parent=1 // pred_check
      _
    $region71: #{forward.1} parent=1 // pred_check_branch
      %123 = sbr.rel (0) target = $region73
    $region72: #{forward.1} parent=1 // pred_region
      %124 = dma.done [#allocation6], 2048
    $region73: #{forward.1} parent=1 // pred_fallthru
      _
    // Predicated region
    $region74: #{forward.1} parent=1 // pred_check
      _
    $region75: #{forward.1} parent=1 // pred_check_branch
      %126 = sbr.rel (0) target = $region77
    $region76: #{forward.1} parent=1 // pred_region
      %127 = dma.done [#allocation6], 2048
    $region77: #{forward.1} parent=1 // pred_fallthru
      _
    // Predicated region
    $region78: #{forward.1} parent=1 // pred_check
      _
    $region79: #{forward.1} parent=1 // pred_check_branch
      %129 = sbr.rel (0) target = $region81
    $region80: #{forward.1} parent=1 // pred_region
      %130 = dma.done [#allocation9], 512
    $region81: #{forward.1} parent=1 // pred_fallthru
      _
    // Predicated region
    $region82: #{forward.1} parent=1 // pred_check
      _
    $region83: #{forward.1} parent=1 // pred_check_branch
      %132 = sbr.rel (0) target = $region85
    $region84: #{forward.1} parent=1 // pred_region
      %133 = dma.done [#allocation9], 512
    $region85: #{forward.1} parent=1 // pred_fallthru
      _
    // Predicated region
    $region86: #{forward.1} parent=1 // pred_check
      _
    $region87: #{forward.1} parent=1 // pred_check_branch
      %135 = sbr.rel (0) target = $region89
    $region88: #{forward.1} parent=1 // pred_region
      %136 = dma.done [#allocation12], 512
    $region89: #{forward.1} parent=1 // pred_fallthru
      _
    %v137 = vld [vmem:[%s0] sm:$0xff]
    %v138 = vld [vmem:[%s0 + $0x8] sm:$0xff]
    %v139 = vld [vmem:[%s0 + $0x10] sm:$0xff]
    %v140 = vld [vmem:[%s0 + $0x18] sm:$0xff]
    %v141 = vld [vmem:[%s0 + $0x20] sm:$0xff]
    %v142 = vld [vmem:[%s0 + $0x28] sm:$0xff]
    %v143 = vld [vmem:[%s0 + $0x30] sm:$0xff]
    %v144 = vld [vmem:[%s0 + $0x38] sm:$0xff]
    %v145 = vld [vmem:[#allocation3] sm:$0xff]
    %v146 = vld [vmem:[#allocation3 + $0x8] sm:$0xff]
    %v147 = vld [vmem:[#allocation3 + $0x10] sm:$0xff]
    %v148 = vld [vmem:[#allocation3 + $0x18] sm:$0xff]
    %v149 = vld [vmem:[%s2] sm:$0x3]
    %v151 = vlaneseq
    %v152 = vshrl.u32 %v151, 7
    %v153 = vsub.s32 0, %v152
    %v154 = vrot.slane %v149, %v153
    %v155 = vlaneseq
    %v156 = vshrl.u32 %v155, 7
    %v157 = vsub.s32 1, %v156
    %v158 = vrot.slane %v149, %v157
    %vm161 = vcmask 130048
    %v163 = vsel %vm161, %v137, 0
    %v166 = vsel %vm161, %v138, 0
    %v169 = vsel %vm161, %v139, 0
    %v172 = vsel %vm161, %v140, 0
    %v175 = vsel %vm161, %v141, 0
    %v178 = vsel %vm161, %v142, 0
    %v181 = vsel %vm161, %v143, 0
    %v184 = vsel %vm161, %v144, 0
    %186 = vmatprep.subr.mxu0 0.0
    %187 = vmatpush1.msra.mxu0 0.0
    %188 = vmatprep.subr.mxu0 0.0
    %189 = vmatpush1.msra.mxu0 0.0
    %190 = vmatprep.subr.mxu0 0.0
    %191 = vmatpush1.msra.mxu0 0.0
    %192 = vmatprep.subr.mxu0 0.0
    %193 = vmatpush1.msra.mxu0 0.0
    %194 = vmatprep.subr.mxu0 0.0
    %195 = vmatpush1.msra.mxu0 0.0
    %196 = vmatprep.subr.mxu0 0.0
    %197 = vmatpush1.msra.mxu0 0.0
    %198 = vmatprep.subr.mxu0 0.0
    %199 = vmatpush1.msra.mxu0 0.0
    %200 = vmatprep.subr.mxu0 0.0
    %201 = vmatpush1.msra.mxu0 0.0
    %202 = vmatprep.subr.mxu0 0.0
    %203 = vmatpush1.msra.mxu0 0.0
    %204 = vmatprep.subr.mxu0 0.0
    %205 = vmatpush1.msra.mxu0 0.0
    %206 = vmatprep.subr.mxu0 0.0
    %207 = vmatpush1.msra.mxu0 0.0
    %208 = vmatprep.subr.mxu0 0.0
    %209 = vmatpush1.msra.mxu0 0.0
    %210 = vmatprep.subr.mxu0 0.0
    %211 = vmatpush1.msra.mxu0 0.0
    %212 = vmatprep.subr.mxu0 0.0
    %213 = vmatpush1.msra.mxu0 0.0
    %214 = vmatprep.subr.mxu0 %v148
    %215 = vmatpush1.msra.mxu0 %v147
    %216 = vmatprep.subr.mxu0 %v146
    %217 = vmatpush1.msra.mxu0 %v145
    %218 = vmatprep.subr.mxu0 0.0
    %219 = vmatpush2.msra.mxu0 0.0
    %220 = vmatprep.subr.mxu0 0.0
    %221 = vmatpush2.msra.mxu0 0.0
    %222 = vmatprep.subr.mxu0 0.0
    %223 = vmatpush2.msra.mxu0 0.0
    %224 = vmatprep.subr.mxu0 0.0
    %225 = vmatpush2.msra.mxu0 0.0
    %226 = vmatprep.subr.mxu0 0.0
    %227 = vmatpush2.msra.mxu0 0.0
    %228 = vmatprep.subr.mxu0 0.0
    %229 = vmatpush2.msra.mxu0 0.0
    %230 = vmatprep.subr.mxu0 0.0
    %231 = vmatpush2.msra.mxu0 0.0
    %232 = vmatprep.subr.mxu0 0.0
    %233 = vmatpush2.msra.mxu0 0.0
    %234 = vmatprep.subr.mxu0 0.0
    %235 = vmatpush2.msra.mxu0 0.0
    %236 = vmatprep.subr.mxu0 0.0
    %237 = vmatpush2.msra.mxu0 0.0
    %238 = vmatprep.subr.mxu0 0.0
    %239 = vmatpush2.msra.mxu0 0.0
    %240 = vmatprep.subr.mxu0 0.0
    %241 = vmatpush2.msra.mxu0 0.0
    %242 = vmatprep.subr.mxu0 0.0
    %243 = vmatpush2.msra.mxu0 0.0
    %244 = vmatprep.subr.mxu0 0.0
    %245 = vmatpush2.msra.mxu0 0.0
    %246 = vmatprep.subr.mxu0 0.0
    %247 = vmatpush2.msra.mxu0 0.0
    %248 = vmatprep.subr.mxu0 0.0
    %249 = vmatpush2.msra.mxu0 0.0
    %250 = vmatprep.mubr.f32.mxu0 0.0
    %251 = vmatmul.mubr.f32.gmra.mxu0 %v163
    %v252 = vpop.f32.mrf.mxu0
    %v253 = vadd.f32 %v154, %v252
    %v254 = vpop.f32.mrf.mxu0
    %v255 = vadd.f32 %v158, %v254
    %256 = vmatprep.mubr.f32.mxu0 0.0
    %257 = vmatmul.mubr.f32.gmra.mxu0 %v166
    %v258 = vpop.f32.mrf.mxu0
    %v259 = vadd.f32 %v154, %v258
    %v260 = vpop.f32.mrf.mxu0
    %v261 = vadd.f32 %v158, %v260
    %262 = vmatprep.mubr.f32.mxu0 0.0
    %263 = vmatmul.mubr.f32.gmra.mxu0 %v169
    %v264 = vpop.f32.mrf.mxu0
    %v265 = vadd.f32 %v154, %v264
    %v266 = vpop.f32.mrf.mxu0
    %v267 = vadd.f32 %v158, %v266
    %268 = vmatprep.mubr.f32.mxu0 0.0
    %269 = vmatmul.mubr.f32.gmra.mxu0 %v172
    %v270 = vpop.f32.mrf.mxu0
    %v271 = vadd.f32 %v154, %v270
    %v272 = vpop.f32.mrf.mxu0
    %v273 = vadd.f32 %v158, %v272
    %274 = vmatprep.mubr.f32.mxu0 0.0
    %275 = vmatmul.mubr.f32.gmra.mxu0 %v175
    %v276 = vpop.f32.mrf.mxu0
    %v277 = vadd.f32 %v154, %v276
    %v278 = vpop.f32.mrf.mxu0
    %v279 = vadd.f32 %v158, %v278
    %280 = vmatprep.mubr.f32.mxu0 0.0
    %281 = vmatmul.mubr.f32.gmra.mxu0 %v178
    %v282 = vpop.f32.mrf.mxu0
    %v283 = vadd.f32 %v154, %v282
    %v284 = vpop.f32.mrf.mxu0
    %v285 = vadd.f32 %v158, %v284
    %286 = vmatprep.mubr.f32.mxu0 0.0
    %287 = vmatmul.mubr.f32.gmra.mxu0 %v181
    %v288 = vpop.f32.mrf.mxu0
    %v289 = vadd.f32 %v154, %v288
    %v290 = vpop.f32.mrf.mxu0
    %v291 = vadd.f32 %v158, %v290
    %292 = vmatprep.mubr.f32.mxu0 0.0
    %293 = vmatmul.mubr.f32.gmra.mxu0 %v184
    %v294 = vpop.f32.mrf.mxu0
    %v295 = vadd.f32 %v154, %v294
    %v296 = vpop.f32.mrf.mxu0
    %v297 = vadd.f32 %v158, %v296
    %298 = vdwg.mxu0
    %v299 = vld [vmem:[#allocation5] sm:$0xff]
    %v300 = vld [vmem:[#allocation5 + $0x8] sm:$0xff]
    %v301 = vld [vmem:[#allocation5 + $0x10] sm:$0xff]
    %v302 = vld [vmem:[#allocation5 + $0x18] sm:$0xff]
    %v303 = vld [vmem:[#allocation5 + $0x20] sm:$0xff]
    %v304 = vld [vmem:[#allocation5 + $0x28] sm:$0xff]
    %v305 = vld [vmem:[#allocation5 + $0x30] sm:$0xff]
    %v306 = vld [vmem:[#allocation5 + $0x38] sm:$0xff]
    %v307 = vld [vmem:[#allocation5 + $0x40] sm:$0xff]
    %v308 = vld [vmem:[#allocation5 + $0x48] sm:$0xff]
    %v309 = vld [vmem:[#allocation5 + $0x50] sm:$0xff]
    %v310 = vld [vmem:[#allocation5 + $0x58] sm:$0xff]
    %v311 = vld [vmem:[#allocation5 + $0x60] sm:$0xff]
    %v312 = vld [vmem:[#allocation5 + $0x68] sm:$0xff]
    %v313 = vld [vmem:[#allocation5 + $0x70] sm:$0xff]
    %v314 = vld [vmem:[#allocation5 + $0x78] sm:$0xff]
    %v315 = vld [vmem:[%s4] sm:$0x3]
    %v317 = vlaneseq
    %v318 = vshrl.u32 %v317, 7
    %v319 = vsub.s32 0, %v318
    %v320 = vrot.slane %v315, %v319
    %v321 = vlaneseq
    %v322 = vshrl.u32 %v321, 7
    %v323 = vsub.s32 1, %v322
    %v324 = vrot.slane %v315, %v323
    %vm327 = vcmask 523264
    %v329 = vsel %vm327, 0.0, 0
    %331 = vmatprep.subr.mxu0 0.0
    %332 = vmatpush1.msra.mxu0 0.0
    %333 = vmatprep.subr.mxu0 0.0
    %334 = vmatpush1.msra.mxu0 0.0
    %335 = vmatprep.subr.mxu0 0.0
    %336 = vmatpush1.msra.mxu0 0.0
    %337 = vmatprep.subr.mxu0 0.0
    %338 = vmatpush1.msra.mxu0 0.0
    %339 = vmatprep.subr.mxu0 0.0
    %340 = vmatpush1.msra.mxu0 0.0
    %341 = vmatprep.subr.mxu0 0.0
    %342 = vmatpush1.msra.mxu0 0.0
    %343 = vmatprep.subr.mxu0 0.0
    %344 = vmatpush1.msra.mxu0 0.0
    %345 = vmatprep.subr.mxu0 0.0
    %346 = vmatpush1.msra.mxu0 0.0
    %347 = vmatprep.subr.mxu0 %v314
    %348 = vmatpush1.msra.mxu0 %v313
    %349 = vmatprep.subr.mxu0 %v312
    %350 = vmatpush1.msra.mxu0 %v311
    %351 = vmatprep.subr.mxu0 %v310
    %352 = vmatpush1.msra.mxu0 %v309
    %353 = vmatprep.subr.mxu0 %v308
    %354 = vmatpush1.msra.mxu0 %v307
    %355 = vmatprep.subr.mxu0 %v306
    %356 = vmatpush1.msra.mxu0 %v305
    %357 = vmatprep.subr.mxu0 %v304
    %358 = vmatpush1.msra.mxu0 %v303
    %359 = vmatprep.subr.mxu0 %v302
    %360 = vmatpush1.msra.mxu0 %v301
    %361 = vmatprep.subr.mxu0 %v300
    %362 = vmatpush1.msra.mxu0 %v299
    %363 = vmatprep.subr.mxu0 0.0
    %364 = vmatpush2.msra.mxu0 0.0
    %365 = vmatprep.subr.mxu0 0.0
    %366 = vmatpush2.msra.mxu0 0.0
    %367 = vmatprep.subr.mxu0 0.0
    %368 = vmatpush2.msra.mxu0 0.0
    %369 = vmatprep.subr.mxu0 0.0
    %370 = vmatpush2.msra.mxu0 0.0
    %371 = vmatprep.subr.mxu0 0.0
    %372 = vmatpush2.msra.mxu0 0.0
    %373 = vmatprep.subr.mxu0 0.0
    %374 = vmatpush2.msra.mxu0 0.0
    %375 = vmatprep.subr.mxu0 0.0
    %376 = vmatpush2.msra.mxu0 0.0
    %377 = vmatprep.subr.mxu0 0.0
    %378 = vmatpush2.msra.mxu0 0.0
    %379 = vmatprep.subr.mxu0 0.0
    %380 = vmatpush2.msra.mxu0 0.0
    %381 = vmatprep.subr.mxu0 0.0
    %382 = vmatpush2.msra.mxu0 0.0
    %383 = vmatprep.subr.mxu0 0.0
    %384 = vmatpush2.msra.mxu0 0.0
    %385 = vmatprep.subr.mxu0 0.0
    %386 = vmatpush2.msra.mxu0 0.0
    %387 = vmatprep.subr.mxu0 0.0
    %388 = vmatpush2.msra.mxu0 0.0
    %389 = vmatprep.subr.mxu0 0.0
    %390 = vmatpush2.msra.mxu0 0.0
    %391 = vmatprep.subr.mxu0 0.0
    %392 = vmatpush2.msra.mxu0 0.0
    %393 = vmatprep.subr.mxu0 0.0
    %394 = vmatpush2.msra.mxu0 0.0
    %395 = vmatprep.mubr.f32.mxu0 0.0
    %396 = vmatmul.mubr.f32.gmra.mxu0 %v329
    %v397 = vpop.f32.mrf.mxu0
    %v398 = vadd.f32 %v320, %v397
    %v399 = vpop.f32.mrf.mxu0
    %v400 = vadd.f32 %v324, %v399
    %401 = vdwg.mxu0
    %v402 = vadd.f32 %v253, %v398
    %v403 = vsub.f32 0.0, %v402
    %v404 = vmul.f32 %v403, 1.442695
    %v405 = vpow.pop %v404
    %v406 = vadd.f32 %v405, 1.0
    %v407 = vrcp.pop %v406
    %409 = vrot.lane.b32.xlu0 %v398, 64
    %v410 = vpop.permute.xlu0 %409
    %v412 = vmul.f32 %v407, %v410
    %414 = vrot.lane.b32.xlu0 %v412, 64
    %v415 = vpop.permute.xlu0 %414
    %v417 = vadd.f32 %v253, %v415
    %v418 = vtanh.pop %v417
    %v419 = vsub.f32 1.0, %v407
    %421 = vrot.lane.b32.xlu0 %v418, 96
    %v422 = vpop.permute.xlu0 %421
    %v424 = vmul.f32 %v419, %v422
    %v425 = vmul.f32 %v407, 0.0
    %v426 = vadd.f32 %v424, %v425
    %v427 = vadd.f32 %v295, %v398
    %v428 = vsub.f32 0.0, %v427
    %v429 = vmul.f32 %v428, 1.442695
    %v430 = vpow.pop %v429
    %v431 = vadd.f32 %v430, 1.0
    %v432 = vrcp.pop %v431
    %v433 = vadd.f32 %v297, %v400
    %v434 = vsub.f32 0.0, %v433
    %v435 = vmul.f32 %v434, 1.442695
    %v436 = vpow.pop %v435
    %v437 = vadd.f32 %v436, 1.0
    %v438 = vrcp.pop %v437
    %440 = vrot.lane.b32.xlu0 %v400, 64
    %v441 = vpop.permute.xlu0 %440
    %v443 = vmul.f32 %v432, %v441
    %445 = vrot.lane.b32.xlu0 %v443, 64
    %v446 = vpop.permute.xlu0 %445
    %v448 = vadd.f32 %v297, %v446
    %v449 = vtanh.pop %v448
    %v450 = vsub.f32 1.0, %v438
    %452 = vrot.lane.b32.xlu0 %v449, 96
    %v453 = vpop.permute.xlu0 %452
    %v455 = vmul.f32 %v450, %v453
    %v456 = vmul.f32 %v438, 0.0
    %v457 = vadd.f32 %v455, %v456
    %459 = vrot.lane.b32.xlu0 %v426, 96
    %v460 = vpop.permute.xlu0 %459
    %463 = vrot.lane.b32.xlu0 %v457, 32
    %v464 = vpop.permute.xlu0 %463
    %vm466 = vcmask 261120
    %v467 = vsel %vm466, %v460, %v464
    %v469 = vsel %vm327, %v467, 0
    %471 = vmatprep.subr.mxu0 0.0
    %472 = vmatpush1.msra.mxu0 0.0
    %473 = vmatprep.subr.mxu0 0.0
    %474 = vmatpush1.msra.mxu0 0.0
    %475 = vmatprep.subr.mxu0 0.0
    %476 = vmatpush1.msra.mxu0 0.0
    %477 = vmatprep.subr.mxu0 0.0
    %478 = vmatpush1.msra.mxu0 0.0
    %479 = vmatprep.subr.mxu0 0.0
    %480 = vmatpush1.msra.mxu0 0.0
    %481 = vmatprep.subr.mxu0 0.0
    %482 = vmatpush1.msra.mxu0 0.0
    %483 = vmatprep.subr.mxu0 0.0
    %484 = vmatpush1.msra.mxu0 0.0
    %485 = vmatprep.subr.mxu0 0.0
    %486 = vmatpush1.msra.mxu0 0.0
    %487 = vmatprep.subr.mxu0 %v314
    %488 = vmatpush1.msra.mxu0 %v313
    %489 = vmatprep.subr.mxu0 %v312
    %490 = vmatpush1.msra.mxu0 %v311
    %491 = vmatprep.subr.mxu0 %v310
    %492 = vmatpush1.msra.mxu0 %v309
    %493 = vmatprep.subr.mxu0 %v308
    %494 = vmatpush1.msra.mxu0 %v307
    %495 = vmatprep.subr.mxu0 %v306
    %496 = vmatpush1.msra.mxu0 %v305
    %497 = vmatprep.subr.mxu0 %v304
    %498 = vmatpush1.msra.mxu0 %v303
    %499 = vmatprep.subr.mxu0 %v302
    %500 = vmatpush1.msra.mxu0 %v301
    %501 = vmatprep.subr.mxu0 %v300
    %502 = vmatpush1.msra.mxu0 %v299
    %503 = vmatprep.subr.mxu0 0.0
    %504 = vmatpush2.msra.mxu0 0.0
    %505 = vmatprep.subr.mxu0 0.0
    %506 = vmatpush2.msra.mxu0 0.0
    %507 = vmatprep.subr.mxu0 0.0
    %508 = vmatpush2.msra.mxu0 0.0
    %509 = vmatprep.subr.mxu0 0.0
    %510 = vmatpush2.msra.mxu0 0.0
    %511 = vmatprep.subr.mxu0 0.0
    %512 = vmatpush2.msra.mxu0 0.0
    %513 = vmatprep.subr.mxu0 0.0
    %514 = vmatpush2.msra.mxu0 0.0
    %515 = vmatprep.subr.mxu0 0.0
    %516 = vmatpush2.msra.mxu0 0.0
    %517 = vmatprep.subr.mxu0 0.0
    %518 = vmatpush2.msra.mxu0 0.0
    %519 = vmatprep.subr.mxu0 0.0
    %520 = vmatpush2.msra.mxu0 0.0
    %521 = vmatprep.subr.mxu0 0.0
    %522 = vmatpush2.msra.mxu0 0.0
    %523 = vmatprep.subr.mxu0 0.0
    %524 = vmatpush2.msra.mxu0 0.0
    %525 = vmatprep.subr.mxu0 0.0
    %526 = vmatpush2.msra.mxu0 0.0
    %527 = vmatprep.subr.mxu0 0.0
    %528 = vmatpush2.msra.mxu0 0.0
    %529 = vmatprep.subr.mxu0 0.0
    %530 = vmatpush2.msra.mxu0 0.0
    %531 = vmatprep.subr.mxu0 0.0
    %532 = vmatpush2.msra.mxu0 0.0
    %533 = vmatprep.subr.mxu0 0.0
    %534 = vmatpush2.msra.mxu0 0.0
    %535 = vmatprep.mubr.f32.mxu0 0.0
    %536 = vmatmul.mubr.f32.gmra.mxu0 %v469
    %v537 = vpop.f32.mrf.mxu0
    %v538 = vadd.f32 %v320, %v537
    %v539 = vpop.f32.mrf.mxu0
    %v540 = vadd.f32 %v324, %v539
    %541 = vdwg.mxu0
    %v542 = vadd.f32 %v259, %v538
    %v543 = vsub.f32 0.0, %v542
    %v544 = vmul.f32 %v543, 1.442695
    %v545 = vpow.pop %v544
    %v546 = vadd.f32 %v545, 1.0
    %v547 = vrcp.pop %v546
    %549 = vrot.lane.b32.xlu0 %v538, 64
    %v550 = vpop.permute.xlu0 %549
    %v552 = vmul.f32 %v547, %v550
    %554 = vrot.lane.b32.xlu0 %v552, 64
    %v555 = vpop.permute.xlu0 %554
    %v557 = vadd.f32 %v259, %v555
    %v558 = vtanh.pop %v557
    %v559 = vsub.f32 1.0, %v547
    %561 = vrot.lane.b32.xlu0 %v558, 96
    %v562 = vpop.permute.xlu0 %561
    %v564 = vmul.f32 %v559, %v562
    %565 = vrot.lane.b32.xlu0 %v467, 32
    %v566 = vpop.permute.xlu0 %565
    %v568 = vmul.f32 %v547, %v566
    %v569 = vadd.f32 %v564, %v568
    %v570 = vadd.f32 %v289, %v538
    %v571 = vsub.f32 0.0, %v570
    %v572 = vmul.f32 %v571, 1.442695
    %v573 = vpow.pop %v572
    %v574 = vadd.f32 %v573, 1.0
    %v575 = vrcp.pop %v574
    %v576 = vadd.f32 %v291, %v540
    %v577 = vsub.f32 0.0, %v576
    %v578 = vmul.f32 %v577, 1.442695
    %v579 = vpow.pop %v578
    %v580 = vadd.f32 %v579, 1.0
    %v581 = vrcp.pop %v580
    %583 = vrot.lane.b32.xlu0 %v540, 64
    %v584 = vpop.permute.xlu0 %583
    %v586 = vmul.f32 %v575, %v584
    %588 = vrot.lane.b32.xlu0 %v586, 64
    %v589 = vpop.permute.xlu0 %588
    %v591 = vadd.f32 %v291, %v589
    %v592 = vtanh.pop %v591
    %v593 = vsub.f32 1.0, %v581
    %595 = vrot.lane.b32.xlu0 %v592, 96
    %v596 = vpop.permute.xlu0 %595
    %v598 = vmul.f32 %v593, %v596
    %599 = vrot.lane.b32.xlu0 %v467, 96
    %v600 = vpop.permute.xlu0 %599
    %v602 = vmul.f32 %v581, %v600
    %v603 = vadd.f32 %v598, %v602
    %605 = vrot.lane.b32.xlu0 %v569, 96
    %v606 = vpop.permute.xlu0 %605
    %609 = vrot.lane.b32.xlu0 %v603, 32
    %v610 = vpop.permute.xlu0 %609
    %v612 = vsel %vm466, %v606, %v610
    %v614 = vsel %vm327, %v612, 0
    %616 = vmatprep.subr.mxu0 0.0
    %617 = vmatpush1.msra.mxu0 0.0
    %618 = vmatprep.subr.mxu0 0.0
    %619 = vmatpush1.msra.mxu0 0.0
    %620 = vmatprep.subr.mxu0 0.0
    %621 = vmatpush1.msra.mxu0 0.0
    %622 = vmatprep.subr.mxu0 0.0
    %623 = vmatpush1.msra.mxu0 0.0
    %624 = vmatprep.subr.mxu0 0.0
    %625 = vmatpush1.msra.mxu0 0.0
    %626 = vmatprep.subr.mxu0 0.0
    %627 = vmatpush1.msra.mxu0 0.0
    %628 = vmatprep.subr.mxu0 0.0
    %629 = vmatpush1.msra.mxu0 0.0
    %630 = vmatprep.subr.mxu0 0.0
    %631 = vmatpush1.msra.mxu0 0.0
    %632 = vmatprep.subr.mxu0 %v314
    %633 = vmatpush1.msra.mxu0 %v313
    %634 = vmatprep.subr.mxu0 %v312
    %635 = vmatpush1.msra.mxu0 %v311
    %636 = vmatprep.subr.mxu0 %v310
    %637 = vmatpush1.msra.mxu0 %v309
    %638 = vmatprep.subr.mxu0 %v308
    %639 = vmatpush1.msra.mxu0 %v307
    %640 = vmatprep.subr.mxu0 %v306
    %641 = vmatpush1.msra.mxu0 %v305
    %642 = vmatprep.subr.mxu0 %v304
    %643 = vmatpush1.msra.mxu0 %v303
    %644 = vmatprep.subr.mxu0 %v302
    %645 = vmatpush1.msra.mxu0 %v301
    %646 = vmatprep.subr.mxu0 %v300
    %647 = vmatpush1.msra.mxu0 %v299
    %648 = vmatprep.subr.mxu0 0.0
    %649 = vmatpush2.msra.mxu0 0.0
    %650 = vmatprep.subr.mxu0 0.0
    %651 = vmatpush2.msra.mxu0 0.0
    %652 = vmatprep.subr.mxu0 0.0
    %653 = vmatpush2.msra.mxu0 0.0
    %654 = vmatprep.subr.mxu0 0.0
    %655 = vmatpush2.msra.mxu0 0.0
    %656 = vmatprep.subr.mxu0 0.0
    %657 = vmatpush2.msra.mxu0 0.0
    %658 = vmatprep.subr.mxu0 0.0
    %659 = vmatpush2.msra.mxu0 0.0
    %660 = vmatprep.subr.mxu0 0.0
    %661 = vmatpush2.msra.mxu0 0.0
    %662 = vmatprep.subr.mxu0 0.0
    %663 = vmatpush2.msra.mxu0 0.0
    %664 = vmatprep.subr.mxu0 0.0
    %665 = vmatpush2.msra.mxu0 0.0
    %666 = vmatprep.subr.mxu0 0.0
    %667 = vmatpush2.msra.mxu0 0.0
    %668 = vmatprep.subr.mxu0 0.0
    %669 = vmatpush2.msra.mxu0 0.0
    %670 = vmatprep.subr.mxu0 0.0
    %671 = vmatpush2.msra.mxu0 0.0
    %672 = vmatprep.subr.mxu0 0.0
    %673 = vmatpush2.msra.mxu0 0.0
    %674 = vmatprep.subr.mxu0 0.0
    %675 = vmatpush2.msra.mxu0 0.0
    %676 = vmatprep.subr.mxu0 0.0
    %677 = vmatpush2.msra.mxu0 0.0
    %678 = vmatprep.subr.mxu0 0.0
    %679 = vmatpush2.msra.mxu0 0.0
    %680 = vmatprep.mubr.f32.mxu0 0.0
    %681 = vmatmul.mubr.f32.gmra.mxu0 %v614
    %v682 = vpop.f32.mrf.mxu0
    %v683 = vadd.f32 %v320, %v682
    %v684 = vpop.f32.mrf.mxu0
    %v685 = vadd.f32 %v324, %v684
    %686 = vdwg.mxu0
    %v687 = vadd.f32 %v265, %v683
    %v688 = vsub.f32 0.0, %v687
    %v689 = vmul.f32 %v688, 1.442695
    %v690 = vpow.pop %v689
    %v691 = vadd.f32 %v690, 1.0
    %v692 = vrcp.pop %v691
    %694 = vrot.lane.b32.xlu0 %v683, 64
    %v695 = vpop.permute.xlu0 %694
    %v697 = vmul.f32 %v692, %v695
    %699 = vrot.lane.b32.xlu0 %v697, 64
    %v700 = vpop.permute.xlu0 %699
    %v702 = vadd.f32 %v265, %v700
    %v703 = vtanh.pop %v702
    %v704 = vsub.f32 1.0, %v692
    %706 = vrot.lane.b32.xlu0 %v703, 96
    %v707 = vpop.permute.xlu0 %706
    %v709 = vmul.f32 %v704, %v707
    %710 = vrot.lane.b32.xlu0 %v612, 32
    %v711 = vpop.permute.xlu0 %710
    %v713 = vmul.f32 %v692, %v711
    %v714 = vadd.f32 %v709, %v713
    %v715 = vadd.f32 %v283, %v683
    %v716 = vsub.f32 0.0, %v715
    %v717 = vmul.f32 %v716, 1.442695
    %v718 = vpow.pop %v717
    %v719 = vadd.f32 %v718, 1.0
    %v720 = vrcp.pop %v719
    %v721 = vadd.f32 %v285, %v685
    %v722 = vsub.f32 0.0, %v721
    %v723 = vmul.f32 %v722, 1.442695
    %v724 = vpow.pop %v723
    %v725 = vadd.f32 %v724, 1.0
    %v726 = vrcp.pop %v725
    %728 = vrot.lane.b32.xlu0 %v685, 64
    %v729 = vpop.permute.xlu0 %728
    %v731 = vmul.f32 %v720, %v729
    %733 = vrot.lane.b32.xlu0 %v731, 64
    %v734 = vpop.permute.xlu0 %733
    %v736 = vadd.f32 %v285, %v734
    %v737 = vtanh.pop %v736
    %v738 = vsub.f32 1.0, %v726
    %740 = vrot.lane.b32.xlu0 %v737, 96
    %v741 = vpop.permute.xlu0 %740
    %v743 = vmul.f32 %v738, %v741
    %744 = vrot.lane.b32.xlu0 %v612, 96
    %v745 = vpop.permute.xlu0 %744
    %v747 = vmul.f32 %v726, %v745
    %v748 = vadd.f32 %v743, %v747
    %750 = vrot.lane.b32.xlu0 %v714, 96
    %v751 = vpop.permute.xlu0 %750
    %754 = vrot.lane.b32.xlu0 %v748, 32
    %v755 = vpop.permute.xlu0 %754
    %v757 = vsel %vm466, %v751, %v755
    %v759 = vsel %vm327, %v757, 0
    %761 = vmatprep.subr.mxu0 0.0
    %762 = vmatpush1.msra.mxu0 0.0
    %763 = vmatprep.subr.mxu0 0.0
    %764 = vmatpush1.msra.mxu0 0.0
    %765 = vmatprep.subr.mxu0 0.0
    %766 = vmatpush1.msra.mxu0 0.0
    %767 = vmatprep.subr.mxu0 0.0
    %768 = vmatpush1.msra.mxu0 0.0
    %769 = vmatprep.subr.mxu0 0.0
    %770 = vmatpush1.msra.mxu0 0.0
    %771 = vmatprep.subr.mxu0 0.0
    %772 = vmatpush1.msra.mxu0 0.0
    %773 = vmatprep.subr.mxu0 0.0
    %774 = vmatpush1.msra.mxu0 0.0
    %775 = vmatprep.subr.mxu0 0.0
    %776 = vmatpush1.msra.mxu0 0.0
    %777 = vmatprep.subr.mxu0 %v314
    %778 = vmatpush1.msra.mxu0 %v313
    %779 = vmatprep.subr.mxu0 %v312
    %780 = vmatpush1.msra.mxu0 %v311
    %781 = vmatprep.subr.mxu0 %v310
    %782 = vmatpush1.msra.mxu0 %v309
    %783 = vmatprep.subr.mxu0 %v308
    %784 = vmatpush1.msra.mxu0 %v307
    %785 = vmatprep.subr.mxu0 %v306
    %786 = vmatpush1.msra.mxu0 %v305
    %787 = vmatprep.subr.mxu0 %v304
    %788 = vmatpush1.msra.mxu0 %v303
    %789 = vmatprep.subr.mxu0 %v302
    %790 = vmatpush1.msra.mxu0 %v301
    %791 = vmatprep.subr.mxu0 %v300
    %792 = vmatpush1.msra.mxu0 %v299
    %793 = vmatprep.subr.mxu0 0.0
    %794 = vmatpush2.msra.mxu0 0.0
    %795 = vmatprep.subr.mxu0 0.0
    %796 = vmatpush2.msra.mxu0 0.0
    %797 = vmatprep.subr.mxu0 0.0
    %798 = vmatpush2.msra.mxu0 0.0
    %799 = vmatprep.subr.mxu0 0.0
    %800 = vmatpush2.msra.mxu0 0.0
    %801 = vmatprep.subr.mxu0 0.0
    %802 = vmatpush2.msra.mxu0 0.0
    %803 = vmatprep.subr.mxu0 0.0
    %804 = vmatpush2.msra.mxu0 0.0
    %805 = vmatprep.subr.mxu0 0.0
    %806 = vmatpush2.msra.mxu0 0.0
    %807 = vmatprep.subr.mxu0 0.0
    %808 = vmatpush2.msra.mxu0 0.0
    %809 = vmatprep.subr.mxu0 0.0
    %810 = vmatpush2.msra.mxu0 0.0
    %811 = vmatprep.subr.mxu0 0.0
    %812 = vmatpush2.msra.mxu0 0.0
    %813 = vmatprep.subr.mxu0 0.0
    %814 = vmatpush2.msra.mxu0 0.0
    %815 = vmatprep.subr.mxu0 0.0
    %816 = vmatpush2.msra.mxu0 0.0
    %817 = vmatprep.subr.mxu0 0.0
    %818 = vmatpush2.msra.mxu0 0.0
    %819 = vmatprep.subr.mxu0 0.0
    %820 = vmatpush2.msra.mxu0 0.0
    %821 = vmatprep.subr.mxu0 0.0
    %822 = vmatpush2.msra.mxu0 0.0
    %823 = vmatprep.subr.mxu0 0.0
    %824 = vmatpush2.msra.mxu0 0.0
    %825 = vmatprep.mubr.f32.mxu0 0.0
    %826 = vmatmul.mubr.f32.gmra.mxu0 %v759
    %v827 = vpop.f32.mrf.mxu0
    %v828 = vadd.f32 %v320, %v827
    %v829 = vpop.f32.mrf.mxu0
    %v830 = vadd.f32 %v324, %v829
    %831 = vdwg.mxu0
    %v832 = vadd.f32 %v271, %v828
    %v833 = vsub.f32 0.0, %v832
    %v834 = vmul.f32 %v833, 1.442695
    %v835 = vpow.pop %v834
    %v836 = vadd.f32 %v835, 1.0
    %v837 = vrcp.pop %v836
    %839 = vrot.lane.b32.xlu0 %v828, 64
    %v840 = vpop.permute.xlu0 %839
    %v842 = vmul.f32 %v837, %v840
    %844 = vrot.lane.b32.xlu0 %v842, 64
    %v845 = vpop.permute.xlu0 %844
    %v847 = vadd.f32 %v271, %v845
    %v848 = vtanh.pop %v847
    %v849 = vsub.f32 1.0, %v837
    %851 = vrot.lane.b32.xlu0 %v848, 96
    %v852 = vpop.permute.xlu0 %851
    %v854 = vmul.f32 %v849, %v852
    %855 = vrot.lane.b32.xlu0 %v757, 32
    %v856 = vpop.permute.xlu0 %855
    %v858 = vmul.f32 %v837, %v856
    %v859 = vadd.f32 %v854, %v858
    %v860 = vadd.f32 %v277, %v828
    %v861 = vsub.f32 0.0, %v860
    %v862 = vmul.f32 %v861, 1.442695
    %v863 = vpow.pop %v862
    %v864 = vadd.f32 %v863, 1.0
    %v865 = vrcp.pop %v864
    %v866 = vadd.f32 %v279, %v830
    %v867 = vsub.f32 0.0, %v866
    %v868 = vmul.f32 %v867, 1.442695
    %v869 = vpow.pop %v868
    %v870 = vadd.f32 %v869, 1.0
    %v871 = vrcp.pop %v870
    %873 = vrot.lane.b32.xlu0 %v830, 64
    %v874 = vpop.permute.xlu0 %873
    %v876 = vmul.f32 %v865, %v874
    %878 = vrot.lane.b32.xlu0 %v876, 64
    %v879 = vpop.permute.xlu0 %878
    %v881 = vadd.f32 %v279, %v879
    %v882 = vtanh.pop %v881
    %v883 = vsub.f32 1.0, %v871
    %885 = vrot.lane.b32.xlu0 %v882, 96
    %v886 = vpop.permute.xlu0 %885
    %v888 = vmul.f32 %v883, %v886
    %889 = vrot.lane.b32.xlu0 %v757, 96
    %v890 = vpop.permute.xlu0 %889
    %v892 = vmul.f32 %v871, %v890
    %v893 = vadd.f32 %v888, %v892
    %895 = vrot.lane.b32.xlu0 %v859, 96
    %v896 = vpop.permute.xlu0 %895
    %899 = vrot.lane.b32.xlu0 %v893, 32
    %v900 = vpop.permute.xlu0 %899
    %v902 = vsel %vm466, %v896, %v900
    %v904 = vsel %vm327, %v902, 0
    %906 = vmatprep.subr.mxu0 0.0
    %907 = vmatpush1.msra.mxu0 0.0
    %908 = vmatprep.subr.mxu0 0.0
    %909 = vmatpush1.msra.mxu0 0.0
    %910 = vmatprep.subr.mxu0 0.0
    %911 = vmatpush1.msra.mxu0 0.0
    %912 = vmatprep.subr.mxu0 0.0
    %913 = vmatpush1.msra.mxu0 0.0
    %914 = vmatprep.subr.mxu0 0.0
    %915 = vmatpush1.msra.mxu0 0.0
    %916 = vmatprep.subr.mxu0 0.0
    %917 = vmatpush1.msra.mxu0 0.0
    %918 = vmatprep.subr.mxu0 0.0
    %919 = vmatpush1.msra.mxu0 0.0
    %920 = vmatprep.subr.mxu0 0.0
    %921 = vmatpush1.msra.mxu0 0.0
    %922 = vmatprep.subr.mxu0 %v314
    %923 = vmatpush1.msra.mxu0 %v313
    %924 = vmatprep.subr.mxu0 %v312
    %925 = vmatpush1.msra.mxu0 %v311
    %926 = vmatprep.subr.mxu0 %v310
    %927 = vmatpush1.msra.mxu0 %v309
    %928 = vmatprep.subr.mxu0 %v308
    %929 = vmatpush1.msra.mxu0 %v307
    %930 = vmatprep.subr.mxu0 %v306
    %931 = vmatpush1.msra.mxu0 %v305
    %932 = vmatprep.subr.mxu0 %v304
    %933 = vmatpush1.msra.mxu0 %v303
    %934 = vmatprep.subr.mxu0 %v302
    %935 = vmatpush1.msra.mxu0 %v301
    %936 = vmatprep.subr.mxu0 %v300
    %937 = vmatpush1.msra.mxu0 %v299
    %938 = vmatprep.subr.mxu0 0.0
    %939 = vmatpush2.msra.mxu0 0.0
    %940 = vmatprep.subr.mxu0 0.0
    %941 = vmatpush2.msra.mxu0 0.0
    %942 = vmatprep.subr.mxu0 0.0
    %943 = vmatpush2.msra.mxu0 0.0
    %944 = vmatprep.subr.mxu0 0.0
    %945 = vmatpush2.msra.mxu0 0.0
    %946 = vmatprep.subr.mxu0 0.0
    %947 = vmatpush2.msra.mxu0 0.0
    %948 = vmatprep.subr.mxu0 0.0
    %949 = vmatpush2.msra.mxu0 0.0
    %950 = vmatprep.subr.mxu0 0.0
    %951 = vmatpush2.msra.mxu0 0.0
    %952 = vmatprep.subr.mxu0 0.0
    %953 = vmatpush2.msra.mxu0 0.0
    %954 = vmatprep.subr.mxu0 0.0
    %955 = vmatpush2.msra.mxu0 0.0
    %956 = vmatprep.subr.mxu0 0.0
    %957 = vmatpush2.msra.mxu0 0.0
    %958 = vmatprep.subr.mxu0 0.0
    %959 = vmatpush2.msra.mxu0 0.0
    %960 = vmatprep.subr.mxu0 0.0
    %961 = vmatpush2.msra.mxu0 0.0
    %962 = vmatprep.subr.mxu0 0.0
    %963 = vmatpush2.msra.mxu0 0.0
    %964 = vmatprep.subr.mxu0 0.0
    %965 = vmatpush2.msra.mxu0 0.0
    %966 = vmatprep.subr.mxu0 0.0
    %967 = vmatpush2.msra.mxu0 0.0
    %968 = vmatprep.subr.mxu0 0.0
    %969 = vmatpush2.msra.mxu0 0.0
    %970 = vmatprep.mubr.f32.mxu0 0.0
    %971 = vmatmul.mubr.f32.gmra.mxu0 %v904
    %v972 = vpop.f32.mrf.mxu0
    %v973 = vadd.f32 %v320, %v972
    %v974 = vpop.f32.mrf.mxu0
    %v975 = vadd.f32 %v324, %v974
    %976 = vdwg.mxu0
    %v977 = vadd.f32 %v277, %v973
    %v978 = vsub.f32 0.0, %v977
    %v979 = vmul.f32 %v978, 1.442695
    %v980 = vpow.pop %v979
    %v981 = vadd.f32 %v980, 1.0
    %v982 = vrcp.pop %v981
    %984 = vrot.lane.b32.xlu0 %v973, 64
    %v985 = vpop.permute.xlu0 %984
    %v987 = vmul.f32 %v982, %v985
    %989 = vrot.lane.b32.xlu0 %v987, 64
    %v990 = vpop.permute.xlu0 %989
    %v992 = vadd.f32 %v277, %v990
    %v993 = vtanh.pop %v992
    %v994 = vsub.f32 1.0, %v982
    %996 = vrot.lane.b32.xlu0 %v993, 96
    %v997 = vpop.permute.xlu0 %996
    %v999 = vmul.f32 %v994, %v997
    %1000 = vrot.lane.b32.xlu0 %v902, 32
    %v1001 = vpop.permute.xlu0 %1000
    %v1003 = vmul.f32 %v982, %v1001
    %v1004 = vadd.f32 %v999, %v1003
    %v1005 = vadd.f32 %v271, %v973
    %v1006 = vsub.f32 0.0, %v1005
    %v1007 = vmul.f32 %v1006, 1.442695
    %v1008 = vpow.pop %v1007
    %v1009 = vadd.f32 %v1008, 1.0
    %v1010 = vrcp.pop %v1009
    %v1011 = vadd.f32 %v273, %v975
    %v1012 = vsub.f32 0.0, %v1011
    %v1013 = vmul.f32 %v1012, 1.442695
    %v1014 = vpow.pop %v1013
    %v1015 = vadd.f32 %v1014, 1.0
    %v1016 = vrcp.pop %v1015
    %1018 = vrot.lane.b32.xlu0 %v975, 64
    %v1019 = vpop.permute.xlu0 %1018
    %v1021 = vmul.f32 %v1010, %v1019
    %1023 = vrot.lane.b32.xlu0 %v1021, 64
    %v1024 = vpop.permute.xlu0 %1023
    %v1026 = vadd.f32 %v273, %v1024
    %v1027 = vtanh.pop %v1026
    %v1028 = vsub.f32 1.0, %v1016
    %1030 = vrot.lane.b32.xlu0 %v1027, 96
    %v1031 = vpop.permute.xlu0 %1030
    %v1033 = vmul.f32 %v1028, %v1031
    %1034 = vrot.lane.b32.xlu0 %v902, 96
    %v1035 = vpop.permute.xlu0 %1034
    %v1037 = vmul.f32 %v1016, %v1035
    %v1038 = vadd.f32 %v1033, %v1037
    %1040 = vrot.lane.b32.xlu0 %v1004, 96
    %v1041 = vpop.permute.xlu0 %1040
    %1044 = vrot.lane.b32.xlu0 %v1038, 32
    %v1045 = vpop.permute.xlu0 %1044
    %v1047 = vsel %vm466, %v1041, %v1045
    %v1049 = vsel %vm327, %v1047, 0
    %1051 = vmatprep.subr.mxu0 0.0
    %1052 = vmatpush1.msra.mxu0 0.0
    %1053 = vmatprep.subr.mxu0 0.0
    %1054 = vmatpush1.msra.mxu0 0.0
    %1055 = vmatprep.subr.mxu0 0.0
    %1056 = vmatpush1.msra.mxu0 0.0
    %1057 = vmatprep.subr.mxu0 0.0
    %1058 = vmatpush1.msra.mxu0 0.0
    %1059 = vmatprep.subr.mxu0 0.0
    %1060 = vmatpush1.msra.mxu0 0.0
    %1061 = vmatprep.subr.mxu0 0.0
    %1062 = vmatpush1.msra.mxu0 0.0
    %1063 = vmatprep.subr.mxu0 0.0
    %1064 = vmatpush1.msra.mxu0 0.0
    %1065 = vmatprep.subr.mxu0 0.0
    %1066 = vmatpush1.msra.mxu0 0.0
    %1067 = vmatprep.subr.mxu0 %v314
    %1068 = vmatpush1.msra.mxu0 %v313
    %1069 = vmatprep.subr.mxu0 %v312
    %1070 = vmatpush1.msra.mxu0 %v311
    %1071 = vmatprep.subr.mxu0 %v310
    %1072 = vmatpush1.msra.mxu0 %v309
    %1073 = vmatprep.subr.mxu0 %v308
    %1074 = vmatpush1.msra.mxu0 %v307
    %1075 = vmatprep.subr.mxu0 %v306
    %1076 = vmatpush1.msra.mxu0 %v305
    %1077 = vmatprep.subr.mxu0 %v304
    %1078 = vmatpush1.msra.mxu0 %v303
    %1079 = vmatprep.subr.mxu0 %v302
    %1080 = vmatpush1.msra.mxu0 %v301
    %1081 = vmatprep.subr.mxu0 %v300
    %1082 = vmatpush1.msra.mxu0 %v299
    %1083 = vmatprep.subr.mxu0 0.0
    %1084 = vmatpush2.msra.mxu0 0.0
    %1085 = vmatprep.subr.mxu0 0.0
    %1086 = vmatpush2.msra.mxu0 0.0
    %1087 = vmatprep.subr.mxu0 0.0
    %1088 = vmatpush2.msra.mxu0 0.0
    %1089 = vmatprep.subr.mxu0 0.0
    %1090 = vmatpush2.msra.mxu0 0.0
    %1091 = vmatprep.subr.mxu0 0.0
    %1092 = vmatpush2.msra.mxu0 0.0
    %1093 = vmatprep.subr.mxu0 0.0
    %1094 = vmatpush2.msra.mxu0 0.0
    %1095 = vmatprep.subr.mxu0 0.0
    %1096 = vmatpush2.msra.mxu0 0.0
    %1097 = vmatprep.subr.mxu0 0.0
    %1098 = vmatpush2.msra.mxu0 0.0
    %1099 = vmatprep.subr.mxu0 0.0
    %1100 = vmatpush2.msra.mxu0 0.0
    %1101 = vmatprep.subr.mxu0 0.0
    %1102 = vmatpush2.msra.mxu0 0.0
    %1103 = vmatprep.subr.mxu0 0.0
    %1104 = vmatpush2.msra.mxu0 0.0
    %1105 = vmatprep.subr.mxu0 0.0
    %1106 = vmatpush2.msra.mxu0 0.0
    %1107 = vmatprep.subr.mxu0 0.0
    %1108 = vmatpush2.msra.mxu0 0.0
    %1109 = vmatprep.subr.mxu0 0.0
    %1110 = vmatpush2.msra.mxu0 0.0
    %1111 = vmatprep.subr.mxu0 0.0
    %1112 = vmatpush2.msra.mxu0 0.0
    %1113 = vmatprep.subr.mxu0 0.0
    %1114 = vmatpush2.msra.mxu0 0.0
    %1115 = vmatprep.mubr.f32.mxu0 0.0
    %1116 = vmatmul.mubr.f32.gmra.mxu0 %v1049
    %v1117 = vpop.f32.mrf.mxu0
    %v1118 = vadd.f32 %v320, %v1117
    %v1119 = vpop.f32.mrf.mxu0
    %v1120 = vadd.f32 %v324, %v1119
    %1121 = vdwg.mxu0
    %v1122 = vadd.f32 %v283, %v1118
    %v1123 = vsub.f32 0.0, %v1122
    %v1124 = vmul.f32 %v1123, 1.442695
    %v1125 = vpow.pop %v1124
    %v1126 = vadd.f32 %v1125, 1.0
    %v1127 = vrcp.pop %v1126
    %1129 = vrot.lane.b32.xlu0 %v1118, 64
    %v1130 = vpop.permute.xlu0 %1129
    %v1132 = vmul.f32 %v1127, %v1130
    %1134 = vrot.lane.b32.xlu0 %v1132, 64
    %v1135 = vpop.permute.xlu0 %1134
    %v1137 = vadd.f32 %v283, %v1135
    %v1138 = vtanh.pop %v1137
    %v1139 = vsub.f32 1.0, %v1127
    %1141 = vrot.lane.b32.xlu0 %v1138, 96
    %v1142 = vpop.permute.xlu0 %1141
    %v1144 = vmul.f32 %v1139, %v1142
    %1145 = vrot.lane.b32.xlu0 %v1047, 32
    %v1146 = vpop.permute.xlu0 %1145
    %v1148 = vmul.f32 %v1127, %v1146
    %v1149 = vadd.f32 %v1144, %v1148
    %v1150 = vadd.f32 %v265, %v1118
    %v1151 = vsub.f32 0.0, %v1150
    %v1152 = vmul.f32 %v1151, 1.442695
    %v1153 = vpow.pop %v1152
    %v1154 = vadd.f32 %v1153, 1.0
    %v1155 = vrcp.pop %v1154
    %v1156 = vadd.f32 %v267, %v1120
    %v1157 = vsub.f32 0.0, %v1156
    %v1158 = vmul.f32 %v1157, 1.442695
    %v1159 = vpow.pop %v1158
    %v1160 = vadd.f32 %v1159, 1.0
    %v1161 = vrcp.pop %v1160
    %1163 = vrot.lane.b32.xlu0 %v1120, 64
    %v1164 = vpop.permute.xlu0 %1163
    %v1166 = vmul.f32 %v1155, %v1164
    %1168 = vrot.lane.b32.xlu0 %v1166, 64
    %v1169 = vpop.permute.xlu0 %1168
    %v1171 = vadd.f32 %v267, %v1169
    %v1172 = vtanh.pop %v1171
    %v1173 = vsub.f32 1.0, %v1161
    %1175 = vrot.lane.b32.xlu0 %v1172, 96
    %v1176 = vpop.permute.xlu0 %1175
    %v1178 = vmul.f32 %v1173, %v1176
    %1179 = vrot.lane.b32.xlu0 %v1047, 96
    %v1180 = vpop.permute.xlu0 %1179
    %v1182 = vmul.f32 %v1161, %v1180
    %v1183 = vadd.f32 %v1178, %v1182
    %1185 = vrot.lane.b32.xlu0 %v1149, 96
    %v1186 = vpop.permute.xlu0 %1185
    %1189 = vrot.lane.b32.xlu0 %v1183, 32
    %v1190 = vpop.permute.xlu0 %1189
    %v1192 = vsel %vm466, %v1186, %v1190
    %v1194 = vsel %vm327, %v1192, 0
    %1196 = vmatprep.subr.mxu0 0.0
    %1197 = vmatpush1.msra.mxu0 0.0
    %1198 = vmatprep.subr.mxu0 0.0
    %1199 = vmatpush1.msra.mxu0 0.0
    %1200 = vmatprep.subr.mxu0 0.0
    %1201 = vmatpush1.msra.mxu0 0.0
    %1202 = vmatprep.subr.mxu0 0.0
    %1203 = vmatpush1.msra.mxu0 0.0
    %1204 = vmatprep.subr.mxu0 0.0
    %1205 = vmatpush1.msra.mxu0 0.0
    %1206 = vmatprep.subr.mxu0 0.0
    %1207 = vmatpush1.msra.mxu0 0.0
    %1208 = vmatprep.subr.mxu0 0.0
    %1209 = vmatpush1.msra.mxu0 0.0
    %1210 = vmatprep.subr.mxu0 0.0
    %1211 = vmatpush1.msra.mxu0 0.0
    %1212 = vmatprep.subr.mxu0 %v314
    %1213 = vmatpush1.msra.mxu0 %v313
    %1214 = vmatprep.subr.mxu0 %v312
    %1215 = vmatpush1.msra.mxu0 %v311
    %1216 = vmatprep.subr.mxu0 %v310
    %1217 = vmatpush1.msra.mxu0 %v309
    %1218 = vmatprep.subr.mxu0 %v308
    %1219 = vmatpush1.msra.mxu0 %v307
    %1220 = vmatprep.subr.mxu0 %v306
    %1221 = vmatpush1.msra.mxu0 %v305
    %1222 = vmatprep.subr.mxu0 %v304
    %1223 = vmatpush1.msra.mxu0 %v303
    %1224 = vmatprep.subr.mxu0 %v302
    %1225 = vmatpush1.msra.mxu0 %v301
    %1226 = vmatprep.subr.mxu0 %v300
    %1227 = vmatpush1.msra.mxu0 %v299
    %1228 = vmatprep.subr.mxu0 0.0
    %1229 = vmatpush2.msra.mxu0 0.0
    %1230 = vmatprep.subr.mxu0 0.0
    %1231 = vmatpush2.msra.mxu0 0.0
    %1232 = vmatprep.subr.mxu0 0.0
    %1233 = vmatpush2.msra.mxu0 0.0
    %1234 = vmatprep.subr.mxu0 0.0
    %1235 = vmatpush2.msra.mxu0 0.0
    %1236 = vmatprep.subr.mxu0 0.0
    %1237 = vmatpush2.msra.mxu0 0.0
    %1238 = vmatprep.subr.mxu0 0.0
    %1239 = vmatpush2.msra.mxu0 0.0
    %1240 = vmatprep.subr.mxu0 0.0
    %1241 = vmatpush2.msra.mxu0 0.0
    %1242 = vmatprep.subr.mxu0 0.0
    %1243 = vmatpush2.msra.mxu0 0.0
    %1244 = vmatprep.subr.mxu0 0.0
    %1245 = vmatpush2.msra.mxu0 0.0
    %1246 = vmatprep.subr.mxu0 0.0
    %1247 = vmatpush2.msra.mxu0 0.0
    %1248 = vmatprep.subr.mxu0 0.0
    %1249 = vmatpush2.msra.mxu0 0.0
    %1250 = vmatprep.subr.mxu0 0.0
    %1251 = vmatpush2.msra.mxu0 0.0
    %1252 = vmatprep.subr.mxu0 0.0
    %1253 = vmatpush2.msra.mxu0 0.0
    %1254 = vmatprep.subr.mxu0 0.0
    %1255 = vmatpush2.msra.mxu0 0.0
    %1256 = vmatprep.subr.mxu0 0.0
    %1257 = vmatpush2.msra.mxu0 0.0
    %1258 = vmatprep.subr.mxu0 0.0
    %1259 = vmatpush2.msra.mxu0 0.0
    %1260 = vmatprep.mubr.f32.mxu0 0.0
    %1261 = vmatmul.mubr.f32.gmra.mxu0 %v1194
    %v1262 = vpop.f32.mrf.mxu0
    %v1263 = vadd.f32 %v320, %v1262
    %v1264 = vpop.f32.mrf.mxu0
    %v1265 = vadd.f32 %v324, %v1264
    %1266 = vdwg.mxu0
    %v1267 = vadd.f32 %v289, %v1263
    %v1268 = vsub.f32 0.0, %v1267
    %v1269 = vmul.f32 %v1268, 1.442695
    %v1270 = vpow.pop %v1269
    %v1271 = vadd.f32 %v1270, 1.0
    %v1272 = vrcp.pop %v1271
    %1274 = vrot.lane.b32.xlu0 %v1263, 64
    %v1275 = vpop.permute.xlu0 %1274
    %v1277 = vmul.f32 %v1272, %v1275
    %1279 = vrot.lane.b32.xlu0 %v1277, 64
    %v1280 = vpop.permute.xlu0 %1279
    %v1282 = vadd.f32 %v289, %v1280
    %v1283 = vtanh.pop %v1282
    %v1284 = vsub.f32 1.0, %v1272
    %1286 = vrot.lane.b32.xlu0 %v1283, 96
    %v1287 = vpop.permute.xlu0 %1286
    %v1289 = vmul.f32 %v1284, %v1287
    %1290 = vrot.lane.b32.xlu0 %v1192, 32
    %v1291 = vpop.permute.xlu0 %1290
    %v1293 = vmul.f32 %v1272, %v1291
    %v1294 = vadd.f32 %v1289, %v1293
    %v1295 = vadd.f32 %v259, %v1263
    %v1296 = vsub.f32 0.0, %v1295
    %v1297 = vmul.f32 %v1296, 1.442695
    %v1298 = vpow.pop %v1297
    %v1299 = vadd.f32 %v1298, 1.0
    %v1300 = vrcp.pop %v1299
    %v1301 = vadd.f32 %v261, %v1265
    %v1302 = vsub.f32 0.0, %v1301
    %v1303 = vmul.f32 %v1302, 1.442695
    %v1304 = vpow.pop %v1303
    %v1305 = vadd.f32 %v1304, 1.0
    %v1306 = vrcp.pop %v1305
    %1308 = vrot.lane.b32.xlu0 %v1265, 64
    %v1309 = vpop.permute.xlu0 %1308
    %v1311 = vmul.f32 %v1300, %v1309
    %1313 = vrot.lane.b32.xlu0 %v1311, 64
    %v1314 = vpop.permute.xlu0 %1313
    %v1316 = vadd.f32 %v261, %v1314
    %v1317 = vtanh.pop %v1316
    %v1318 = vsub.f32 1.0, %v1306
    %1320 = vrot.lane.b32.xlu0 %v1317, 96
    %v1321 = vpop.permute.xlu0 %1320
    %v1323 = vmul.f32 %v1318, %v1321
    %1324 = vrot.lane.b32.xlu0 %v1192, 96
    %v1325 = vpop.permute.xlu0 %1324
    %v1327 = vmul.f32 %v1306, %v1325
    %v1328 = vadd.f32 %v1323, %v1327
    %1330 = vrot.lane.b32.xlu0 %v1294, 96
    %v1331 = vpop.permute.xlu0 %1330
    %1334 = vrot.lane.b32.xlu0 %v1328, 32
    %v1335 = vpop.permute.xlu0 %1334
    %v1337 = vsel %vm466, %v1331, %v1335
    %v1339 = vsel %vm327, %v1337, 0
    %1341 = vmatprep.subr.mxu0 0.0
    %1342 = vmatpush1.msra.mxu0 0.0
    %1343 = vmatprep.subr.mxu0 0.0
    %1344 = vmatpush1.msra.mxu0 0.0
    %1345 = vmatprep.subr.mxu0 0.0
    %1346 = vmatpush1.msra.mxu0 0.0
    %1347 = vmatprep.subr.mxu0 0.0
    %1348 = vmatpush1.msra.mxu0 0.0
    %1349 = vmatprep.subr.mxu0 0.0
    %1350 = vmatpush1.msra.mxu0 0.0
    %1351 = vmatprep.subr.mxu0 0.0
    %1352 = vmatpush1.msra.mxu0 0.0
    %1353 = vmatprep.subr.mxu0 0.0
    %1354 = vmatpush1.msra.mxu0 0.0
    %1355 = vmatprep.subr.mxu0 0.0
    %1356 = vmatpush1.msra.mxu0 0.0
    %1357 = vmatprep.subr.mxu0 %v314
    %1358 = vmatpush1.msra.mxu0 %v313
    %1359 = vmatprep.subr.mxu0 %v312
    %1360 = vmatpush1.msra.mxu0 %v311
    %1361 = vmatprep.subr.mxu0 %v310
    %1362 = vmatpush1.msra.mxu0 %v309
    %1363 = vmatprep.subr.mxu0 %v308
    %1364 = vmatpush1.msra.mxu0 %v307
    %1365 = vmatprep.subr.mxu0 %v306
    %1366 = vmatpush1.msra.mxu0 %v305
    %1367 = vmatprep.subr.mxu0 %v304
    %1368 = vmatpush1.msra.mxu0 %v303
    %1369 = vmatprep.subr.mxu0 %v302
    %1370 = vmatpush1.msra.mxu0 %v301
    %1371 = vmatprep.subr.mxu0 %v300
    %1372 = vmatpush1.msra.mxu0 %v299
    %1373 = vmatprep.subr.mxu0 0.0
    %1374 = vmatpush2.msra.mxu0 0.0
    %1375 = vmatprep.subr.mxu0 0.0
    %1376 = vmatpush2.msra.mxu0 0.0
    %1377 = vmatprep.subr.mxu0 0.0
    %1378 = vmatpush2.msra.mxu0 0.0
    %1379 = vmatprep.subr.mxu0 0.0
    %1380 = vmatpush2.msra.mxu0 0.0
    %1381 = vmatprep.subr.mxu0 0.0
    %1382 = vmatpush2.msra.mxu0 0.0
    %1383 = vmatprep.subr.mxu0 0.0
    %1384 = vmatpush2.msra.mxu0 0.0
    %1385 = vmatprep.subr.mxu0 0.0
    %1386 = vmatpush2.msra.mxu0 0.0
    %1387 = vmatprep.subr.mxu0 0.0
    %1388 = vmatpush2.msra.mxu0 0.0
    %1389 = vmatprep.subr.mxu0 0.0
    %1390 = vmatpush2.msra.mxu0 0.0
    %1391 = vmatprep.subr.mxu0 0.0
    %1392 = vmatpush2.msra.mxu0 0.0
    %1393 = vmatprep.subr.mxu0 0.0
    %1394 = vmatpush2.msra.mxu0 0.0
    %1395 = vmatprep.subr.mxu0 0.0
    %1396 = vmatpush2.msra.mxu0 0.0
    %1397 = vmatprep.subr.mxu0 0.0
    %1398 = vmatpush2.msra.mxu0 0.0
    %1399 = vmatprep.subr.mxu0 0.0
    %1400 = vmatpush2.msra.mxu0 0.0
    %1401 = vmatprep.subr.mxu0 0.0
    %1402 = vmatpush2.msra.mxu0 0.0
    %1403 = vmatprep.subr.mxu0 0.0
    %1404 = vmatpush2.msra.mxu0 0.0
    %1405 = vmatprep.mubr.f32.mxu0 0.0
    %1406 = vmatmul.mubr.f32.gmra.mxu0 %v1339
    %v1407 = vpop.f32.mrf.mxu0
    %v1408 = vadd.f32 %v320, %v1407
    %v1409 = vpop.f32.mrf.mxu0
    %v1410 = vadd.f32 %v324, %v1409
    %1411 = vdwg.mxu0
    %v1412 = vadd.f32 %v295, %v1408
    %v1413 = vsub.f32 0.0, %v1412
    %v1414 = vmul.f32 %v1413, 1.442695
    %v1415 = vpow.pop %v1414
    %v1416 = vadd.f32 %v1415, 1.0
    %v1417 = vrcp.pop %v1416
    %1419 = vrot.lane.b32.xlu0 %v1408, 64
    %v1420 = vpop.permute.xlu0 %1419
    %v1422 = vmul.f32 %v1417, %v1420
    %1424 = vrot.lane.b32.xlu0 %v1422, 64
    %v1425 = vpop.permute.xlu0 %1424
    %v1427 = vadd.f32 %v295, %v1425
    %v1428 = vtanh.pop %v1427
    %v1429 = vsub.f32 1.0, %v1417
    %1431 = vrot.lane.b32.xlu0 %v1428, 96
    %v1432 = vpop.permute.xlu0 %1431
    %v1434 = vmul.f32 %v1429, %v1432
    %1435 = vrot.lane.b32.xlu0 %v1337, 32
    %v1436 = vpop.permute.xlu0 %1435
    %v1438 = vmul.f32 %v1417, %v1436
    %v1439 = vadd.f32 %v1434, %v1438
    %v1440 = vadd.f32 %v253, %v1408
    %v1441 = vsub.f32 0.0, %v1440
    %v1442 = vmul.f32 %v1441, 1.442695
    %v1443 = vpow.pop %v1442
    %v1444 = vadd.f32 %v1443, 1.0
    %v1445 = vrcp.pop %v1444
    %v1446 = vadd.f32 %v255, %v1410
    %v1447 = vsub.f32 0.0, %v1446
    %v1448 = vmul.f32 %v1447, 1.442695
    %v1449 = vpow.pop %v1448
    %v1450 = vadd.f32 %v1449, 1.0
    %v1451 = vrcp.pop %v1450
    %1453 = vrot.lane.b32.xlu0 %v1410, 64
    %v1454 = vpop.permute.xlu0 %1453
    %v1456 = vmul.f32 %v1445, %v1454
    %1458 = vrot.lane.b32.xlu0 %v1456, 64
    %v1459 = vpop.permute.xlu0 %1458
    %v1461 = vadd.f32 %v255, %v1459
    %v1462 = vtanh.pop %v1461
    %v1463 = vsub.f32 1.0, %v1451
    %1465 = vrot.lane.b32.xlu0 %v1462, 96
    %v1466 = vpop.permute.xlu0 %1465
    %v1468 = vmul.f32 %v1463, %v1466
    %1469 = vrot.lane.b32.xlu0 %v1337, 96
    %v1470 = vpop.permute.xlu0 %1469
    %v1472 = vmul.f32 %v1451, %v1470
    %v1473 = vadd.f32 %v1468, %v1472
    %1475 = vrot.lane.b32.xlu0 %v1439, 96
    %v1476 = vpop.permute.xlu0 %1475
    %1479 = vrot.lane.b32.xlu0 %v1473, 32
    %v1480 = vpop.permute.xlu0 %1479
    %v1482 = vsel %vm466, %v1476, %v1480
    %v1483 = vadd.f32 %v1482, 0.0
    %1485 = vrot.lane.b32.xlu0 %v1482, 96
    %v1486 = vpop.permute.xlu0 %1485
    %v1488 = vadd.f32 %v1483, %v1486
    %v1489 = vsel %vm466, %v460, %v1480
    %v1490 = vsel %vm466, %v606, %v1335
    %v1491 = vsel %vm466, %v751, %v1190
    %v1492 = vsel %vm466, %v896, %v1045
    %v1493 = vsel %vm466, %v1041, %v900
    %v1494 = vsel %vm466, %v1186, %v755
    %v1495 = vsel %vm466, %v1331, %v610
    %v1496 = vsel %vm466, %v1476, %v464
    %v1497 = vld [vmem:[#allocation7] sm:$0xff]
    %v1498 = vld [vmem:[#allocation7 + $0x8] sm:$0xff]
    %v1499 = vld [vmem:[#allocation7 + $0x10] sm:$0xff]
    %v1500 = vld [vmem:[#allocation7 + $0x18] sm:$0xff]
    %v1501 = vld [vmem:[#allocation7 + $0x20] sm:$0xff]
    %v1502 = vld [vmem:[#allocation7 + $0x28] sm:$0xff]
    %v1503 = vld [vmem:[#allocation7 + $0x30] sm:$0xff]
    %v1504 = vld [vmem:[#allocation7 + $0x38] sm:$0xff]
    %v1505 = vld [vmem:[#allocation7 + $0x40] sm:$0xff]
    %v1506 = vld [vmem:[#allocation7 + $0x48] sm:$0xff]
    %v1507 = vld [vmem:[#allocation7 + $0x50] sm:$0xff]
    %v1508 = vld [vmem:[#allocation7 + $0x58] sm:$0xff]
    %v1509 = vld [vmem:[#allocation7 + $0x60] sm:$0xff]
    %v1510 = vld [vmem:[#allocation7 + $0x68] sm:$0xff]
    %v1511 = vld [vmem:[#allocation7 + $0x70] sm:$0xff]
    %v1512 = vld [vmem:[#allocation7 + $0x78] sm:$0xff]
    %v1513 = vld [vmem:[%s6] sm:$0x3]
    %v1515 = vlaneseq
    %v1516 = vshrl.u32 %v1515, 7
    %v1517 = vsub.s32 0, %v1516
    %v1518 = vrot.slane %v1513, %v1517
    %v1519 = vlaneseq
    %v1520 = vshrl.u32 %v1519, 7
    %v1521 = vsub.s32 1, %v1520
    %v1522 = vrot.slane %v1513, %v1521
    %v1526 = vsel %vm327, %v1489, 0
    %v1529 = vsel %vm327, %v1490, 0
    %v1532 = vsel %vm327, %v1491, 0
    %v1535 = vsel %vm327, %v1492, 0
    %v1538 = vsel %vm327, %v1493, 0
    %v1541 = vsel %vm327, %v1494, 0
    %v1544 = vsel %vm327, %v1495, 0
    %v1547 = vsel %vm327, %v1496, 0
    %1549 = vmatprep.subr.mxu0 0.0
    %1550 = vmatpush1.msra.mxu0 0.0
    %1551 = vmatprep.subr.mxu0 0.0
    %1552 = vmatpush1.msra.mxu0 0.0
    %1553 = vmatprep.subr.mxu0 0.0
    %1554 = vmatpush1.msra.mxu0 0.0
    %1555 = vmatprep.subr.mxu0 0.0
    %1556 = vmatpush1.msra.mxu0 0.0
    %1557 = vmatprep.subr.mxu0 0.0
    %1558 = vmatpush1.msra.mxu0 0.0
    %1559 = vmatprep.subr.mxu0 0.0
    %1560 = vmatpush1.msra.mxu0 0.0
    %1561 = vmatprep.subr.mxu0 0.0
    %1562 = vmatpush1.msra.mxu0 0.0
    %1563 = vmatprep.subr.mxu0 0.0
    %1564 = vmatpush1.msra.mxu0 0.0
    %1565 = vmatprep.subr.mxu0 %v1512
    %1566 = vmatpush1.msra.mxu0 %v1511
    %1567 = vmatprep.subr.mxu0 %v1510
    %1568 = vmatpush1.msra.mxu0 %v1509
    %1569 = vmatprep.subr.mxu0 %v1508
    %1570 = vmatpush1.msra.mxu0 %v1507
    %1571 = vmatprep.subr.mxu0 %v1506
    %1572 = vmatpush1.msra.mxu0 %v1505
    %1573 = vmatprep.subr.mxu0 %v1504
    %1574 = vmatpush1.msra.mxu0 %v1503
    %1575 = vmatprep.subr.mxu0 %v1502
    %1576 = vmatpush1.msra.mxu0 %v1501
    %1577 = vmatprep.subr.mxu0 %v1500
    %1578 = vmatpush1.msra.mxu0 %v1499
    %1579 = vmatprep.subr.mxu0 %v1498
    %1580 = vmatpush1.msra.mxu0 %v1497
    %1581 = vmatprep.subr.mxu0 0.0
    %1582 = vmatpush2.msra.mxu0 0.0
    %1583 = vmatprep.subr.mxu0 0.0
    %1584 = vmatpush2.msra.mxu0 0.0
    %1585 = vmatprep.subr.mxu0 0.0
    %1586 = vmatpush2.msra.mxu0 0.0
    %1587 = vmatprep.subr.mxu0 0.0
    %1588 = vmatpush2.msra.mxu0 0.0
    %1589 = vmatprep.subr.mxu0 0.0
    %1590 = vmatpush2.msra.mxu0 0.0
    %1591 = vmatprep.subr.mxu0 0.0
    %1592 = vmatpush2.msra.mxu0 0.0
    %1593 = vmatprep.subr.mxu0 0.0
    %1594 = vmatpush2.msra.mxu0 0.0
    %1595 = vmatprep.subr.mxu0 0.0
    %1596 = vmatpush2.msra.mxu0 0.0
    %1597 = vmatprep.subr.mxu0 0.0
    %1598 = vmatpush2.msra.mxu0 0.0
    %1599 = vmatprep.subr.mxu0 0.0
    %1600 = vmatpush2.msra.mxu0 0.0
    %1601 = vmatprep.subr.mxu0 0.0
    %1602 = vmatpush2.msra.mxu0 0.0
    %1603 = vmatprep.subr.mxu0 0.0
    %1604 = vmatpush2.msra.mxu0 0.0
    %1605 = vmatprep.subr.mxu0 0.0
    %1606 = vmatpush2.msra.mxu0 0.0
    %1607 = vmatprep.subr.mxu0 0.0
    %1608 = vmatpush2.msra.mxu0 0.0
    %1609 = vmatprep.subr.mxu0 0.0
    %1610 = vmatpush2.msra.mxu0 0.0
    %1611 = vmatprep.subr.mxu0 0.0
    %1612 = vmatpush2.msra.mxu0 0.0
    %1613 = vmatprep.mubr.f32.mxu0 0.0
    %1614 = vmatmul.mubr.f32.gmra.mxu0 %v1526
    %v1615 = vpop.f32.mrf.mxu0
    %v1616 = vadd.f32 %v1518, %v1615
    %v1617 = vpop.f32.mrf.mxu0
    %v1618 = vadd.f32 %v1522, %v1617
    %1619 = vmatprep.mubr.f32.mxu0 0.0
    %1620 = vmatmul.mubr.f32.gmra.mxu0 %v1529
    %v1621 = vpop.f32.mrf.mxu0
    %v1622 = vadd.f32 %v1518, %v1621
    %v1623 = vpop.f32.mrf.mxu0
    %v1624 = vadd.f32 %v1522, %v1623
    %1625 = vmatprep.mubr.f32.mxu0 0.0
    %1626 = vmatmul.mubr.f32.gmra.mxu0 %v1532
    %v1627 = vpop.f32.mrf.mxu0
    %v1628 = vadd.f32 %v1518, %v1627
    %v1629 = vpop.f32.mrf.mxu0
    %v1630 = vadd.f32 %v1522, %v1629
    %1631 = vmatprep.mubr.f32.mxu0 0.0
    %1632 = vmatmul.mubr.f32.gmra.mxu0 %v1535
    %v1633 = vpop.f32.mrf.mxu0
    %v1634 = vadd.f32 %v1518, %v1633
    %v1635 = vpop.f32.mrf.mxu0
    %v1636 = vadd.f32 %v1522, %v1635
    %1637 = vmatprep.mubr.f32.mxu0 0.0
    %1638 = vmatmul.mubr.f32.gmra.mxu0 %v1538
    %v1639 = vpop.f32.mrf.mxu0
    %v1640 = vadd.f32 %v1518, %v1639
    %v1641 = vpop.f32.mrf.mxu0
    %v1642 = vadd.f32 %v1522, %v1641
    %1643 = vmatprep.mubr.f32.mxu0 0.0
    %1644 = vmatmul.mubr.f32.gmra.mxu0 %v1541
    %v1645 = vpop.f32.mrf.mxu0
    %v1646 = vadd.f32 %v1518, %v1645
    %v1647 = vpop.f32.mrf.mxu0
    %v1648 = vadd.f32 %v1522, %v1647
    %1649 = vmatprep.mubr.f32.mxu0 0.0
    %1650 = vmatmul.mubr.f32.gmra.mxu0 %v1544
    %v1651 = vpop.f32.mrf.mxu0
    %v1652 = vadd.f32 %v1518, %v1651
    %v1653 = vpop.f32.mrf.mxu0
    %v1654 = vadd.f32 %v1522, %v1653
    %1655 = vmatprep.mubr.f32.mxu0 0.0
    %1656 = vmatmul.mubr.f32.gmra.mxu0 %v1547
    %v1657 = vpop.f32.mrf.mxu0
    %v1658 = vadd.f32 %v1518, %v1657
    %v1659 = vpop.f32.mrf.mxu0
    %v1660 = vadd.f32 %v1522, %v1659
    %1661 = vdwg.mxu0
    %v1662 = vld [vmem:[%s7] sm:$0xff]
    %v1663 = vld [vmem:[%s7 + $0x8] sm:$0xff]
    %v1664 = vld [vmem:[%s7 + $0x10] sm:$0xff]
    %v1665 = vld [vmem:[%s7 + $0x18] sm:$0xff]
    %v1666 = vld [vmem:[%s7 + $0x20] sm:$0xff]
    %v1667 = vld [vmem:[%s7 + $0x28] sm:$0xff]
    %v1668 = vld [vmem:[%s7 + $0x30] sm:$0xff]
    %v1669 = vld [vmem:[%s7 + $0x38] sm:$0xff]
    %v1670 = vld [vmem:[%s7 + $0x40] sm:$0xff]
    %v1671 = vld [vmem:[%s7 + $0x48] sm:$0xff]
    %v1672 = vld [vmem:[%s7 + $0x50] sm:$0xff]
    %v1673 = vld [vmem:[%s7 + $0x58] sm:$0xff]
    %v1674 = vld [vmem:[%s7 + $0x60] sm:$0xff]
    %v1675 = vld [vmem:[%s7 + $0x68] sm:$0xff]
    %v1676 = vld [vmem:[%s7 + $0x70] sm:$0xff]
    %v1677 = vld [vmem:[%s7 + $0x78] sm:$0xff]
    %v1678 = vld [vmem:[%s8] sm:$0x3]
    %v1680 = vlaneseq
    %v1681 = vshrl.u32 %v1680, 7
    %v1682 = vsub.s32 0, %v1681
    %v1683 = vrot.slane %v1678, %v1682
    %v1684 = vlaneseq
    %v1685 = vshrl.u32 %v1684, 7
    %v1686 = vsub.s32 1, %v1685
    %v1687 = vrot.slane %v1678, %v1686
    %1690 = vmatprep.subr.mxu0 0.0
    %1691 = vmatpush1.msra.mxu0 0.0
    %1692 = vmatprep.subr.mxu0 0.0
    %1693 = vmatpush1.msra.mxu0 0.0
    %1694 = vmatprep.subr.mxu0 0.0
    %1695 = vmatpush1.msra.mxu0 0.0
    %1696 = vmatprep.subr.mxu0 0.0
    %1697 = vmatpush1.msra.mxu0 0.0
    %1698 = vmatprep.subr.mxu0 0.0
    %1699 = vmatpush1.msra.mxu0 0.0
    %1700 = vmatprep.subr.mxu0 0.0
    %1701 = vmatpush1.msra.mxu0 0.0
    %1702 = vmatprep.subr.mxu0 0.0
    %1703 = vmatpush1.msra.mxu0 0.0
    %1704 = vmatprep.subr.mxu0 0.0
    %1705 = vmatpush1.msra.mxu0 0.0
    %1706 = vmatprep.subr.mxu0 %v1677
    %1707 = vmatpush1.msra.mxu0 %v1676
    %1708 = vmatprep.subr.mxu0 %v1675
    %1709 = vmatpush1.msra.mxu0 %v1674
    %1710 = vmatprep.subr.mxu0 %v1673
    %1711 = vmatpush1.msra.mxu0 %v1672
    %1712 = vmatprep.subr.mxu0 %v1671
    %1713 = vmatpush1.msra.mxu0 %v1670
    %1714 = vmatprep.subr.mxu0 %v1669
    %1715 = vmatpush1.msra.mxu0 %v1668
    %1716 = vmatprep.subr.mxu0 %v1667
    %1717 = vmatpush1.msra.mxu0 %v1666
    %1718 = vmatprep.subr.mxu0 %v1665
    %1719 = vmatpush1.msra.mxu0 %v1664
    %1720 = vmatprep.subr.mxu0 %v1663
    %1721 = vmatpush1.msra.mxu0 %v1662
    %1722 = vmatprep.subr.mxu0 0.0
    %1723 = vmatpush2.msra.mxu0 0.0
    %1724 = vmatprep.subr.mxu0 0.0
    %1725 = vmatpush2.msra.mxu0 0.0
    %1726 = vmatprep.subr.mxu0 0.0
    %1727 = vmatpush2.msra.mxu0 0.0
    %1728 = vmatprep.subr.mxu0 0.0
    %1729 = vmatpush2.msra.mxu0 0.0
    %1730 = vmatprep.subr.mxu0 0.0
    %1731 = vmatpush2.msra.mxu0 0.0
    %1732 = vmatprep.subr.mxu0 0.0
    %1733 = vmatpush2.msra.mxu0 0.0
    %1734 = vmatprep.subr.mxu0 0.0
    %1735 = vmatpush2.msra.mxu0 0.0
    %1736 = vmatprep.subr.mxu0 0.0
    %1737 = vmatpush2.msra.mxu0 0.0
    %1738 = vmatprep.subr.mxu0 0.0
    %1739 = vmatpush2.msra.mxu0 0.0
    %1740 = vmatprep.subr.mxu0 0.0
    %1741 = vmatpush2.msra.mxu0 0.0
    %1742 = vmatprep.subr.mxu0 0.0
    %1743 = vmatpush2.msra.mxu0 0.0
    %1744 = vmatprep.subr.mxu0 0.0
    %1745 = vmatpush2.msra.mxu0 0.0
    %1746 = vmatprep.subr.mxu0 0.0
    %1747 = vmatpush2.msra.mxu0 0.0
    %1748 = vmatprep.subr.mxu0 0.0
    %1749 = vmatpush2.msra.mxu0 0.0
    %1750 = vmatprep.subr.mxu0 0.0
    %1751 = vmatpush2.msra.mxu0 0.0
    %1752 = vmatprep.subr.mxu0 0.0
    %1753 = vmatpush2.msra.mxu0 0.0
    %1754 = vmatprep.mubr.f32.mxu0 0.0
    %1755 = vmatmul.mubr.f32.gmra.mxu0 %v329
    %v1756 = vpop.f32.mrf.mxu0
    %v1757 = vadd.f32 %v1683, %v1756
    %v1758 = vpop.f32.mrf.mxu0
    %v1759 = vadd.f32 %v1687, %v1758
    %1760 = vdwg.mxu0
    %v1761 = vadd.f32 %v1616, %v1757
    %v1762 = vsub.f32 0.0, %v1761
    %v1763 = vmul.f32 %v1762, 1.442695
    %v1764 = vpow.pop %v1763
    %v1765 = vadd.f32 %v1764, 1.0
    %v1766 = vrcp.pop %v1765
    %1768 = vrot.lane.b32.xlu0 %v1757, 64
    %v1769 = vpop.permute.xlu0 %1768
    %v1771 = vmul.f32 %v1766, %v1769
    %1773 = vrot.lane.b32.xlu0 %v1771, 64
    %v1774 = vpop.permute.xlu0 %1773
    %v1776 = vadd.f32 %v1616, %v1774
    %v1777 = vtanh.pop %v1776
    %v1778 = vsub.f32 1.0, %v1766
    %1780 = vrot.lane.b32.xlu0 %v1777, 96
    %v1781 = vpop.permute.xlu0 %1780
    %v1783 = vmul.f32 %v1778, %v1781
    %v1784 = vmul.f32 %v1766, 0.0
    %v1785 = vadd.f32 %v1783, %v1784
    %v1786 = vadd.f32 %v1658, %v1757
    %v1787 = vsub.f32 0.0, %v1786
    %v1788 = vmul.f32 %v1787, 1.442695
    %v1789 = vpow.pop %v1788
    %v1790 = vadd.f32 %v1789, 1.0
    %v1791 = vrcp.pop %v1790
    %v1792 = vadd.f32 %v1660, %v1759
    %v1793 = vsub.f32 0.0, %v1792
    %v1794 = vmul.f32 %v1793, 1.442695
    %v1795 = vpow.pop %v1794
    %v1796 = vadd.f32 %v1795, 1.0
    %v1797 = vrcp.pop %v1796
    %1799 = vrot.lane.b32.xlu0 %v1759, 64
    %v1800 = vpop.permute.xlu0 %1799
    %v1802 = vmul.f32 %v1791, %v1800
    %1804 = vrot.lane.b32.xlu0 %v1802, 64
    %v1805 = vpop.permute.xlu0 %1804
    %v1807 = vadd.f32 %v1660, %v1805
    %v1808 = vtanh.pop %v1807
    %v1809 = vsub.f32 1.0, %v1797
    %1811 = vrot.lane.b32.xlu0 %v1808, 96
    %v1812 = vpop.permute.xlu0 %1811
    %v1814 = vmul.f32 %v1809, %v1812
    %v1815 = vmul.f32 %v1797, 0.0
    %v1816 = vadd.f32 %v1814, %v1815
    %1818 = vrot.lane.b32.xlu0 %v1785, 96
    %v1819 = vpop.permute.xlu0 %1818
    %1822 = vrot.lane.b32.xlu0 %v1816, 32
    %v1823 = vpop.permute.xlu0 %1822
    %v1825 = vsel %vm466, %v1819, %v1823
    %v1827 = vsel %vm327, %v1825, 0
    %1829 = vmatprep.subr.mxu0 0.0
    %1830 = vmatpush1.msra.mxu0 0.0
    %1831 = vmatprep.subr.mxu0 0.0
    %1832 = vmatpush1.msra.mxu0 0.0
    %1833 = vmatprep.subr.mxu0 0.0
    %1834 = vmatpush1.msra.mxu0 0.0
    %1835 = vmatprep.subr.mxu0 0.0
    %1836 = vmatpush1.msra.mxu0 0.0
    %1837 = vmatprep.subr.mxu0 0.0
    %1838 = vmatpush1.msra.mxu0 0.0
    %1839 = vmatprep.subr.mxu0 0.0
    %1840 = vmatpush1.msra.mxu0 0.0
    %1841 = vmatprep.subr.mxu0 0.0
    %1842 = vmatpush1.msra.mxu0 0.0
    %1843 = vmatprep.subr.mxu0 0.0
    %1844 = vmatpush1.msra.mxu0 0.0
    %1845 = vmatprep.subr.mxu0 %v1677
    %1846 = vmatpush1.msra.mxu0 %v1676
    %1847 = vmatprep.subr.mxu0 %v1675
    %1848 = vmatpush1.msra.mxu0 %v1674
    %1849 = vmatprep.subr.mxu0 %v1673
    %1850 = vmatpush1.msra.mxu0 %v1672
    %1851 = vmatprep.subr.mxu0 %v1671
    %1852 = vmatpush1.msra.mxu0 %v1670
    %1853 = vmatprep.subr.mxu0 %v1669
    %1854 = vmatpush1.msra.mxu0 %v1668
    %1855 = vmatprep.subr.mxu0 %v1667
    %1856 = vmatpush1.msra.mxu0 %v1666
    %1857 = vmatprep.subr.mxu0 %v1665
    %1858 = vmatpush1.msra.mxu0 %v1664
    %1859 = vmatprep.subr.mxu0 %v1663
    %1860 = vmatpush1.msra.mxu0 %v1662
    %1861 = vmatprep.subr.mxu0 0.0
    %1862 = vmatpush2.msra.mxu0 0.0
    %1863 = vmatprep.subr.mxu0 0.0
    %1864 = vmatpush2.msra.mxu0 0.0
    %1865 = vmatprep.subr.mxu0 0.0
    %1866 = vmatpush2.msra.mxu0 0.0
    %1867 = vmatprep.subr.mxu0 0.0
    %1868 = vmatpush2.msra.mxu0 0.0
    %1869 = vmatprep.subr.mxu0 0.0
    %1870 = vmatpush2.msra.mxu0 0.0
    %1871 = vmatprep.subr.mxu0 0.0
    %1872 = vmatpush2.msra.mxu0 0.0
    %1873 = vmatprep.subr.mxu0 0.0
    %1874 = vmatpush2.msra.mxu0 0.0
    %1875 = vmatprep.subr.mxu0 0.0
    %1876 = vmatpush2.msra.mxu0 0.0
    %1877 = vmatprep.subr.mxu0 0.0
    %1878 = vmatpush2.msra.mxu0 0.0
    %1879 = vmatprep.subr.mxu0 0.0
    %1880 = vmatpush2.msra.mxu0 0.0
    %1881 = vmatprep.subr.mxu0 0.0
    %1882 = vmatpush2.msra.mxu0 0.0
    %1883 = vmatprep.subr.mxu0 0.0
    %1884 = vmatpush2.msra.mxu0 0.0
    %1885 = vmatprep.subr.mxu0 0.0
    %1886 = vmatpush2.msra.mxu0 0.0
    %1887 = vmatprep.subr.mxu0 0.0
    %1888 = vmatpush2.msra.mxu0 0.0
    %1889 = vmatprep.subr.mxu0 0.0
    %1890 = vmatpush2.msra.mxu0 0.0
    %1891 = vmatprep.subr.mxu0 0.0
    %1892 = vmatpush2.msra.mxu0 0.0
    %1893 = vmatprep.mubr.f32.mxu0 0.0
    %1894 = vmatmul.mubr.f32.gmra.mxu0 %v1827
    %v1895 = vpop.f32.mrf.mxu0
    %v1896 = vadd.f32 %v1683, %v1895
    %v1897 = vpop.f32.mrf.mxu0
    %v1898 = vadd.f32 %v1687, %v1897
    %1899 = vdwg.mxu0
    %v1900 = vadd.f32 %v1622, %v1896
    %v1901 = vsub.f32 0.0, %v1900
    %v1902 = vmul.f32 %v1901, 1.442695
    %v1903 = vpow.pop %v1902
    %v1904 = vadd.f32 %v1903, 1.0
    %v1905 = vrcp.pop %v1904
    %1907 = vrot.lane.b32.xlu0 %v1896, 64
    %v1908 = vpop.permute.xlu0 %1907
    %v1910 = vmul.f32 %v1905, %v1908
    %1912 = vrot.lane.b32.xlu0 %v1910, 64
    %v1913 = vpop.permute.xlu0 %1912
    %v1915 = vadd.f32 %v1622, %v1913
    %v1916 = vtanh.pop %v1915
    %v1917 = vsub.f32 1.0, %v1905
    %1919 = vrot.lane.b32.xlu0 %v1916, 96
    %v1920 = vpop.permute.xlu0 %1919
    %v1922 = vmul.f32 %v1917, %v1920
    %1923 = vrot.lane.b32.xlu0 %v1825, 32
    %v1924 = vpop.permute.xlu0 %1923
    %v1926 = vmul.f32 %v1905, %v1924
    %v1927 = vadd.f32 %v1922, %v1926
    %v1928 = vadd.f32 %v1652, %v1896
    %v1929 = vsub.f32 0.0, %v1928
    %v1930 = vmul.f32 %v1929, 1.442695
    %v1931 = vpow.pop %v1930
    %v1932 = vadd.f32 %v1931, 1.0
    %v1933 = vrcp.pop %v1932
    %v1934 = vadd.f32 %v1654, %v1898
    %v1935 = vsub.f32 0.0, %v1934
    %v1936 = vmul.f32 %v1935, 1.442695
    %v1937 = vpow.pop %v1936
    %v1938 = vadd.f32 %v1937, 1.0
    %v1939 = vrcp.pop %v1938
    %1941 = vrot.lane.b32.xlu0 %v1898, 64
    %v1942 = vpop.permute.xlu0 %1941
    %v1944 = vmul.f32 %v1933, %v1942
    %1946 = vrot.lane.b32.xlu0 %v1944, 64
    %v1947 = vpop.permute.xlu0 %1946
    %v1949 = vadd.f32 %v1654, %v1947
    %v1950 = vtanh.pop %v1949
    %v1951 = vsub.f32 1.0, %v1939
    %1953 = vrot.lane.b32.xlu0 %v1950, 96
    %v1954 = vpop.permute.xlu0 %1953
    %v1956 = vmul.f32 %v1951, %v1954
    %1957 = vrot.lane.b32.xlu0 %v1825, 96
    %v1958 = vpop.permute.xlu0 %1957
    %v1960 = vmul.f32 %v1939, %v1958
    %v1961 = vadd.f32 %v1956, %v1960
    %1963 = vrot.lane.b32.xlu0 %v1927, 96
    %v1964 = vpop.permute.xlu0 %1963
    %1967 = vrot.lane.b32.xlu0 %v1961, 32
    %v1968 = vpop.permute.xlu0 %1967
    %v1970 = vsel %vm466, %v1964, %v1968
    %v1972 = vsel %vm327, %v1970, 0
    %1974 = vmatprep.subr.mxu0 0.0
    %1975 = vmatpush1.msra.mxu0 0.0
    %1976 = vmatprep.subr.mxu0 0.0
    %1977 = vmatpush1.msra.mxu0 0.0
    %1978 = vmatprep.subr.mxu0 0.0
    %1979 = vmatpush1.msra.mxu0 0.0
    %1980 = vmatprep.subr.mxu0 0.0
    %1981 = vmatpush1.msra.mxu0 0.0
    %1982 = vmatprep.subr.mxu0 0.0
    %1983 = vmatpush1.msra.mxu0 0.0
    %1984 = vmatprep.subr.mxu0 0.0
    %1985 = vmatpush1.msra.mxu0 0.0
    %1986 = vmatprep.subr.mxu0 0.0
    %1987 = vmatpush1.msra.mxu0 0.0
    %1988 = vmatprep.subr.mxu0 0.0
    %1989 = vmatpush1.msra.mxu0 0.0
    %1990 = vmatprep.subr.mxu0 %v1677
    %1991 = vmatpush1.msra.mxu0 %v1676
    %1992 = vmatprep.subr.mxu0 %v1675
    %1993 = vmatpush1.msra.mxu0 %v1674
    %1994 = vmatprep.subr.mxu0 %v1673
    %1995 = vmatpush1.msra.mxu0 %v1672
    %1996 = vmatprep.subr.mxu0 %v1671
    %1997 = vmatpush1.msra.mxu0 %v1670
    %1998 = vmatprep.subr.mxu0 %v1669
    %1999 = vmatpush1.msra.mxu0 %v1668
    %2000 = vmatprep.subr.mxu0 %v1667
    %2001 = vmatpush1.msra.mxu0 %v1666
    %2002 = vmatprep.subr.mxu0 %v1665
    %2003 = vmatpush1.msra.mxu0 %v1664
    %2004 = vmatprep.subr.mxu0 %v1663
    %2005 = vmatpush1.msra.mxu0 %v1662
    %2006 = vmatprep.subr.mxu0 0.0
    %2007 = vmatpush2.msra.mxu0 0.0
    %2008 = vmatprep.subr.mxu0 0.0
    %2009 = vmatpush2.msra.mxu0 0.0
    %2010 = vmatprep.subr.mxu0 0.0
    %2011 = vmatpush2.msra.mxu0 0.0
    %2012 = vmatprep.subr.mxu0 0.0
    %2013 = vmatpush2.msra.mxu0 0.0
    %2014 = vmatprep.subr.mxu0 0.0
    %2015 = vmatpush2.msra.mxu0 0.0
    %2016 = vmatprep.subr.mxu0 0.0
    %2017 = vmatpush2.msra.mxu0 0.0
    %2018 = vmatprep.subr.mxu0 0.0
    %2019 = vmatpush2.msra.mxu0 0.0
    %2020 = vmatprep.subr.mxu0 0.0
    %2021 = vmatpush2.msra.mxu0 0.0
    %2022 = vmatprep.subr.mxu0 0.0
    %2023 = vmatpush2.msra.mxu0 0.0
    %2024 = vmatprep.subr.mxu0 0.0
    %2025 = vmatpush2.msra.mxu0 0.0
    %2026 = vmatprep.subr.mxu0 0.0
    %2027 = vmatpush2.msra.mxu0 0.0
    %2028 = vmatprep.subr.mxu0 0.0
    %2029 = vmatpush2.msra.mxu0 0.0
    %2030 = vmatprep.subr.mxu0 0.0
    %2031 = vmatpush2.msra.mxu0 0.0
    %2032 = vmatprep.subr.mxu0 0.0
    %2033 = vmatpush2.msra.mxu0 0.0
    %2034 = vmatprep.subr.mxu0 0.0
    %2035 = vmatpush2.msra.mxu0 0.0
    %2036 = vmatprep.subr.mxu0 0.0
    %2037 = vmatpush2.msra.mxu0 0.0
    %2038 = vmatprep.mubr.f32.mxu0 0.0
    %2039 = vmatmul.mubr.f32.gmra.mxu0 %v1972
    %v2040 = vpop.f32.mrf.mxu0
    %v2041 = vadd.f32 %v1683, %v2040
    %v2042 = vpop.f32.mrf.mxu0
    %v2043 = vadd.f32 %v1687, %v2042
    %2044 = vdwg.mxu0
    %v2045 = vadd.f32 %v1628, %v2041
    %v2046 = vsub.f32 0.0, %v2045
    %v2047 = vmul.f32 %v2046, 1.442695
    %v2048 = vpow.pop %v2047
    %v2049 = vadd.f32 %v2048, 1.0
    %v2050 = vrcp.pop %v2049
    %2052 = vrot.lane.b32.xlu0 %v2041, 64
    %v2053 = vpop.permute.xlu0 %2052
    %v2055 = vmul.f32 %v2050, %v2053
    %2057 = vrot.lane.b32.xlu0 %v2055, 64
    %v2058 = vpop.permute.xlu0 %2057
    %v2060 = vadd.f32 %v1628, %v2058
    %v2061 = vtanh.pop %v2060
    %v2062 = vsub.f32 1.0, %v2050
    %2064 = vrot.lane.b32.xlu0 %v2061, 96
    %v2065 = vpop.permute.xlu0 %2064
    %v2067 = vmul.f32 %v2062, %v2065
    %2068 = vrot.lane.b32.xlu0 %v1970, 32
    %v2069 = vpop.permute.xlu0 %2068
    %v2071 = vmul.f32 %v2050, %v2069
    %v2072 = vadd.f32 %v2067, %v2071
    %v2073 = vadd.f32 %v1646, %v2041
    %v2074 = vsub.f32 0.0, %v2073
    %v2075 = vmul.f32 %v2074, 1.442695
    %v2076 = vpow.pop %v2075
    %v2077 = vadd.f32 %v2076, 1.0
    %v2078 = vrcp.pop %v2077
    %v2079 = vadd.f32 %v1648, %v2043
    %v2080 = vsub.f32 0.0, %v2079
    %v2081 = vmul.f32 %v2080, 1.442695
    %v2082 = vpow.pop %v2081
    %v2083 = vadd.f32 %v2082, 1.0
    %v2084 = vrcp.pop %v2083
    %2086 = vrot.lane.b32.xlu0 %v2043, 64
    %v2087 = vpop.permute.xlu0 %2086
    %v2089 = vmul.f32 %v2078, %v2087
    %2091 = vrot.lane.b32.xlu0 %v2089, 64
    %v2092 = vpop.permute.xlu0 %2091
    %v2094 = vadd.f32 %v1648, %v2092
    %v2095 = vtanh.pop %v2094
    %v2096 = vsub.f32 1.0, %v2084
    %2098 = vrot.lane.b32.xlu0 %v2095, 96
    %v2099 = vpop.permute.xlu0 %2098
    %v2101 = vmul.f32 %v2096, %v2099
    %2102 = vrot.lane.b32.xlu0 %v1970, 96
    %v2103 = vpop.permute.xlu0 %2102
    %v2105 = vmul.f32 %v2084, %v2103
    %v2106 = vadd.f32 %v2101, %v2105
    %2108 = vrot.lane.b32.xlu0 %v2072, 96
    %v2109 = vpop.permute.xlu0 %2108
    %2112 = vrot.lane.b32.xlu0 %v2106, 32
    %v2113 = vpop.permute.xlu0 %2112
    %v2115 = vsel %vm466, %v2109, %v2113
    %v2117 = vsel %vm327, %v2115, 0
    %2119 = vmatprep.subr.mxu0 0.0
    %2120 = vmatpush1.msra.mxu0 0.0
    %2121 = vmatprep.subr.mxu0 0.0
    %2122 = vmatpush1.msra.mxu0 0.0
    %2123 = vmatprep.subr.mxu0 0.0
    %2124 = vmatpush1.msra.mxu0 0.0
    %2125 = vmatprep.subr.mxu0 0.0
    %2126 = vmatpush1.msra.mxu0 0.0
    %2127 = vmatprep.subr.mxu0 0.0
    %2128 = vmatpush1.msra.mxu0 0.0
    %2129 = vmatprep.subr.mxu0 0.0
    %2130 = vmatpush1.msra.mxu0 0.0
    %2131 = vmatprep.subr.mxu0 0.0
    %2132 = vmatpush1.msra.mxu0 0.0
    %2133 = vmatprep.subr.mxu0 0.0
    %2134 = vmatpush1.msra.mxu0 0.0
    %2135 = vmatprep.subr.mxu0 %v1677
    %2136 = vmatpush1.msra.mxu0 %v1676
    %2137 = vmatprep.subr.mxu0 %v1675
    %2138 = vmatpush1.msra.mxu0 %v1674
    %2139 = vmatprep.subr.mxu0 %v1673
    %2140 = vmatpush1.msra.mxu0 %v1672
    %2141 = vmatprep.subr.mxu0 %v1671
    %2142 = vmatpush1.msra.mxu0 %v1670
    %2143 = vmatprep.subr.mxu0 %v1669
    %2144 = vmatpush1.msra.mxu0 %v1668
    %2145 = vmatprep.subr.mxu0 %v1667
    %2146 = vmatpush1.msra.mxu0 %v1666
    %2147 = vmatprep.subr.mxu0 %v1665
    %2148 = vmatpush1.msra.mxu0 %v1664
    %2149 = vmatprep.subr.mxu0 %v1663
    %2150 = vmatpush1.msra.mxu0 %v1662
    %2151 = vmatprep.subr.mxu0 0.0
    %2152 = vmatpush2.msra.mxu0 0.0
    %2153 = vmatprep.subr.mxu0 0.0
    %2154 = vmatpush2.msra.mxu0 0.0
    %2155 = vmatprep.subr.mxu0 0.0
    %2156 = vmatpush2.msra.mxu0 0.0
    %2157 = vmatprep.subr.mxu0 0.0
    %2158 = vmatpush2.msra.mxu0 0.0
    %2159 = vmatprep.subr.mxu0 0.0
    %2160 = vmatpush2.msra.mxu0 0.0
    %2161 = vmatprep.subr.mxu0 0.0
    %2162 = vmatpush2.msra.mxu0 0.0
    %2163 = vmatprep.subr.mxu0 0.0
    %2164 = vmatpush2.msra.mxu0 0.0
    %2165 = vmatprep.subr.mxu0 0.0
    %2166 = vmatpush2.msra.mxu0 0.0
    %2167 = vmatprep.subr.mxu0 0.0
    %2168 = vmatpush2.msra.mxu0 0.0
    %2169 = vmatprep.subr.mxu0 0.0
    %2170 = vmatpush2.msra.mxu0 0.0
    %2171 = vmatprep.subr.mxu0 0.0
    %2172 = vmatpush2.msra.mxu0 0.0
    %2173 = vmatprep.subr.mxu0 0.0
    %2174 = vmatpush2.msra.mxu0 0.0
    %2175 = vmatprep.subr.mxu0 0.0
    %2176 = vmatpush2.msra.mxu0 0.0
    %2177 = vmatprep.subr.mxu0 0.0
    %2178 = vmatpush2.msra.mxu0 0.0
    %2179 = vmatprep.subr.mxu0 0.0
    %2180 = vmatpush2.msra.mxu0 0.0
    %2181 = vmatprep.subr.mxu0 0.0
    %2182 = vmatpush2.msra.mxu0 0.0
    %2183 = vmatprep.mubr.f32.mxu0 0.0
    %2184 = vmatmul.mubr.f32.gmra.mxu0 %v2117
    %v2185 = vpop.f32.mrf.mxu0
    %v2186 = vadd.f32 %v1683, %v2185
    %v2187 = vpop.f32.mrf.mxu0
    %v2188 = vadd.f32 %v1687, %v2187
    %2189 = vdwg.mxu0
    %v2190 = vadd.f32 %v1634, %v2186
    %v2191 = vsub.f32 0.0, %v2190
    %v2192 = vmul.f32 %v2191, 1.442695
    %v2193 = vpow.pop %v2192
    %v2194 = vadd.f32 %v2193, 1.0
    %v2195 = vrcp.pop %v2194
    %2197 = vrot.lane.b32.xlu0 %v2186, 64
    %v2198 = vpop.permute.xlu0 %2197
    %v2200 = vmul.f32 %v2195, %v2198
    %2202 = vrot.lane.b32.xlu0 %v2200, 64
    %v2203 = vpop.permute.xlu0 %2202
    %v2205 = vadd.f32 %v1634, %v2203
    %v2206 = vtanh.pop %v2205
    %v2207 = vsub.f32 1.0, %v2195
    %2209 = vrot.lane.b32.xlu0 %v2206, 96
    %v2210 = vpop.permute.xlu0 %2209
    %v2212 = vmul.f32 %v2207, %v2210
    %2213 = vrot.lane.b32.xlu0 %v2115, 32
    %v2214 = vpop.permute.xlu0 %2213
    %v2216 = vmul.f32 %v2195, %v2214
    %v2217 = vadd.f32 %v2212, %v2216
    %v2218 = vadd.f32 %v1640, %v2186
    %v2219 = vsub.f32 0.0, %v2218
    %v2220 = vmul.f32 %v2219, 1.442695
    %v2221 = vpow.pop %v2220
    %v2222 = vadd.f32 %v2221, 1.0
    %v2223 = vrcp.pop %v2222
    %v2224 = vadd.f32 %v1642, %v2188
    %v2225 = vsub.f32 0.0, %v2224
    %v2226 = vmul.f32 %v2225, 1.442695
    %v2227 = vpow.pop %v2226
    %v2228 = vadd.f32 %v2227, 1.0
    %v2229 = vrcp.pop %v2228
    %2231 = vrot.lane.b32.xlu0 %v2188, 64
    %v2232 = vpop.permute.xlu0 %2231
    %v2234 = vmul.f32 %v2223, %v2232
    %2236 = vrot.lane.b32.xlu0 %v2234, 64
    %v2237 = vpop.permute.xlu0 %2236
    %v2239 = vadd.f32 %v1642, %v2237
    %v2240 = vtanh.pop %v2239
    %v2241 = vsub.f32 1.0, %v2229
    %2243 = vrot.lane.b32.xlu0 %v2240, 96
    %v2244 = vpop.permute.xlu0 %2243
    %v2246 = vmul.f32 %v2241, %v2244
    %2247 = vrot.lane.b32.xlu0 %v2115, 96
    %v2248 = vpop.permute.xlu0 %2247
    %v2250 = vmul.f32 %v2229, %v2248
    %v2251 = vadd.f32 %v2246, %v2250
    %2253 = vrot.lane.b32.xlu0 %v2217, 96
    %v2254 = vpop.permute.xlu0 %2253
    %2257 = vrot.lane.b32.xlu0 %v2251, 32
    %v2258 = vpop.permute.xlu0 %2257
    %v2260 = vsel %vm466, %v2254, %v2258
    %v2262 = vsel %vm327, %v2260, 0
    %2264 = vmatprep.subr.mxu0 0.0
    %2265 = vmatpush1.msra.mxu0 0.0
    %2266 = vmatprep.subr.mxu0 0.0
    %2267 = vmatpush1.msra.mxu0 0.0
    %2268 = vmatprep.subr.mxu0 0.0
    %2269 = vmatpush1.msra.mxu0 0.0
    %2270 = vmatprep.subr.mxu0 0.0
    %2271 = vmatpush1.msra.mxu0 0.0
    %2272 = vmatprep.subr.mxu0 0.0
    %2273 = vmatpush1.msra.mxu0 0.0
    %2274 = vmatprep.subr.mxu0 0.0
    %2275 = vmatpush1.msra.mxu0 0.0
    %2276 = vmatprep.subr.mxu0 0.0
    %2277 = vmatpush1.msra.mxu0 0.0
    %2278 = vmatprep.subr.mxu0 0.0
    %2279 = vmatpush1.msra.mxu0 0.0
    %2280 = vmatprep.subr.mxu0 %v1677
    %2281 = vmatpush1.msra.mxu0 %v1676
    %2282 = vmatprep.subr.mxu0 %v1675
    %2283 = vmatpush1.msra.mxu0 %v1674
    %2284 = vmatprep.subr.mxu0 %v1673
    %2285 = vmatpush1.msra.mxu0 %v1672
    %2286 = vmatprep.subr.mxu0 %v1671
    %2287 = vmatpush1.msra.mxu0 %v1670
    %2288 = vmatprep.subr.mxu0 %v1669
    %2289 = vmatpush1.msra.mxu0 %v1668
    %2290 = vmatprep.subr.mxu0 %v1667
    %2291 = vmatpush1.msra.mxu0 %v1666
    %2292 = vmatprep.subr.mxu0 %v1665
    %2293 = vmatpush1.msra.mxu0 %v1664
    %2294 = vmatprep.subr.mxu0 %v1663
    %2295 = vmatpush1.msra.mxu0 %v1662
    %2296 = vmatprep.subr.mxu0 0.0
    %2297 = vmatpush2.msra.mxu0 0.0
    %2298 = vmatprep.subr.mxu0 0.0
    %2299 = vmatpush2.msra.mxu0 0.0
    %2300 = vmatprep.subr.mxu0 0.0
    %2301 = vmatpush2.msra.mxu0 0.0
    %2302 = vmatprep.subr.mxu0 0.0
    %2303 = vmatpush2.msra.mxu0 0.0
    %2304 = vmatprep.subr.mxu0 0.0
    %2305 = vmatpush2.msra.mxu0 0.0
    %2306 = vmatprep.subr.mxu0 0.0
    %2307 = vmatpush2.msra.mxu0 0.0
    %2308 = vmatprep.subr.mxu0 0.0
    %2309 = vmatpush2.msra.mxu0 0.0
    %2310 = vmatprep.subr.mxu0 0.0
    %2311 = vmatpush2.msra.mxu0 0.0
    %2312 = vmatprep.subr.mxu0 0.0
    %2313 = vmatpush2.msra.mxu0 0.0
    %2314 = vmatprep.subr.mxu0 0.0
    %2315 = vmatpush2.msra.mxu0 0.0
    %2316 = vmatprep.subr.mxu0 0.0
    %2317 = vmatpush2.msra.mxu0 0.0
    %2318 = vmatprep.subr.mxu0 0.0
    %2319 = vmatpush2.msra.mxu0 0.0
    %2320 = vmatprep.subr.mxu0 0.0
    %2321 = vmatpush2.msra.mxu0 0.0
    %2322 = vmatprep.subr.mxu0 0.0
    %2323 = vmatpush2.msra.mxu0 0.0
    %2324 = vmatprep.subr.mxu0 0.0
    %2325 = vmatpush2.msra.mxu0 0.0
    %2326 = vmatprep.subr.mxu0 0.0
    %2327 = vmatpush2.msra.mxu0 0.0
    %2328 = vmatprep.mubr.f32.mxu0 0.0
    %2329 = vmatmul.mubr.f32.gmra.mxu0 %v2262
    %v2330 = vpop.f32.mrf.mxu0
    %v2331 = vadd.f32 %v1683, %v2330
    %v2332 = vpop.f32.mrf.mxu0
    %v2333 = vadd.f32 %v1687, %v2332
    %2334 = vdwg.mxu0
    %v2335 = vadd.f32 %v1640, %v2331
    %v2336 = vsub.f32 0.0, %v2335
    %v2337 = vmul.f32 %v2336, 1.442695
    %v2338 = vpow.pop %v2337
    %v2339 = vadd.f32 %v2338, 1.0
    %v2340 = vrcp.pop %v2339
    %2342 = vrot.lane.b32.xlu0 %v2331, 64
    %v2343 = vpop.permute.xlu0 %2342
    %v2345 = vmul.f32 %v2340, %v2343
    %2347 = vrot.lane.b32.xlu0 %v2345, 64
    %v2348 = vpop.permute.xlu0 %2347
    %v2350 = vadd.f32 %v1640, %v2348
    %v2351 = vtanh.pop %v2350
    %v2352 = vsub.f32 1.0, %v2340
    %2354 = vrot.lane.b32.xlu0 %v2351, 96
    %v2355 = vpop.permute.xlu0 %2354
    %v2357 = vmul.f32 %v2352, %v2355
    %2358 = vrot.lane.b32.xlu0 %v2260, 32
    %v2359 = vpop.permute.xlu0 %2358
    %v2361 = vmul.f32 %v2340, %v2359
    %v2362 = vadd.f32 %v2357, %v2361
    %v2363 = vadd.f32 %v1634, %v2331
    %v2364 = vsub.f32 0.0, %v2363
    %v2365 = vmul.f32 %v2364, 1.442695
    %v2366 = vpow.pop %v2365
    %v2367 = vadd.f32 %v2366, 1.0
    %v2368 = vrcp.pop %v2367
    %v2369 = vadd.f32 %v1636, %v2333
    %v2370 = vsub.f32 0.0, %v2369
    %v2371 = vmul.f32 %v2370, 1.442695
    %v2372 = vpow.pop %v2371
    %v2373 = vadd.f32 %v2372, 1.0
    %v2374 = vrcp.pop %v2373
    %2376 = vrot.lane.b32.xlu0 %v2333, 64
    %v2377 = vpop.permute.xlu0 %2376
    %v2379 = vmul.f32 %v2368, %v2377
    %2381 = vrot.lane.b32.xlu0 %v2379, 64
    %v2382 = vpop.permute.xlu0 %2381
    %v2384 = vadd.f32 %v1636, %v2382
    %v2385 = vtanh.pop %v2384
    %v2386 = vsub.f32 1.0, %v2374
    %2388 = vrot.lane.b32.xlu0 %v2385, 96
    %v2389 = vpop.permute.xlu0 %2388
    %v2391 = vmul.f32 %v2386, %v2389
    %2392 = vrot.lane.b32.xlu0 %v2260, 96
    %v2393 = vpop.permute.xlu0 %2392
    %v2395 = vmul.f32 %v2374, %v2393
    %v2396 = vadd.f32 %v2391, %v2395
    %2398 = vrot.lane.b32.xlu0 %v2362, 96
    %v2399 = vpop.permute.xlu0 %2398
    %2402 = vrot.lane.b32.xlu0 %v2396, 32
    %v2403 = vpop.permute.xlu0 %2402
    %v2405 = vsel %vm466, %v2399, %v2403
    %v2407 = vsel %vm327, %v2405, 0
    %2409 = vmatprep.subr.mxu0 0.0
    %2410 = vmatpush1.msra.mxu0 0.0
    %2411 = vmatprep.subr.mxu0 0.0
    %2412 = vmatpush1.msra.mxu0 0.0
    %2413 = vmatprep.subr.mxu0 0.0
    %2414 = vmatpush1.msra.mxu0 0.0
    %2415 = vmatprep.subr.mxu0 0.0
    %2416 = vmatpush1.msra.mxu0 0.0
    %2417 = vmatprep.subr.mxu0 0.0
    %2418 = vmatpush1.msra.mxu0 0.0
    %2419 = vmatprep.subr.mxu0 0.0
    %2420 = vmatpush1.msra.mxu0 0.0
    %2421 = vmatprep.subr.mxu0 0.0
    %2422 = vmatpush1.msra.mxu0 0.0
    %2423 = vmatprep.subr.mxu0 0.0
    %2424 = vmatpush1.msra.mxu0 0.0
    %2425 = vmatprep.subr.mxu0 %v1677
    %2426 = vmatpush1.msra.mxu0 %v1676
    %2427 = vmatprep.subr.mxu0 %v1675
    %2428 = vmatpush1.msra.mxu0 %v1674
    %2429 = vmatprep.subr.mxu0 %v1673
    %2430 = vmatpush1.msra.mxu0 %v1672
    %2431 = vmatprep.subr.mxu0 %v1671
    %2432 = vmatpush1.msra.mxu0 %v1670
    %2433 = vmatprep.subr.mxu0 %v1669
    %2434 = vmatpush1.msra.mxu0 %v1668
    %2435 = vmatprep.subr.mxu0 %v1667
    %2436 = vmatpush1.msra.mxu0 %v1666
    %2437 = vmatprep.subr.mxu0 %v1665
    %2438 = vmatpush1.msra.mxu0 %v1664
    %2439 = vmatprep.subr.mxu0 %v1663
    %2440 = vmatpush1.msra.mxu0 %v1662
    %2441 = vmatprep.subr.mxu0 0.0
    %2442 = vmatpush2.msra.mxu0 0.0
    %2443 = vmatprep.subr.mxu0 0.0
    %2444 = vmatpush2.msra.mxu0 0.0
    %2445 = vmatprep.subr.mxu0 0.0
    %2446 = vmatpush2.msra.mxu0 0.0
    %2447 = vmatprep.subr.mxu0 0.0
    %2448 = vmatpush2.msra.mxu0 0.0
    %2449 = vmatprep.subr.mxu0 0.0
    %2450 = vmatpush2.msra.mxu0 0.0
    %2451 = vmatprep.subr.mxu0 0.0
    %2452 = vmatpush2.msra.mxu0 0.0
    %2453 = vmatprep.subr.mxu0 0.0
    %2454 = vmatpush2.msra.mxu0 0.0
    %2455 = vmatprep.subr.mxu0 0.0
    %2456 = vmatpush2.msra.mxu0 0.0
    %2457 = vmatprep.subr.mxu0 0.0
    %2458 = vmatpush2.msra.mxu0 0.0
    %2459 = vmatprep.subr.mxu0 0.0
    %2460 = vmatpush2.msra.mxu0 0.0
    %2461 = vmatprep.subr.mxu0 0.0
    %2462 = vmatpush2.msra.mxu0 0.0
    %2463 = vmatprep.subr.mxu0 0.0
    %2464 = vmatpush2.msra.mxu0 0.0
    %2465 = vmatprep.subr.mxu0 0.0
    %2466 = vmatpush2.msra.mxu0 0.0
    %2467 = vmatprep.subr.mxu0 0.0
    %2468 = vmatpush2.msra.mxu0 0.0
    %2469 = vmatprep.subr.mxu0 0.0
    %2470 = vmatpush2.msra.mxu0 0.0
    %2471 = vmatprep.subr.mxu0 0.0
    %2472 = vmatpush2.msra.mxu0 0.0
    %2473 = vmatprep.mubr.f32.mxu0 0.0
    %2474 = vmatmul.mubr.f32.gmra.mxu0 %v2407
    %v2475 = vpop.f32.mrf.mxu0
    %v2476 = vadd.f32 %v1683, %v2475
    %v2477 = vpop.f32.mrf.mxu0
    %v2478 = vadd.f32 %v1687, %v2477
    %2479 = vdwg.mxu0
    %v2480 = vadd.f32 %v1646, %v2476
    %v2481 = vsub.f32 0.0, %v2480
    %v2482 = vmul.f32 %v2481, 1.442695
    %v2483 = vpow.pop %v2482
    %v2484 = vadd.f32 %v2483, 1.0
    %v2485 = vrcp.pop %v2484
    %2487 = vrot.lane.b32.xlu0 %v2476, 64
    %v2488 = vpop.permute.xlu0 %2487
    %v2490 = vmul.f32 %v2485, %v2488
    %2492 = vrot.lane.b32.xlu0 %v2490, 64
    %v2493 = vpop.permute.xlu0 %2492
    %v2495 = vadd.f32 %v1646, %v2493
    %v2496 = vtanh.pop %v2495
    %v2497 = vsub.f32 1.0, %v2485
    %2499 = vrot.lane.b32.xlu0 %v2496, 96
    %v2500 = vpop.permute.xlu0 %2499
    %v2502 = vmul.f32 %v2497, %v2500
    %2503 = vrot.lane.b32.xlu0 %v2405, 32
    %v2504 = vpop.permute.xlu0 %2503
    %v2506 = vmul.f32 %v2485, %v2504
    %v2507 = vadd.f32 %v2502, %v2506
    %v2508 = vadd.f32 %v1628, %v2476
    %v2509 = vsub.f32 0.0, %v2508
    %v2510 = vmul.f32 %v2509, 1.442695
    %v2511 = vpow.pop %v2510
    %v2512 = vadd.f32 %v2511, 1.0
    %v2513 = vrcp.pop %v2512
    %v2514 = vadd.f32 %v1630, %v2478
    %v2515 = vsub.f32 0.0, %v2514
    %v2516 = vmul.f32 %v2515, 1.442695
    %v2517 = vpow.pop %v2516
    %v2518 = vadd.f32 %v2517, 1.0
    %v2519 = vrcp.pop %v2518
    %2521 = vrot.lane.b32.xlu0 %v2478, 64
    %v2522 = vpop.permute.xlu0 %2521
    %v2524 = vmul.f32 %v2513, %v2522
    %2526 = vrot.lane.b32.xlu0 %v2524, 64
    %v2527 = vpop.permute.xlu0 %2526
    %v2529 = vadd.f32 %v1630, %v2527
    %v2530 = vtanh.pop %v2529
    %v2531 = vsub.f32 1.0, %v2519
    %2533 = vrot.lane.b32.xlu0 %v2530, 96
    %v2534 = vpop.permute.xlu0 %2533
    %v2536 = vmul.f32 %v2531, %v2534
    %2537 = vrot.lane.b32.xlu0 %v2405, 96
    %v2538 = vpop.permute.xlu0 %2537
    %v2540 = vmul.f32 %v2519, %v2538
    %v2541 = vadd.f32 %v2536, %v2540
    %2543 = vrot.lane.b32.xlu0 %v2507, 96
    %v2544 = vpop.permute.xlu0 %2543
    %2547 = vrot.lane.b32.xlu0 %v2541, 32
    %v2548 = vpop.permute.xlu0 %2547
    %v2550 = vsel %vm466, %v2544, %v2548
    %v2552 = vsel %vm327, %v2550, 0
    %2554 = vmatprep.subr.mxu0 0.0
    %2555 = vmatpush1.msra.mxu0 0.0
    %2556 = vmatprep.subr.mxu0 0.0
    %2557 = vmatpush1.msra.mxu0 0.0
    %2558 = vmatprep.subr.mxu0 0.0
    %2559 = vmatpush1.msra.mxu0 0.0
    %2560 = vmatprep.subr.mxu0 0.0
    %2561 = vmatpush1.msra.mxu0 0.0
    %2562 = vmatprep.subr.mxu0 0.0
    %2563 = vmatpush1.msra.mxu0 0.0
    %2564 = vmatprep.subr.mxu0 0.0
    %2565 = vmatpush1.msra.mxu0 0.0
    %2566 = vmatprep.subr.mxu0 0.0
    %2567 = vmatpush1.msra.mxu0 0.0
    %2568 = vmatprep.subr.mxu0 0.0
    %2569 = vmatpush1.msra.mxu0 0.0
    %2570 = vmatprep.subr.mxu0 %v1677
    %2571 = vmatpush1.msra.mxu0 %v1676
    %2572 = vmatprep.subr.mxu0 %v1675
    %2573 = vmatpush1.msra.mxu0 %v1674
    %2574 = vmatprep.subr.mxu0 %v1673
    %2575 = vmatpush1.msra.mxu0 %v1672
    %2576 = vmatprep.subr.mxu0 %v1671
    %2577 = vmatpush1.msra.mxu0 %v1670
    %2578 = vmatprep.subr.mxu0 %v1669
    %2579 = vmatpush1.msra.mxu0 %v1668
    %2580 = vmatprep.subr.mxu0 %v1667
    %2581 = vmatpush1.msra.mxu0 %v1666
    %2582 = vmatprep.subr.mxu0 %v1665
    %2583 = vmatpush1.msra.mxu0 %v1664
    %2584 = vmatprep.subr.mxu0 %v1663
    %2585 = vmatpush1.msra.mxu0 %v1662
    %2586 = vmatprep.subr.mxu0 0.0
    %2587 = vmatpush2.msra.mxu0 0.0
    %2588 = vmatprep.subr.mxu0 0.0
    %2589 = vmatpush2.msra.mxu0 0.0
    %2590 = vmatprep.subr.mxu0 0.0
    %2591 = vmatpush2.msra.mxu0 0.0
    %2592 = vmatprep.subr.mxu0 0.0
    %2593 = vmatpush2.msra.mxu0 0.0
    %2594 = vmatprep.subr.mxu0 0.0
    %2595 = vmatpush2.msra.mxu0 0.0
    %2596 = vmatprep.subr.mxu0 0.0
    %2597 = vmatpush2.msra.mxu0 0.0
    %2598 = vmatprep.subr.mxu0 0.0
    %2599 = vmatpush2.msra.mxu0 0.0
    %2600 = vmatprep.subr.mxu0 0.0
    %2601 = vmatpush2.msra.mxu0 0.0
    %2602 = vmatprep.subr.mxu0 0.0
    %2603 = vmatpush2.msra.mxu0 0.0
    %2604 = vmatprep.subr.mxu0 0.0
    %2605 = vmatpush2.msra.mxu0 0.0
    %2606 = vmatprep.subr.mxu0 0.0
    %2607 = vmatpush2.msra.mxu0 0.0
    %2608 = vmatprep.subr.mxu0 0.0
    %2609 = vmatpush2.msra.mxu0 0.0
    %2610 = vmatprep.subr.mxu0 0.0
    %2611 = vmatpush2.msra.mxu0 0.0
    %2612 = vmatprep.subr.mxu0 0.0
    %2613 = vmatpush2.msra.mxu0 0.0
    %2614 = vmatprep.subr.mxu0 0.0
    %2615 = vmatpush2.msra.mxu0 0.0
    %2616 = vmatprep.subr.mxu0 0.0
    %2617 = vmatpush2.msra.mxu0 0.0
    %2618 = vmatprep.mubr.f32.mxu0 0.0
    %2619 = vmatmul.mubr.f32.gmra.mxu0 %v2552
    %v2620 = vpop.f32.mrf.mxu0
    %v2621 = vadd.f32 %v1683, %v2620
    %v2622 = vpop.f32.mrf.mxu0
    %v2623 = vadd.f32 %v1687, %v2622
    %2624 = vdwg.mxu0
    %v2625 = vadd.f32 %v1652, %v2621
    %v2626 = vsub.f32 0.0, %v2625
    %v2627 = vmul.f32 %v2626, 1.442695
    %v2628 = vpow.pop %v2627
    %v2629 = vadd.f32 %v2628, 1.0
    %v2630 = vrcp.pop %v2629
    %2632 = vrot.lane.b32.xlu0 %v2621, 64
    %v2633 = vpop.permute.xlu0 %2632
    %v2635 = vmul.f32 %v2630, %v2633
    %2637 = vrot.lane.b32.xlu0 %v2635, 64
    %v2638 = vpop.permute.xlu0 %2637
    %v2640 = vadd.f32 %v1652, %v2638
    %v2641 = vtanh.pop %v2640
    %v2642 = vsub.f32 1.0, %v2630
    %2644 = vrot.lane.b32.xlu0 %v2641, 96
    %v2645 = vpop.permute.xlu0 %2644
    %v2647 = vmul.f32 %v2642, %v2645
    %2648 = vrot.lane.b32.xlu0 %v2550, 32
    %v2649 = vpop.permute.xlu0 %2648
    %v2651 = vmul.f32 %v2630, %v2649
    %v2652 = vadd.f32 %v2647, %v2651
    %v2653 = vadd.f32 %v1622, %v2621
    %v2654 = vsub.f32 0.0, %v2653
    %v2655 = vmul.f32 %v2654, 1.442695
    %v2656 = vpow.pop %v2655
    %v2657 = vadd.f32 %v2656, 1.0
    %v2658 = vrcp.pop %v2657
    %v2659 = vadd.f32 %v1624, %v2623
    %v2660 = vsub.f32 0.0, %v2659
    %v2661 = vmul.f32 %v2660, 1.442695
    %v2662 = vpow.pop %v2661
    %v2663 = vadd.f32 %v2662, 1.0
    %v2664 = vrcp.pop %v2663
    %2666 = vrot.lane.b32.xlu0 %v2623, 64
    %v2667 = vpop.permute.xlu0 %2666
    %v2669 = vmul.f32 %v2658, %v2667
    %2671 = vrot.lane.b32.xlu0 %v2669, 64
    %v2672 = vpop.permute.xlu0 %2671
    %v2674 = vadd.f32 %v1624, %v2672
    %v2675 = vtanh.pop %v2674
    %v2676 = vsub.f32 1.0, %v2664
    %2678 = vrot.lane.b32.xlu0 %v2675, 96
    %v2679 = vpop.permute.xlu0 %2678
    %v2681 = vmul.f32 %v2676, %v2679
    %2682 = vrot.lane.b32.xlu0 %v2550, 96
    %v2683 = vpop.permute.xlu0 %2682
    %v2685 = vmul.f32 %v2664, %v2683
    %v2686 = vadd.f32 %v2681, %v2685
    %2688 = vrot.lane.b32.xlu0 %v2652, 96
    %v2689 = vpop.permute.xlu0 %2688
    %2692 = vrot.lane.b32.xlu0 %v2686, 32
    %v2693 = vpop.permute.xlu0 %2692
    %v2695 = vsel %vm466, %v2689, %v2693
    %v2697 = vsel %vm327, %v2695, 0
    %2699 = vmatprep.subr.mxu0 0.0
    %2700 = vmatpush1.msra.mxu0 0.0
    %2701 = vmatprep.subr.mxu0 0.0
    %2702 = vmatpush1.msra.mxu0 0.0
    %2703 = vmatprep.subr.mxu0 0.0
    %2704 = vmatpush1.msra.mxu0 0.0
    %2705 = vmatprep.subr.mxu0 0.0
    %2706 = vmatpush1.msra.mxu0 0.0
    %2707 = vmatprep.subr.mxu0 0.0
    %2708 = vmatpush1.msra.mxu0 0.0
    %2709 = vmatprep.subr.mxu0 0.0
    %2710 = vmatpush1.msra.mxu0 0.0
    %2711 = vmatprep.subr.mxu0 0.0
    %2712 = vmatpush1.msra.mxu0 0.0
    %2713 = vmatprep.subr.mxu0 0.0
    %2714 = vmatpush1.msra.mxu0 0.0
    %2715 = vmatprep.subr.mxu0 %v1677
    %2716 = vmatpush1.msra.mxu0 %v1676
    %2717 = vmatprep.subr.mxu0 %v1675
    %2718 = vmatpush1.msra.mxu0 %v1674
    %2719 = vmatprep.subr.mxu0 %v1673
    %2720 = vmatpush1.msra.mxu0 %v1672
    %2721 = vmatprep.subr.mxu0 %v1671
    %2722 = vmatpush1.msra.mxu0 %v1670
    %2723 = vmatprep.subr.mxu0 %v1669
    %2724 = vmatpush1.msra.mxu0 %v1668
    %2725 = vmatprep.subr.mxu0 %v1667
    %2726 = vmatpush1.msra.mxu0 %v1666
    %2727 = vmatprep.subr.mxu0 %v1665
    %2728 = vmatpush1.msra.mxu0 %v1664
    %2729 = vmatprep.subr.mxu0 %v1663
    %2730 = vmatpush1.msra.mxu0 %v1662
    %2731 = vmatprep.subr.mxu0 0.0
    %2732 = vmatpush2.msra.mxu0 0.0
    %2733 = vmatprep.subr.mxu0 0.0
    %2734 = vmatpush2.msra.mxu0 0.0
    %2735 = vmatprep.subr.mxu0 0.0
    %2736 = vmatpush2.msra.mxu0 0.0
    %2737 = vmatprep.subr.mxu0 0.0
    %2738 = vmatpush2.msra.mxu0 0.0
    %2739 = vmatprep.subr.mxu0 0.0
    %2740 = vmatpush2.msra.mxu0 0.0
    %2741 = vmatprep.subr.mxu0 0.0
    %2742 = vmatpush2.msra.mxu0 0.0
    %2743 = vmatprep.subr.mxu0 0.0
    %2744 = vmatpush2.msra.mxu0 0.0
    %2745 = vmatprep.subr.mxu0 0.0
    %2746 = vmatpush2.msra.mxu0 0.0
    %2747 = vmatprep.subr.mxu0 0.0
    %2748 = vmatpush2.msra.mxu0 0.0
    %2749 = vmatprep.subr.mxu0 0.0
    %2750 = vmatpush2.msra.mxu0 0.0
    %2751 = vmatprep.subr.mxu0 0.0
    %2752 = vmatpush2.msra.mxu0 0.0
    %2753 = vmatprep.subr.mxu0 0.0
    %2754 = vmatpush2.msra.mxu0 0.0
    %2755 = vmatprep.subr.mxu0 0.0
    %2756 = vmatpush2.msra.mxu0 0.0
    %2757 = vmatprep.subr.mxu0 0.0
    %2758 = vmatpush2.msra.mxu0 0.0
    %2759 = vmatprep.subr.mxu0 0.0
    %2760 = vmatpush2.msra.mxu0 0.0
    %2761 = vmatprep.subr.mxu0 0.0
    %2762 = vmatpush2.msra.mxu0 0.0
    %2763 = vmatprep.mubr.f32.mxu0 0.0
    %2764 = vmatmul.mubr.f32.gmra.mxu0 %v2697
    %v2765 = vpop.f32.mrf.mxu0
    %v2766 = vadd.f32 %v1683, %v2765
    %v2767 = vpop.f32.mrf.mxu0
    %v2768 = vadd.f32 %v1687, %v2767
    %2769 = vdwg.mxu0
    %v2770 = vadd.f32 %v1658, %v2766
    %v2771 = vsub.f32 0.0, %v2770
    %v2772 = vmul.f32 %v2771, 1.442695
    %v2773 = vpow.pop %v2772
    %v2774 = vadd.f32 %v2773, 1.0
    %v2775 = vrcp.pop %v2774
    %2777 = vrot.lane.b32.xlu0 %v2766, 64
    %v2778 = vpop.permute.xlu0 %2777
    %v2780 = vmul.f32 %v2775, %v2778
    %2782 = vrot.lane.b32.xlu0 %v2780, 64
    %v2783 = vpop.permute.xlu0 %2782
    %v2785 = vadd.f32 %v1658, %v2783
    %v2786 = vtanh.pop %v2785
    %v2787 = vsub.f32 1.0, %v2775
    %2789 = vrot.lane.b32.xlu0 %v2786, 96
    %v2790 = vpop.permute.xlu0 %2789
    %v2792 = vmul.f32 %v2787, %v2790
    %2793 = vrot.lane.b32.xlu0 %v2695, 32
    %v2794 = vpop.permute.xlu0 %2793
    %v2796 = vmul.f32 %v2775, %v2794
    %v2797 = vadd.f32 %v2792, %v2796
    %v2798 = vadd.f32 %v1616, %v2766
    %v2799 = vsub.f32 0.0, %v2798
    %v2800 = vmul.f32 %v2799, 1.442695
    %v2801 = vpow.pop %v2800
    %v2802 = vadd.f32 %v2801, 1.0
    %v2803 = vrcp.pop %v2802
    %v2804 = vadd.f32 %v1618, %v2768
    %v2805 = vsub.f32 0.0, %v2804
    %v2806 = vmul.f32 %v2805, 1.442695
    %v2807 = vpow.pop %v2806
    %v2808 = vadd.f32 %v2807, 1.0
    %v2809 = vrcp.pop %v2808
    %2811 = vrot.lane.b32.xlu0 %v2768, 64
    %v2812 = vpop.permute.xlu0 %2811
    %v2814 = vmul.f32 %v2803, %v2812
    %2816 = vrot.lane.b32.xlu0 %v2814, 64
    %v2817 = vpop.permute.xlu0 %2816
    %v2819 = vadd.f32 %v1618, %v2817
    %v2820 = vtanh.pop %v2819
    %v2821 = vsub.f32 1.0, %v2809
    %2823 = vrot.lane.b32.xlu0 %v2820, 96
    %v2824 = vpop.permute.xlu0 %2823
    %v2826 = vmul.f32 %v2821, %v2824
    %2827 = vrot.lane.b32.xlu0 %v2695, 96
    %v2828 = vpop.permute.xlu0 %2827
    %v2830 = vmul.f32 %v2809, %v2828
    %v2831 = vadd.f32 %v2826, %v2830
    %2833 = vrot.lane.b32.xlu0 %v2797, 96
    %v2834 = vpop.permute.xlu0 %2833
    %2837 = vrot.lane.b32.xlu0 %v2831, 32
    %v2838 = vpop.permute.xlu0 %2837
    %v2840 = vsel %vm466, %v2834, %v2838
    %v2841 = vadd.f32 %v1488, %v2840
    %2843 = vrot.lane.b32.xlu0 %v2840, 96
    %v2844 = vpop.permute.xlu0 %2843
    %v2846 = vadd.f32 %v2841, %v2844
    %v2847 = vld [vmem:[#allocation8] sm:$0xff]
    %v2848 = vld [vmem:[#allocation8 + $0x8] sm:$0xff]
    %v2849 = vld [vmem:[#allocation8 + $0x10] sm:$0xff]
    %v2850 = vld [vmem:[#allocation8 + $0x18] sm:$0xff]
    %v2851 = vld [vmem:[#allocation10] sm:$0xff]
    %v2852 = vld [vmem:[#allocation10 + $0x8] sm:$0xff]
    %v2853 = vld [vmem:[#allocation10 + $0x10] sm:$0xff]
    %v2854 = vld [vmem:[#allocation10 + $0x18] sm:$0xff]
    %v2856 = vrot.slane %v2846, 2
    %v2857 = vsel %vm466, %v2856, 0
    %2859 = vmatprep.subr.mxu0 0.0
    %2860 = vmatpush1.msra.mxu0 0.0
    %2861 = vmatprep.subr.mxu0 0.0
    %2862 = vmatpush1.msra.mxu0 0.0
    %2863 = vmatprep.subr.mxu0 0.0
    %2864 = vmatpush1.msra.mxu0 0.0
    %2865 = vmatprep.subr.mxu0 0.0
    %2866 = vmatpush1.msra.mxu0 0.0
    %2867 = vmatprep.subr.mxu0 0.0
    %2868 = vmatpush1.msra.mxu0 0.0
    %2869 = vmatprep.subr.mxu0 0.0
    %2870 = vmatpush1.msra.mxu0 0.0
    %2871 = vmatprep.subr.mxu0 0.0
    %2872 = vmatpush1.msra.mxu0 0.0
    %2873 = vmatprep.subr.mxu0 0.0
    %2874 = vmatpush1.msra.mxu0 0.0
    %2875 = vmatprep.subr.mxu0 0.0
    %2876 = vmatpush1.msra.mxu0 0.0
    %2877 = vmatprep.subr.mxu0 0.0
    %2878 = vmatpush1.msra.mxu0 0.0
    %2879 = vmatprep.subr.mxu0 0.0
    %2880 = vmatpush1.msra.mxu0 0.0
    %2881 = vmatprep.subr.mxu0 0.0
    %2882 = vmatpush1.msra.mxu0 0.0
    %2883 = vmatprep.subr.mxu0 0.0
    %2884 = vmatpush1.msra.mxu0 %v2854
    %2885 = vmatprep.subr.mxu0 0.0
    %2886 = vmatpush1.msra.mxu0 %v2853
    %2887 = vmatprep.subr.mxu0 0.0
    %2888 = vmatpush1.msra.mxu0 %v2852
    %2889 = vmatprep.subr.mxu0 0.0
    %2890 = vmatpush1.msra.mxu0 %v2851
    %2891 = vmatprep.subr.mxu0 0.0
    %2892 = vmatpush2.msra.mxu0 0.0
    %2893 = vmatprep.subr.mxu0 0.0
    %2894 = vmatpush2.msra.mxu0 0.0
    %2895 = vmatprep.subr.mxu0 0.0
    %2896 = vmatpush2.msra.mxu0 0.0
    %2897 = vmatprep.subr.mxu0 0.0
    %2898 = vmatpush2.msra.mxu0 0.0
    %2899 = vmatprep.subr.mxu0 0.0
    %2900 = vmatpush2.msra.mxu0 0.0
    %2901 = vmatprep.subr.mxu0 0.0
    %2902 = vmatpush2.msra.mxu0 0.0
    %2903 = vmatprep.subr.mxu0 0.0
    %2904 = vmatpush2.msra.mxu0 0.0
    %2905 = vmatprep.subr.mxu0 0.0
    %2906 = vmatpush2.msra.mxu0 0.0
    %2907 = vmatprep.subr.mxu0 0.0
    %2908 = vmatpush2.msra.mxu0 0.0
    %2909 = vmatprep.subr.mxu0 0.0
    %2910 = vmatpush2.msra.mxu0 0.0
    %2911 = vmatprep.subr.mxu0 0.0
    %2912 = vmatpush2.msra.mxu0 0.0
    %2913 = vmatprep.subr.mxu0 0.0
    %2914 = vmatpush2.msra.mxu0 0.0
    %2915 = vmatprep.subr.mxu0 0.0
    %2916 = vmatpush2.msra.mxu0 0.0
    %2917 = vmatprep.subr.mxu0 0.0
    %2918 = vmatpush2.msra.mxu0 0.0
    %2919 = vmatprep.subr.mxu0 0.0
    %2920 = vmatpush2.msra.mxu0 0.0
    %2921 = vmatprep.subr.mxu0 0.0
    %2922 = vmatpush2.msra.mxu0 0.0
    %2923 = vmatprep.mubr.f32.mxu0 0.0
    %2924 = vmatmul.mubr.f32.gmra.mxu0 %v2857
    %v2925 = vpop.f32.mrf.mxu0
    %v2926 = vadd.f32 0.0, %v2925
    %v2927 = vpop.f32.mrf.mxu0
    %2928 = vdwg.mxu0
    %v2929 = vsel %vm466, %v2846, 0
    %2931 = vmatprep.subr.mxu0 0.0
    %2932 = vmatpush1.msra.mxu0 0.0
    %2933 = vmatprep.subr.mxu0 0.0
    %2934 = vmatpush1.msra.mxu0 0.0
    %2935 = vmatprep.subr.mxu0 0.0
    %2936 = vmatpush1.msra.mxu0 0.0
    %2937 = vmatprep.subr.mxu0 0.0
    %2938 = vmatpush1.msra.mxu0 0.0
    %2939 = vmatprep.subr.mxu0 0.0
    %2940 = vmatpush1.msra.mxu0 0.0
    %2941 = vmatprep.subr.mxu0 0.0
    %2942 = vmatpush1.msra.mxu0 0.0
    %2943 = vmatprep.subr.mxu0 0.0
    %2944 = vmatpush1.msra.mxu0 0.0
    %2945 = vmatprep.subr.mxu0 0.0
    %2946 = vmatpush1.msra.mxu0 0.0
    %2947 = vmatprep.subr.mxu0 0.0
    %2948 = vmatpush1.msra.mxu0 0.0
    %2949 = vmatprep.subr.mxu0 0.0
    %2950 = vmatpush1.msra.mxu0 0.0
    %2951 = vmatprep.subr.mxu0 0.0
    %2952 = vmatpush1.msra.mxu0 0.0
    %2953 = vmatprep.subr.mxu0 0.0
    %2954 = vmatpush1.msra.mxu0 0.0
    %2955 = vmatprep.subr.mxu0 0.0
    %2956 = vmatpush1.msra.mxu0 %v2850
    %2957 = vmatprep.subr.mxu0 0.0
    %2958 = vmatpush1.msra.mxu0 %v2849
    %2959 = vmatprep.subr.mxu0 0.0
    %2960 = vmatpush1.msra.mxu0 %v2848
    %2961 = vmatprep.subr.mxu0 0.0
    %2962 = vmatpush1.msra.mxu0 %v2847
    %2963 = vmatprep.subr.mxu0 0.0
    %2964 = vmatpush2.msra.mxu0 0.0
    %2965 = vmatprep.subr.mxu0 0.0
    %2966 = vmatpush2.msra.mxu0 0.0
    %2967 = vmatprep.subr.mxu0 0.0
    %2968 = vmatpush2.msra.mxu0 0.0
    %2969 = vmatprep.subr.mxu0 0.0
    %2970 = vmatpush2.msra.mxu0 0.0
    %2971 = vmatprep.subr.mxu0 0.0
    %2972 = vmatpush2.msra.mxu0 0.0
    %2973 = vmatprep.subr.mxu0 0.0
    %2974 = vmatpush2.msra.mxu0 0.0
    %2975 = vmatprep.subr.mxu0 0.0
    %2976 = vmatpush2.msra.mxu0 0.0
    %2977 = vmatprep.subr.mxu0 0.0
    %2978 = vmatpush2.msra.mxu0 0.0
    %2979 = vmatprep.subr.mxu0 0.0
    %2980 = vmatpush2.msra.mxu0 0.0
    %2981 = vmatprep.subr.mxu0 0.0
    %2982 = vmatpush2.msra.mxu0 0.0
    %2983 = vmatprep.subr.mxu0 0.0
    %2984 = vmatpush2.msra.mxu0 0.0
    %2985 = vmatprep.subr.mxu0 0.0
    %2986 = vmatpush2.msra.mxu0 0.0
    %2987 = vmatprep.subr.mxu0 0.0
    %2988 = vmatpush2.msra.mxu0 0.0
    %2989 = vmatprep.subr.mxu0 0.0
    %2990 = vmatpush2.msra.mxu0 0.0
    %2991 = vmatprep.subr.mxu0 0.0
    %2992 = vmatpush2.msra.mxu0 0.0
    %2993 = vmatprep.subr.mxu0 0.0
    %2994 = vmatpush2.msra.mxu0 0.0
    %2995 = vmatprep.mubr.f32.mxu0 0.0
    %2996 = vmatmul.mubr.f32.gmra.mxu0 %v2929
    %v2997 = vpop.f32.mrf.mxu0
    %v2998 = vadd.f32 %v2926, %v2997
    %v2999 = vpop.f32.mrf.mxu0
    %3000 = vdwg.mxu0
    %v3001 = vld [vmem:[%s11] sm:$0x1]
    %v3003 = vlaneseq
    %v3004 = vshrl.u32 %v3003, 7
    %v3005 = vsub.s32 0, %v3004
    %v3006 = vrot.slane %v3001, %v3005
    %v3008 = vadd.f32 %v2998, %v3006
    %v3009 = vld [vmem:[%s12] sm:$0xff]
    %v3010 = vld [vmem:[%s12 + $0x8] sm:$0xff]
    %v3011 = vld [vmem:[%s12 + $0x10] sm:$0xff]
    %v3012 = vld [vmem:[%s12 + $0x18] sm:$0xff]
    %v3013 = vld [vmem:[%s12 + $0x20] sm:$0xff]
    %v3014 = vld [vmem:[%s12 + $0x28] sm:$0xff]
    %v3015 = vld [vmem:[%s12 + $0x30] sm:$0xff]
    %v3016 = vld [vmem:[%s12 + $0x38] sm:$0xff]
    %v3017 = vld [vmem:[%s12 + $0x40] sm:$0xff]
    %v3018 = vld [vmem:[%s12 + $0x48] sm:$0xff]
    %v3019 = vld [vmem:[%s12 + $0x50] sm:$0xff]
    %v3020 = vld [vmem:[%s12 + $0x58] sm:$0xff]
    %v3021 = vld [vmem:[%s13] sm:$0x1]
    %v3023 = vlaneseq
    %v3024 = vshrl.u32 %v3023, 7
    %v3025 = vsub.s32 0, %v3024
    %v3026 = vrot.slane %v3021, %v3025
    %vm3028 = vcmask 785408
    %v3030 = vsel %vm3028, %v3008, 0
    %3032 = vmatprep.subr.mxu0 0.0
    %3033 = vmatpush1.msra.mxu0 0.0
    %3034 = vmatprep.subr.mxu0 0.0
    %3035 = vmatpush1.msra.mxu0 0.0
    %3036 = vmatprep.subr.mxu0 0.0
    %3037 = vmatpush1.msra.mxu0 0.0
    %3038 = vmatprep.subr.mxu0 0.0
    %3039 = vmatpush1.msra.mxu0 0.0
    %3040 = vmatprep.subr.mxu0 0.0
    %3041 = vmatpush1.msra.mxu0 %v3020
    %3042 = vmatprep.subr.mxu0 0.0
    %3043 = vmatpush1.msra.mxu0 %v3019
    %3044 = vmatprep.subr.mxu0 0.0
    %3045 = vmatpush1.msra.mxu0 %v3018
    %3046 = vmatprep.subr.mxu0 0.0
    %3047 = vmatpush1.msra.mxu0 %v3017
    %3048 = vmatprep.subr.mxu0 0.0
    %3049 = vmatpush1.msra.mxu0 %v3016
    %3050 = vmatprep.subr.mxu0 0.0
    %3051 = vmatpush1.msra.mxu0 %v3015
    %3052 = vmatprep.subr.mxu0 0.0
    %3053 = vmatpush1.msra.mxu0 %v3014
    %3054 = vmatprep.subr.mxu0 0.0
    %3055 = vmatpush1.msra.mxu0 %v3013
    %3056 = vmatprep.subr.mxu0 0.0
    %3057 = vmatpush1.msra.mxu0 %v3012
    %3058 = vmatprep.subr.mxu0 0.0
    %3059 = vmatpush1.msra.mxu0 %v3011
    %3060 = vmatprep.subr.mxu0 0.0
    %3061 = vmatpush1.msra.mxu0 %v3010
    %3062 = vmatprep.subr.mxu0 0.0
    %3063 = vmatpush1.msra.mxu0 %v3009
    %3064 = vmatprep.subr.mxu0 0.0
    %3065 = vmatpush2.msra.mxu0 0.0
    %3066 = vmatprep.subr.mxu0 0.0
    %3067 = vmatpush2.msra.mxu0 0.0
    %3068 = vmatprep.subr.mxu0 0.0
    %3069 = vmatpush2.msra.mxu0 0.0
    %3070 = vmatprep.subr.mxu0 0.0
    %3071 = vmatpush2.msra.mxu0 0.0
    %3072 = vmatprep.subr.mxu0 0.0
    %3073 = vmatpush2.msra.mxu0 0.0
    %3074 = vmatprep.subr.mxu0 0.0
    %3075 = vmatpush2.msra.mxu0 0.0
    %3076 = vmatprep.subr.mxu0 0.0
    %3077 = vmatpush2.msra.mxu0 0.0
    %3078 = vmatprep.subr.mxu0 0.0
    %3079 = vmatpush2.msra.mxu0 0.0
    %3080 = vmatprep.subr.mxu0 0.0
    %3081 = vmatpush2.msra.mxu0 0.0
    %3082 = vmatprep.subr.mxu0 0.0
    %3083 = vmatpush2.msra.mxu0 0.0
    %3084 = vmatprep.subr.mxu0 0.0
    %3085 = vmatpush2.msra.mxu0 0.0
    %3086 = vmatprep.subr.mxu0 0.0
    %3087 = vmatpush2.msra.mxu0 0.0
    %3088 = vmatprep.subr.mxu0 0.0
    %3089 = vmatpush2.msra.mxu0 0.0
    %3090 = vmatprep.subr.mxu0 0.0
    %3091 = vmatpush2.msra.mxu0 0.0
    %3092 = vmatprep.subr.mxu0 0.0
    %3093 = vmatpush2.msra.mxu0 0.0
    %3094 = vmatprep.subr.mxu0 0.0
    %3095 = vmatpush2.msra.mxu0 0.0
    %3096 = vmatprep.mubr.f32.mxu0 0.0
    %3097 = vmatmul.mubr.f32.gmra.mxu0 %v3030
    %v3098 = vpop.f32.mrf.mxu0
    %v3099 = vadd.f32 %v3026, %v3098
    %v3100 = vpop.f32.mrf.mxu0
    %3101 = vdwg.mxu0
    %v3102 = vtanh.pop %v3099
    %v3103 = vld [vmem:[#allocation11] sm:$0xff]
    %v3104 = vld [vmem:[#allocation11 + $0x8] sm:$0xff]
    %v3105 = vld [vmem:[#allocation11 + $0x10] sm:$0xff]
    %v3106 = vld [vmem:[#allocation11 + $0x18] sm:$0xf]
    %v3107 = vld [vmem:[#allocation2] sm:$0x1]
    %v3109 = vlaneseq
    %v3110 = vshrl.u32 %v3109, 7
    %v3111 = vsub.s32 0, %v3110
    %v3112 = vrot.slane %v3107, %v3111
    %vm3114 = vcmask 228352
    %v3116 = vsel %vm3114, %v3102, 0
    %vm3118 = vcmask 1043456
    %v3120 = vsel %vm3118, %v3106, 0
    %3122 = vmatprep.subr.mxu0 0.0
    %3123 = vmatpush1.msra.mxu0 0.0
    %3124 = vmatprep.subr.mxu0 0.0
    %3125 = vmatpush1.msra.mxu0 0.0
    %3126 = vmatprep.subr.mxu0 0.0
    %3127 = vmatpush1.msra.mxu0 0.0
    %3128 = vmatprep.subr.mxu0 0.0
    %3129 = vmatpush1.msra.mxu0 0.0
    %3130 = vmatprep.subr.mxu0 0.0
    %3131 = vmatpush1.msra.mxu0 0.0
    %3132 = vmatprep.subr.mxu0 0.0
    %3133 = vmatpush1.msra.mxu0 0.0
    %3134 = vmatprep.subr.mxu0 0.0
    %3135 = vmatpush1.msra.mxu0 0.0
    %3136 = vmatprep.subr.mxu0 0.0
    %3137 = vmatpush1.msra.mxu0 0.0
    %3138 = vmatprep.subr.mxu0 0.0
    %3139 = vmatpush1.msra.mxu0 0.0
    %3140 = vmatprep.subr.mxu0 0.0
    %3141 = vmatpush1.msra.mxu0 0.0
    %3142 = vmatprep.subr.mxu0 0.0
    %3143 = vmatpush1.msra.mxu0 0.0
    %3144 = vmatprep.subr.mxu0 0.0
    %3145 = vmatpush1.msra.mxu0 0.0
    %3146 = vmatprep.subr.mxu0 0.0
    %3147 = vmatpush1.msra.mxu0 %v3120
    %3148 = vmatprep.subr.mxu0 0.0
    %3149 = vmatpush1.msra.mxu0 %v3105
    %3150 = vmatprep.subr.mxu0 0.0
    %3151 = vmatpush1.msra.mxu0 %v3104
    %3152 = vmatprep.subr.mxu0 0.0
    %3153 = vmatpush1.msra.mxu0 %v3103
    %3154 = vmatprep.subr.mxu0 0.0
    %3155 = vmatpush2.msra.mxu0 0.0
    %3156 = vmatprep.subr.mxu0 0.0
    %3157 = vmatpush2.msra.mxu0 0.0
    %3158 = vmatprep.subr.mxu0 0.0
    %3159 = vmatpush2.msra.mxu0 0.0
    %3160 = vmatprep.subr.mxu0 0.0
    %3161 = vmatpush2.msra.mxu0 0.0
    %3162 = vmatprep.subr.mxu0 0.0
    %3163 = vmatpush2.msra.mxu0 0.0
    %3164 = vmatprep.subr.mxu0 0.0
    %3165 = vmatpush2.msra.mxu0 0.0
    %3166 = vmatprep.subr.mxu0 0.0
    %3167 = vmatpush2.msra.mxu0 0.0
    %3168 = vmatprep.subr.mxu0 0.0
    %3169 = vmatpush2.msra.mxu0 0.0
    %3170 = vmatprep.subr.mxu0 0.0
    %3171 = vmatpush2.msra.mxu0 0.0
    %3172 = vmatprep.subr.mxu0 0.0
    %3173 = vmatpush2.msra.mxu0 0.0
    %3174 = vmatprep.subr.mxu0 0.0
    %3175 = vmatpush2.msra.mxu0 0.0
    %3176 = vmatprep.subr.mxu0 0.0
    %3177 = vmatpush2.msra.mxu0 0.0
    %3178 = vmatprep.subr.mxu0 0.0
    %3179 = vmatpush2.msra.mxu0 0.0
    %3180 = vmatprep.subr.mxu0 0.0
    %3181 = vmatpush2.msra.mxu0 0.0
    %3182 = vmatprep.subr.mxu0 0.0
    %3183 = vmatpush2.msra.mxu0 0.0
    %3184 = vmatprep.subr.mxu0 0.0
    %3185 = vmatpush2.msra.mxu0 0.0
    %3186 = vmatprep.mubr.f32.mxu0 0.0
    %3187 = vmatmul.mubr.f32.gmra.mxu0 %v3116
    %v3188 = vpop.f32.mrf.mxu0
    %v3189 = vadd.f32 %v3112, %v3188
    %v3190 = vpop.f32.mrf.mxu0
    %3191 = vdwg.mxu0
    %v3192 = vsub.f32 0.0, %v3189
    %v3193 = vmul.f32 %v3192, 1.442695
    %v3194 = vpow.pop %v3193
    %v3195 = vadd.f32 %v3194, 1.0
    %v3196 = vrcp.pop %v3195
    %vm3197 = vcmask 1024
    %3198 = vst.msk [vmem:[%s16] sm:$0x3] %vm3197, %v3196
    // Predicated region
    $region90: #{forward.1} parent=1 // pred_check
      _
    $region91: #{forward.1} parent=1 // pred_check_branch
      %3200 = sbr.rel (0) target = $region93
    $region92: #{forward.1} parent=1 // pred_region
      _
    $region93: #{forward.1} parent=1 // pred_fallthru
      _
    // Predicated region
    $region94: #{forward.1} parent=1 // pred_check
      _
    $region95: #{forward.1} parent=1 // pred_check_branch
      %3202 = sbr.rel (0) target = $region97
    $region96: #{forward.1} parent=1 // pred_region
      _
    $region97: #{forward.1} parent=1 // pred_fallthru
      _
    %3203 = vsyncpa [#allocation4], 1
    %3204 = vsyncpa [#allocation6], 1
    %3205 = vsyncpa [#allocation9], 1
    %3206 = vsyncpa [#allocation12], 1

</llo_original>
